<compile_context>
chip_gen: v7x
topology: tpu7x:2x2x1
jax: 0.10.0
libtpu: 0.0.40
codegen_flags: <defaults>
</compile_context>

<pallas_src>
import functools

import jax
import jax.numpy as jnp
from jax import lax
from jax.experimental import pallas as pl
from jax.experimental.pallas import tpu as pltpu

# Make the pure-JAX reference use full f32 matmul/conv precision so it is
# numerically comparable with the f32 Pallas kernels.
jax.config.update("jax_default_matmul_precision", "highest")

VMEM_LIMIT_BYTES = 48 * 1024 * 1024  # safe on v5e/v6e (128 MiB) and v7x (64 MiB)

# VGG config 'D0' from the original module (kl_mult values don't affect forward).
CFG_D0 = [(64, 1), (64, 1), 'M', (128, 1), (128, 1), 'M',
          (256, 1), (256, 1), (256, 1), 'M',
          (512, 1), (512, 1), (512, 1), 'M',
          (512, 1), (512, 1), (512, 1), 'M']


# ----------------------------------------------------------------------------
# Fused GEMM + bias (+ReLU) (+per-output IB scale)  -- used for conv (im2col)
# and for the FC head.
# ----------------------------------------------------------------------------
def _gemm_bias_act_scale_kernel(x_ref, w_ref, b_ref, z_ref, o_ref, *, apply_relu):
    # x_ref: (TM, K)   w_ref: (K, N)   b_ref/z_ref: (1, N)   o_ref: (TM, N)
    acc = jnp.dot(x_ref[...], w_ref[...], preferred_element_type=jnp.float32)
    acc = acc + b_ref[0, :]
    if apply_relu:
        acc = jnp.maximum(acc, 0.0)
    acc = acc * z_ref[0, :]
    o_ref[...] = acc.astype(o_ref.dtype)


def fused_matmul(x, w, b, z=None, apply_relu=False, block_m=512):
    """x: (M, K), w: (K, N), b: (N,), z: (N,) or None -> (M, N)."""
    m, k = x.shape
    n = w.shape[1]
    if z is None:
        z = jnp.ones((n,), x.dtype)

    tm = m if m <= block_m else block_m
    m_pad = pl.cdiv(m, tm) * tm
    xp = x if m_pad == m else jnp.pad(x, ((0, m_pad - m), (0, 0)))

    kernel = functools.partial(_gemm_bias_act_scale_kernel, apply_relu=apply_relu)
    out = pl.pallas_call(
        kernel,
        out_shape=jax.ShapeDtypeStruct((m_pad, n), x.dtype),
        grid_spec=pl.GridSpec(
            grid=(m_pad // tm,),
            in_specs=[
                pl.BlockSpec((tm, k), lambda i: (i, 0)),
                pl.BlockSpec((k, n), lambda i: (0, 0)),   # resident across M blocks
                pl.BlockSpec((1, n), lambda i: (0, 0)),
                pl.BlockSpec((1, n), lambda i: (0, 0)),
            ],
            out_specs=pl.BlockSpec((tm, n), lambda i: (i, 0)),
        ),
        compiler_params=pltpu.CompilerParams(
            dimension_semantics=("parallel",),
            vmem_limit_bytes=VMEM_LIMIT_BYTES,
        ),
    )(xp, w.astype(x.dtype), b.reshape(1, n).astype(x.dtype),
      z.reshape(1, n).astype(x.dtype))
    return out if m_pad == m else out[:m]


# ----------------------------------------------------------------------------
# Conv3x3 (padding=1) + bias + ReLU + per-channel IB scale  (im2col + GEMM)
# ----------------------------------------------------------------------------
def conv3x3_relu_scale(x, w, b, z, apply_relu=True):
    """x: (N,H,W,Cin) f32, w: (3,3,Cin,Cout) HWIO, b/z: (Cout,)."""
    n, h, wdim, cin = x.shape
    cout = w.shape[3]
    xp = jnp.pad(x, ((0, 0), (1, 1), (1, 1), (0, 0)))
    # im2col: taps ordered (dy, dx, cin) to match w.reshape(9*Cin, Cout).
    # Pure layout glue (slices + lane concat); all FLOPs happen in the kernel.
    patches = jnp.concatenate(
        [xp[:, dy:dy + h, dx:dx + wdim, :] for dy in range(3) for dx in range(3)],
        axis=-1)                                     # (N, H, W, 9*Cin)
    xm = patches.reshape(n * h * wdim, 9 * cin)      # lane-dense GEMM lhs
    wm = w.reshape(9 * cin, cout).astype(jnp.float32)
    y = fused_matmul(xm, wm, b, z=z, apply_relu=apply_relu)
    return y.reshape(n, h, wdim, cout)


# ----------------------------------------------------------------------------
# MaxPool 2x2 stride 2
# ----------------------------------------------------------------------------
def _max4_kernel(a_ref, b_ref, c_ref, d_ref, o_ref):
    o_ref[...] = jnp.maximum(jnp.maximum(a_ref[...], b_ref[...]),
                             jnp.maximum(c_ref[...], d_ref[...]))


def maxpool2x2(x):
    """x: (N,H,W,C) -> (N,H//2,W//2,C)."""
    n, h, w, c = x.shape
    ho, wo = h // 2, w // 2
    m = n * ho * wo
    # Four strided phases flattened to lane-dense (M, C) slabs (layout glue);
    # the max reduction runs in Pallas.
    phases = [x[:, i::2, j::2, :].reshape(m, c) for i in range(2) for j in range(2)]
    spec = pl.BlockSpec((m, c), lambda i: (0, 0))
    out = pl.pallas_call(
        _max4_kernel,
        out_shape=jax.ShapeDtypeStruct((m, c), x.dtype),
        grid_spec=pl.GridSpec(grid=(1,), in_specs=[spec] * 4, out_specs=spec),
        compiler_params=pltpu.CompilerParams(
            dimension_semantics=("arbitrary",),
            vmem_limit_bytes=VMEM_LIMIT_BYTES,
        ),
    )(*phases)
    return out.reshape(n, ho, wo, c)


# ----------------------------------------------------------------------------
# InformationBottleneck eval-mode scale: get_mask_weighted(threshold)
# ----------------------------------------------------------------------------
def ib_scale_eval(post_z_mu, post_z_logD, threshold=0.0, eps=1e-8):
    logalpha = post_z_logD - jnp.log(post_z_mu * post_z_mu + eps)
    mask = (logalpha < threshold).astype(post_z_mu.dtype)
    return mask * post_z_mu


# ----------------------------------------------------------------------------
# VGG_IB forward (eval mode, no_ib=False, batch_norm=False)
# ----------------------------------------------------------------------------
def vgg_ib_forward(params, x_nchw, config=CFG_D0, threshold=0.0):
    # NCHW (PyTorch) -> NHWC (lane-dense channels) for the TPU kernels.
    x = jnp.transpose(x_nchw, (0, 2, 3, 1)).astype(jnp.float32)
    ci = 0
    for v in config:
        if v == 'M':
            x = maxpool2x2(x)
        else:
            p = params['conv'][ci]
            ci += 1
            z = ib_scale_eval(p['mu'], p['logD'], threshold)
            x = conv3x3_relu_scale(x, p['w'], p['b'], z, apply_relu=True)
    n = x.shape[0]
    # Back to NCHW flatten order to mirror torch's .view(batch, -1)
    # (spatial is 1x1 here, so this is just (B, 512)).
    x = jnp.transpose(x, (0, 3, 1, 2)).reshape(n, -1)

    p = params['fc'][0]
    z = ib_scale_eval(p['mu'], p['logD'], threshold)
    x = fused_matmul(x, p['w'], p['b'], z=z, apply_relu=True)
    p = params['fc'][1]
    z = ib_scale_eval(p['mu'], p['logD'], threshold)
    x = fused_matmul(x, p['w'], p['b'], z=z, apply_relu=True)
    p = params['fc'][2]
    x = fused_matmul(x, p['w'], p['b'], apply_relu=False)
    return x


# ----------------------------------------------------------------------------
# Pure-JAX reference (for the correctness check)
# ----------------------------------------------------------------------------
def vgg_ib_reference(params, x_nchw, config=CFG_D0, threshold=0.0):
    x = jnp.transpose(x_nchw, (0, 2, 3, 1)).astype(jnp.float32)
    ci = 0
    for v in config:
        if v == 'M':
            x = lax.reduce_window(x, -jnp.inf, lax.max,
                                  (1, 2, 2, 1), (1, 2, 2, 1), 'VALID')
        else:
            p = params['conv'][ci]
            ci += 1
            z = ib_scale_eval(p['mu'], p['logD'], threshold)
            y = lax.conv_general_dilated(
                x, p['w'], window_strides=(1, 1), padding='SAME',
                dimension_numbers=('NHWC', 'HWIO', 'NHWC'))
            x = jnp.maximum(y + p['b'], 0.0) * z
    n = x.shape[0]
    x = jnp.transpose(x, (0, 3, 1, 2)).reshape(n, -1)
    for i in range(2):
        p = params['fc'][i]
        z = ib_scale_eval(p['mu'], p['logD'], threshold)
        x = jnp.maximum(x @ p['w'] + p['b'], 0.0) * z
    p = params['fc'][2]
    return x @ p['w'] + p['b']


# ----------------------------------------------------------------------------
# Parameter initialization (mirrors the PyTorch module's shapes / IB init)
# ----------------------------------------------------------------------------
def init_params(key, config=CFG_D0, n_cls=10, init_mag=9.0, init_var=0.01):
    params = {'conv': [], 'fc': []}
    in_c = 3
    for v in config:
        if v == 'M':
            continue
        c_out = v[0]
        key, k1, k2, k3 = jax.random.split(key, 4)
        fan_in = in_c * 9
        w = jax.random.normal(k1, (3, 3, in_c, c_out), jnp.float32) * jnp.sqrt(2.0 / fan_in)
        params['conv'].append({
            'w': w,
            'b': jnp.zeros((c_out,), jnp.float32),
            'mu': 1.0 + init_var * jax.random.normal(k2, (c_out,), jnp.float32),
            'logD': -init_mag + init_var * jax.random.normal(k3, (c_out,), jnp.float32),
        })
        in_c = c_out
    for i, (din, dout) in enumerate([(512, 512), (512, 512), (512, n_cls)]):
        key, k1, k2, k3 = jax.random.split(key, 4)
        entry = {
            'w': jax.random.normal(k1, (din, dout), jnp.float32) * jnp.sqrt(2.0 / din),
            'b': jnp.zeros((dout,), jnp.float32),
        }
        if i < 2:  # fc_ib1 / fc_ib2
            entry['mu'] = 1.0 + init_var * jax.random.normal(k2, (dout,), jnp.float32)
            entry['logD'] = -init_mag + init_var * jax.random.normal(k3, (dout,), jnp.float32)
        params['fc'].append(entry)
    return params


if __name__ == "__main__":
    key = jax.random.PRNGKey(0)
    kp, kx = jax.random.split(key)

    params = init_params(kp, CFG_D0, n_cls=10)
    # Small CIFAR-like input: 5 maxpools of 32x32 -> 1x1, so the conv trunk
    # flattens to exactly 512 features as the FC head expects.
    x = jax.random.normal(kx, (2, 3, 32, 32), jnp.float32)

    out = vgg_ib_forward(params, x, CFG_D0)
    out = jax.block_until_ready(out)

    ref = vgg_ib_reference(params, x, CFG_D0)
    ref = jax.block_until_ready(ref)

    assert out.shape == (2, 10), out.shape
    assert out.dtype == jnp.float32
    scale = float(jnp.max(jnp.abs(ref)))
    err = float(jnp.max(jnp.abs(out - ref)))
    assert err <= 2e-2 * max(1.0, scale), f"mismatch: max_err={err}, ref_scale={scale}"

    print("KERNEL_OK")
</pallas_src>

<mosaic_0001>
module attributes {stable_mosaic.version = 11 : i64} {
  func.func @_gemm_bias_act_scale_kernel(%arg0: i32, %arg1: memref<512x27xf32, #tpu.memory_space<vmem>>, %arg2: memref<27x64xf32, #tpu.memory_space<vmem>>, %arg3: memref<1x64xf32, #tpu.memory_space<vmem>>, %arg4: memref<1x64xf32, #tpu.memory_space<vmem>>, %arg5: memref<512x64xf32, #tpu.memory_space<vmem>>) attributes {dimension_semantics = [#tpu.dimension_semantics<parallel>], iteration_bounds = array<i64: 4>, scalar_prefetch = 0 : i64, scratch_operands = 0 : i64, tpu.core_type = #tpu.core_type<tc>, window_params = [{transform_indices = @transform_0, window_bounds = array<i64: 512, 27>}, {pipeline_mode = #tpu.pipeline_mode<synchronous>, transform_indices = @transform_1, window_bounds = array<i64: 27, 64>}, {pipeline_mode = #tpu.pipeline_mode<synchronous>, transform_indices = @transform_2, window_bounds = array<i64: 1, 64>}, {pipeline_mode = #tpu.pipeline_mode<synchronous>, transform_indices = @transform_3, window_bounds = array<i64: 1, 64>}, {transform_indices = @transform_4, window_bounds = array<i64: 512, 64>}]} {
    %c0 = arith.constant 0 : index
    %c0_0 = arith.constant 0 : index
    %0 = vector.load %arg1[%c0, %c0_0] : memref<512x27xf32, #tpu.memory_space<vmem>>, vector<512x27xf32>
    %c0_1 = arith.constant 0 : index
    %c0_2 = arith.constant 0 : index
    %1 = vector.load %arg2[%c0_1, %c0_2] : memref<27x64xf32, #tpu.memory_space<vmem>>, vector<27x64xf32>
    %cst = arith.constant dense<0.000000e+00> : vector<512x64xf32>
    %2 = tpu.matmul %0, %1, %cst {dimension_numbers = #tpu.dot_dimension_numbers<[1], [0], [0], [1], [0, 0, 1, 1], [], []>, precision = #tpu.contract_precision<fp32>} : vector<512x27xf32>, vector<27x64xf32>, vector<512x64xf32> -> vector<512x64xf32>
    %c0_3 = arith.constant 0 : index
    %c0_4 = arith.constant 0 : index
    %3 = vector.load %arg3[%c0_3, %c0_4] : memref<1x64xf32, #tpu.memory_space<vmem>>, vector<1x64xf32>
    %4 = vector.shape_cast %3 : vector<1x64xf32> to vector<64xf32>
    %5 = vector.shape_cast %4 : vector<64xf32> to vector<1x64xf32>
    %6 = vector.broadcast %5 : vector<1x64xf32> to vector<512x64xf32>
    %7 = arith.addf %2, %6 : vector<512x64xf32>
    %cst_5 = arith.constant 0.000000e+00 : f32
    %8 = vector.broadcast %cst_5 : f32 to vector<512x64xf32>
    %9 = arith.maximumf %7, %8 : vector<512x64xf32>
    %c0_6 = arith.constant 0 : index
    %c0_7 = arith.constant 0 : index
    %10 = vector.load %arg4[%c0_6, %c0_7] : memref<1x64xf32, #tpu.memory_space<vmem>>, vector<1x64xf32>
    %11 = vector.shape_cast %10 : vector<1x64xf32> to vector<64xf32>
    %12 = vector.shape_cast %11 : vector<64xf32> to vector<1x64xf32>
    %13 = vector.broadcast %12 : vector<1x64xf32> to vector<512x64xf32>
    %14 = arith.mulf %9, %13 : vector<512x64xf32>
    %c0_8 = arith.constant 0 : index
    %c0_9 = arith.constant 0 : index
    %15 = vector.load %arg5[%c0_8, %c0_9] : memref<512x64xf32, #tpu.memory_space<vmem>>, vector<512x64xf32>
    tpu.vector_store %arg5[%c0_8, %c0_9], %14 {strides = array<i32>} : memref<512x64xf32, #tpu.memory_space<vmem>>, vector<512x64xf32>,
    return
  }
  func.func @transform_0(%arg0: i32) -> (i32, i32) {
    %c0_i32 = arith.constant 0 : i32
    %c0_i32_0 = arith.constant 0 : i32
    return %arg0, %c0_i32 : i32, i32
  }
  func.func @transform_1(%arg0: i32) -> (i32, i32) {
    %c0_i32 = arith.constant 0 : i32
    %c0_i32_0 = arith.constant 0 : i32
    %c0_i32_1 = arith.constant 0 : i32
    return %c0_i32, %c0_i32_0 : i32, i32
  }
  func.func @transform_2(%arg0: i32) -> (i32, i32) {
    %c0_i32 = arith.constant 0 : i32
    %c0_i32_0 = arith.constant 0 : i32
    %c0_i32_1 = arith.constant 0 : i32
    return %c0_i32, %c0_i32_0 : i32, i32
  }
  func.func @transform_3(%arg0: i32) -> (i32, i32) {
    %c0_i32 = arith.constant 0 : i32
    %c0_i32_0 = arith.constant 0 : i32
    %c0_i32_1 = arith.constant 0 : i32
    return %c0_i32, %c0_i32_0 : i32, i32
  }
  func.func @transform_4(%arg0: i32) -> (i32, i32) {
    %c0_i32 = arith.constant 0 : i32
    %c0_i32_0 = arith.constant 0 : i32
    return %arg0, %c0_i32 : i32, i32
  }
}

</mosaic_0001>

<llo_original>
// kernel: tpu_custom_call.1
$region0: #{tpu_custom_call.1}
  #allocation0 [shape = 'u32[]', space=smem, size = 0x4, offset = 0x4, fixed_abs, tag = 'smem constant byte address 0x4 - core index']
  #allocation1 [shape = 'u32[144,128]{1,0:T(1,128)}', space=vmem, size = 0x12000, scoped, tag = 'internal scratch']
  %s0 = inlined_call_operand.vmem [shape: f32[2048,27], index: 0, kind: input, shape index: {}]
  %s1 = inlined_call_operand.vmem [shape: f32[27,64], index: 1, kind: input, shape index: {}]
  %s2 = inlined_call_operand.vmem [shape: f32[1,64], index: 2, kind: input, shape index: {}]
  %s3 = inlined_call_operand.vmem [shape: f32[1,64], index: 3, kind: input, shape index: {}]
  %s4 = inlined_call_operand.vmem [shape: f32[2048,64], index: 4, kind: output, shape index: {}]
  %s5 = sld [smem:[#allocation0]]
  $region49: #{tpu_custom_call.1} parent=0
    _
  %s7 = ssub.s32 1, %s5
  %s8 = scalar_select 0, %s7, %s5
  loop: start=0, step=1, limit=6
  $region2: #{tpu_custom_call.1} parent=0 // loop_pre_header
    _
  $region3: #{tpu_custom_call.1} parent=0 // loop_header
    %s10 = sphi 0, %s14
    %p11 = scmp.ge.s32.totalorder %s10, 6
    %s20 = sphi 0, %s22
    %s23 = sphi 0, %s20
    %s24 = sphi 0, %s23
    %s40 = sphi 0, %s24
    %s44 = sphi 0, %s44
    %s46 = sphi 0, %s44
    %s47 = sphi 0, %s46
    %s61 = sphi 0, %s47
    %s65 = sphi 0, %s65
    %s67 = sphi 0, %s65
    %s68 = sphi 0, %s67
    %s82 = sphi 0, %s68
    %s86 = sphi 0, %s86
    %s88 = sphi 0, %s86
    %s89 = sphi 0, %s88
    %s103 = sphi 0, %s89
    %s109 = sphi 0, %s111
    %s112 = sphi 0, %s109
    %s113 = sphi 0, %s112
    %s129 = sphi 0, %s113
  $region4: #{tpu_custom_call.1} parent=0 // loop_header_branch
    %13 = sbr.rel (%p11) target = $region8
  $region5: #{tpu_custom_call.1} parent=0 // loop_body
    %s15 = ssub.s32 %s10, 1
    %s16 = ssub.s32 %s10, 2
    %s17 = sadd.s32 %s10, 1
    %s18 = ssub.s32 %s10, %s17
    %p19 = scmp.eq.s32.totalorder %s18, 0
    %s21 = sadd.s32 %s20, 1
    %s22 = scalar_select %p19, %s20, %s21
    %p25 = pneg %p19
    %p26 = scmp.eq.s32.totalorder %s10, 3
    %p27 = por %p25, %p26
    %p28 = scmp.ne.s32.totalorder %s20, %s23
    %p29 = scmp.eq.s32.totalorder %s10, 0
    %p30 = por %p28, %p29
    %p31 = scmp.ne.s32.totalorder %s20, %s23
    %p32 = scmp.eq.s32.totalorder %s15, 3
    %p33 = por %p31, %p32
    %p34 = scmp.ne.s32.totalorder %s23, %s24
    %p35 = scmp.eq.s32.totalorder %s15, 0
    %p36 = por %p34, %p35
    %p37 = scmp.ne.s32.totalorder %s23, %s24
    %p38 = scmp.eq.s32.totalorder %s16, 3
    %p39 = por %p37, %p38
    %p41 = scmp.ne.s32.totalorder %s24, %s40
    %p42 = scmp.eq.s32.totalorder %s16, 0
    %p43 = por %p41, %p42
    %s45 = sadd.s32 %s44, 1
    %p48 = scmp.eq.s32.totalorder %s10, 3
    %p49 = scmp.ne.s32.totalorder %s44, %s46
    %p50 = scmp.eq.s32.totalorder %s10, 0
    %p51 = por %p49, %p50
    %p52 = scmp.ne.s32.totalorder %s44, %s46
    %p53 = scmp.eq.s32.totalorder %s15, 3
    %p54 = por %p52, %p53
    %p55 = scmp.ne.s32.totalorder %s46, %s47
    %p56 = scmp.eq.s32.totalorder %s15, 0
    %p57 = por %p55, %p56
    %p58 = scmp.ne.s32.totalorder %s46, %s47
    %p59 = scmp.eq.s32.totalorder %s16, 3
    %p60 = por %p58, %p59
    %p62 = scmp.ne.s32.totalorder %s47, %s61
    %p63 = scmp.eq.s32.totalorder %s16, 0
    %p64 = por %p62, %p63
    %s66 = sadd.s32 %s65, 1
    %p69 = scmp.eq.s32.totalorder %s10, 3
    %p70 = scmp.ne.s32.totalorder %s65, %s67
    %p71 = scmp.eq.s32.totalorder %s10, 0
    %p72 = por %p70, %p71
    %p73 = scmp.ne.s32.totalorder %s65, %s67
    %p74 = scmp.eq.s32.totalorder %s15, 3
    %p75 = por %p73, %p74
    %p76 = scmp.ne.s32.totalorder %s67, %s68
    %p77 = scmp.eq.s32.totalorder %s15, 0
    %p78 = por %p76, %p77
    %p79 = scmp.ne.s32.totalorder %s67, %s68
    %p80 = scmp.eq.s32.totalorder %s16, 3
    %p81 = por %p79, %p80
    %p83 = scmp.ne.s32.totalorder %s68, %s82
    %p84 = scmp.eq.s32.totalorder %s16, 0
    %p85 = por %p83, %p84
    %s87 = sadd.s32 %s86, 1
    %p90 = scmp.eq.s32.totalorder %s10, 3
    %p91 = scmp.ne.s32.totalorder %s86, %s88
    %p92 = scmp.eq.s32.totalorder %s10, 0
    %p93 = por %p91, %p92
    %p94 = scmp.ne.s32.totalorder %s86, %s88
    %p95 = scmp.eq.s32.totalorder %s15, 3
    %p96 = por %p94, %p95
    %p97 = scmp.ne.s32.totalorder %s88, %s89
    %p98 = scmp.eq.s32.totalorder %s15, 0
    %p99 = por %p97, %p98
    %p100 = scmp.ne.s32.totalorder %s88, %s89
    %p101 = scmp.eq.s32.totalorder %s16, 3
    %p102 = por %p100, %p101
    %p104 = scmp.ne.s32.totalorder %s89, %s103
    %p105 = scmp.eq.s32.totalorder %s16, 0
    %p106 = por %p104, %p105
    %s107 = ssub.s32 %s10, %s17
    %p108 = scmp.eq.s32.totalorder %s107, 0
    %s110 = sadd.s32 %s109, 1
    %s111 = scalar_select %p108, %s109, %s110
    %p114 = pneg %p108
    %p115 = scmp.eq.s32.totalorder %s10, 3
    %p116 = por %p114, %p115
    %p117 = scmp.ne.s32.totalorder %s109, %s112
    %p118 = scmp.eq.s32.totalorder %s10, 0
    %p119 = por %p117, %p118
    %p120 = scmp.ne.s32.totalorder %s109, %s112
    %p121 = scmp.eq.s32.totalorder %s15, 3
    %p122 = por %p120, %p121
    %p123 = scmp.ne.s32.totalorder %s112, %s113
    %p124 = scmp.eq.s32.totalorder %s15, 0
    %p125 = por %p123, %p124
    %p126 = scmp.ne.s32.totalorder %s112, %s113
    %p127 = scmp.eq.s32.totalorder %s16, 3
    %p128 = por %p126, %p127
    %p130 = scmp.ne.s32.totalorder %s113, %s129
    %p131 = scmp.eq.s32.totalorder %s16, 0
    %p132 = por %p130, %p131
    %p133 = scmp.le.s32.totalorder 1, %s10
    %p134 = scmp.lt.s32.totalorder %s10, 5
    %p135 = pnand %p133, %p134
    %p136 = pneg %p135
    // Predicated region
    $region9: #{tpu_custom_call.1} parent=5 // pred_check
      _
    $region10: #{tpu_custom_call.1} parent=5 // pred_check_branch
      %138 = sbr.rel (%p135) target = $region12
    $region11: #{tpu_custom_call.1} parent=5 // pred_region
      %s139 = ssub.s32 %s10, 1
      // Predicated region
      $region13: #{tpu_custom_call.1} parent=11 // pred_check
        %p140 = pneg %p57
      $region14: #{tpu_custom_call.1} parent=11 // pred_check_branch
        %142 = sbr.rel (%p140) target = $region16
      $region15: #{tpu_custom_call.1} parent=11 // pred_region
        _
      $region16: #{tpu_custom_call.1} parent=11 // pred_fallthru
        _
      // Predicated region
      $region17: #{tpu_custom_call.1} parent=11 // pred_check
        %p143 = pneg %p78
      $region18: #{tpu_custom_call.1} parent=11 // pred_check_branch
        %145 = sbr.rel (%p143) target = $region20
      $region19: #{tpu_custom_call.1} parent=11 // pred_region
        _
      $region20: #{tpu_custom_call.1} parent=11 // pred_fallthru
        _
      // Predicated region
      $region21: #{tpu_custom_call.1} parent=11 // pred_check
        %p146 = pneg %p99
      $region22: #{tpu_custom_call.1} parent=11 // pred_check_branch
        %148 = sbr.rel (%p146) target = $region24
      $region23: #{tpu_custom_call.1} parent=11 // pred_region
        _
      $region24: #{tpu_custom_call.1} parent=11 // pred_fallthru
        _
    $region12: #{tpu_custom_call.1} parent=5 // pred_fallthru
      _
    %p149 = scmp.lt.s32.totalorder %s10, 4
    // Predicated region
    $region25: #{tpu_custom_call.1} parent=5 // pred_check
      %p150 = pneg %p149
    $region26: #{tpu_custom_call.1} parent=5 // pred_check_branch
      %152 = sbr.rel (%p150) target = $region28
    $region27: #{tpu_custom_call.1} parent=5 // pred_region
      // Predicated region
      $region29: #{tpu_custom_call.1} parent=27 // pred_check
        %p153 = pneg %p30
      $region30: #{tpu_custom_call.1} parent=27 // pred_check_branch
        %155 = sbr.rel (%p153) target = $region32
      $region31: #{tpu_custom_call.1} parent=27 // pred_region
        %s156 = smul.u32 64, %s10
        %p157 = scmp.lt.s32.totalorder %s156, 255
        %s158 = scalar_select %p157, %s156, 255
        %s159 = smul.addr %s158, 8
        %s160 = scalar_lea.vmem %s0, %s159
        %s161 = smul.u32 64, %s10
      $region32: #{tpu_custom_call.1} parent=27 // pred_fallthru
        _
    $region28: #{tpu_custom_call.1} parent=5 // pred_fallthru
      _
    %p162 = scmp.le.s32.totalorder 1, %s10
    %p163 = scmp.lt.s32.totalorder %s10, 5
    %p164 = pnand %p162, %p163
    %p165 = pneg %p164
    // Predicated region
    $region33: #{tpu_custom_call.1} parent=5 // pred_check
      _
    $region34: #{tpu_custom_call.1} parent=5 // pred_check_branch
      %167 = sbr.rel (%p164) target = $region36
    $region35: #{tpu_custom_call.1} parent=5 // pred_region
      %s168 = ssub.s32 %s10, 1
      %s169 = smul.u32 64, %s15
      %p170 = scmp.lt.s32.totalorder %s169, 255
      %s171 = scalar_select %p170, %s169, 255
      %s172 = smul.addr %s171, 8
      %s173 = scalar_lea.vmem %s0, %s172
      %p174 = pneg %p36
      %p175 = pneg %p33
      %p176 = pneg %p57
      %p177 = pneg %p54
      %p178 = pneg %p78
      %p179 = pneg %p75
      %p180 = pneg %p99
      %p181 = pneg %p96
      %p182 = pneg %p125
      %p183 = pneg %p122
      %s184 = smul.u32 64, %s15
      %p185 = scmp.lt.s32.totalorder %s184, 255
      %s186 = scalar_select %p185, %s184, 255
      %s187 = smul.addr %s186, 8
      %s188 = scalar_lea.vmem %s4, %s187
      %s189 = smul.u32 64, %s15
      %p190 = scmp.lt.s32.totalorder %s189, 255
      %s191 = scalar_select %p190, %s189, 255
      %s192 = smul.addr %s191, 8
      %s193 = scalar_lea.vmem %s0, %s192
      %s194 = smul.u32 64, %s15
      %s195 = smul.u32 64, %s15
      %p196 = scmp.lt.s32.totalorder %s195, 255
      %s197 = scalar_select %p196, %s195, 255
      %s198 = smul.addr %s197, 8
      %s199 = scalar_lea.vmem %s4, %s198
      %s200 = smul.u32 64, %s15
      %v201 = vld [vmem:[%s193] sm:$0xff]
      %v202 = vld [vmem:[%s193 + $0x8] sm:$0xff]
      %v203 = vld [vmem:[%s193 + $0x10] sm:$0xff]
      %v204 = vld [vmem:[%s193 + $0x18] sm:$0xff]
      %v205 = vld [vmem:[%s193 + $0x20] sm:$0xff]
      %v206 = vld [vmem:[%s193 + $0x28] sm:$0xff]
      %v207 = vld [vmem:[%s193 + $0x30] sm:$0xff]
      %v208 = vld [vmem:[%s193 + $0x38] sm:$0xff]
      %v209 = vld [vmem:[%s193 + $0x40] sm:$0xff]
      %v210 = vld [vmem:[%s193 + $0x48] sm:$0xff]
      %v211 = vld [vmem:[%s193 + $0x50] sm:$0xff]
      %v212 = vld [vmem:[%s193 + $0x58] sm:$0xff]
      %v213 = vld [vmem:[%s193 + $0x60] sm:$0xff]
      %v214 = vld [vmem:[%s193 + $0x68] sm:$0xff]
      %v215 = vld [vmem:[%s193 + $0x70] sm:$0xff]
      %v216 = vld [vmem:[%s193 + $0x78] sm:$0xff]
      %v217 = vld [vmem:[%s193 + $0x80] sm:$0xff]
      %v218 = vld [vmem:[%s193 + $0x88] sm:$0xff]
      %v219 = vld [vmem:[%s193 + $0x90] sm:$0xff]
      %v220 = vld [vmem:[%s193 + $0x98] sm:$0xff]
      %v221 = vld [vmem:[%s193 + $0xa0] sm:$0xff]
      %v222 = vld [vmem:[%s193 + $0xa8] sm:$0xff]
      %v223 = vld [vmem:[%s193 + $0xb0] sm:$0xff]
      %v224 = vld [vmem:[%s193 + $0xb8] sm:$0xff]
      %v225 = vld [vmem:[%s193 + $0xc0] sm:$0xff]
      %v226 = vld [vmem:[%s193 + $0xc8] sm:$0xff]
      %v227 = vld [vmem:[%s193 + $0xd0] sm:$0xff]
      %v228 = vld [vmem:[%s193 + $0xd8] sm:$0xff]
      %v229 = vld [vmem:[%s193 + $0xe0] sm:$0xff]
      %v230 = vld [vmem:[%s193 + $0xe8] sm:$0xff]
      %v231 = vld [vmem:[%s193 + $0xf0] sm:$0xff]
      %v232 = vld [vmem:[%s193 + $0xf8] sm:$0xff]
      %v233 = vld [vmem:[%s193 + $0x100] sm:$0xff]
      %v234 = vld [vmem:[%s193 + $0x108] sm:$0xff]
      %v235 = vld [vmem:[%s193 + $0x110] sm:$0xff]
      %v236 = vld [vmem:[%s193 + $0x118] sm:$0xff]
      %v237 = vld [vmem:[%s193 + $0x120] sm:$0xff]
      %v238 = vld [vmem:[%s193 + $0x128] sm:$0xff]
      %v239 = vld [vmem:[%s193 + $0x130] sm:$0xff]
      %v240 = vld [vmem:[%s193 + $0x138] sm:$0xff]
      %v241 = vld [vmem:[%s193 + $0x140] sm:$0xff]
      %v242 = vld [vmem:[%s193 + $0x148] sm:$0xff]
      %v243 = vld [vmem:[%s193 + $0x150] sm:$0xff]
      %v244 = vld [vmem:[%s193 + $0x158] sm:$0xff]
      %v245 = vld [vmem:[%s193 + $0x160] sm:$0xff]
      %v246 = vld [vmem:[%s193 + $0x168] sm:$0xff]
      %v247 = vld [vmem:[%s193 + $0x170] sm:$0xff]
      %v248 = vld [vmem:[%s193 + $0x178] sm:$0xff]
      %v249 = vld [vmem:[%s193 + $0x180] sm:$0xff]
      %v250 = vld [vmem:[%s193 + $0x188] sm:$0xff]
      %v251 = vld [vmem:[%s193 + $0x190] sm:$0xff]
      %v252 = vld [vmem:[%s193 + $0x198] sm:$0xff]
      %v253 = vld [vmem:[%s193 + $0x1a0] sm:$0xff]
      %v254 = vld [vmem:[%s193 + $0x1a8] sm:$0xff]
      %v255 = vld [vmem:[%s193 + $0x1b0] sm:$0xff]
      %v256 = vld [vmem:[%s193 + $0x1b8] sm:$0xff]
      %v257 = vld [vmem:[%s193 + $0x1c0] sm:$0xff]
      %v258 = vld [vmem:[%s193 + $0x1c8] sm:$0xff]
      %v259 = vld [vmem:[%s193 + $0x1d0] sm:$0xff]
      %v260 = vld [vmem:[%s193 + $0x1d8] sm:$0xff]
      %v261 = vld [vmem:[%s193 + $0x1e0] sm:$0xff]
      %v262 = vld [vmem:[%s193 + $0x1e8] sm:$0xff]
      %v263 = vld [vmem:[%s193 + $0x1f0] sm:$0xff]
      %v264 = vld [vmem:[%s193 + $0x1f8] sm:$0xff]
      %v265 = vld [vmem:[%s1] sm:$0xff]
      %v266 = vld [vmem:[%s1 + $0x8] sm:$0xff]
      %v267 = vld [vmem:[%s1 + $0x10] sm:$0xff]
      %v268 = vld [vmem:[%s1 + $0x18] sm:$0x7]
      %v269 = vld [vmem:[%s2] sm:$0x1]
      %v271 = vlaneseq
      %v272 = vshrl.u32 %v271, 7
      %v273 = vsub.s32 0, %v272
      %v274 = vrot.slane %v269, %v273
      %vm276 = vcmask 220160
      %v278 = vsel %vm276, %v201, 0
      %v281 = vsel %vm276, %v202, 0
      %v284 = vsel %vm276, %v203, 0
      %v287 = vsel %vm276, %v204, 0
      %v290 = vsel %vm276, %v205, 0
      %v293 = vsel %vm276, %v206, 0
      %v296 = vsel %vm276, %v207, 0
      %v299 = vsel %vm276, %v208, 0
      %v302 = vsel %vm276, %v209, 0
      %v305 = vsel %vm276, %v210, 0
      %v308 = vsel %vm276, %v211, 0
      %v311 = vsel %vm276, %v212, 0
      %v314 = vsel %vm276, %v213, 0
      %v317 = vsel %vm276, %v214, 0
      %v320 = vsel %vm276, %v215, 0
      %v323 = vsel %vm276, %v216, 0
      %v326 = vsel %vm276, %v217, 0
      %v329 = vsel %vm276, %v218, 0
      %v332 = vsel %vm276, %v219, 0
      %v335 = vsel %vm276, %v220, 0
      %v338 = vsel %vm276, %v221, 0
      %v341 = vsel %vm276, %v222, 0
      %v344 = vsel %vm276, %v223, 0
      %v347 = vsel %vm276, %v224, 0
      %v350 = vsel %vm276, %v225, 0
      %v353 = vsel %vm276, %v226, 0
      %v356 = vsel %vm276, %v227, 0
      %v359 = vsel %vm276, %v228, 0
      %v362 = vsel %vm276, %v229, 0
      %v365 = vsel %vm276, %v230, 0
      %v368 = vsel %vm276, %v231, 0
      %v371 = vsel %vm276, %v232, 0
      %v374 = vsel %vm276, %v233, 0
      %v377 = vsel %vm276, %v234, 0
      %v380 = vsel %vm276, %v235, 0
      %v383 = vsel %vm276, %v236, 0
      %v386 = vsel %vm276, %v237, 0
      %v389 = vsel %vm276, %v238, 0
      %v392 = vsel %vm276, %v239, 0
      %v395 = vsel %vm276, %v240, 0
      %v398 = vsel %vm276, %v241, 0
      %v401 = vsel %vm276, %v242, 0
      %v404 = vsel %vm276, %v243, 0
      %v407 = vsel %vm276, %v244, 0
      %v410 = vsel %vm276, %v245, 0
      %v413 = vsel %vm276, %v246, 0
      %v416 = vsel %vm276, %v247, 0
      %v419 = vsel %vm276, %v248, 0
      %v422 = vsel %vm276, %v249, 0
      %v425 = vsel %vm276, %v250, 0
      %v428 = vsel %vm276, %v251, 0
      %v431 = vsel %vm276, %v252, 0
      %v434 = vsel %vm276, %v253, 0
      %v437 = vsel %vm276, %v254, 0
      %v440 = vsel %vm276, %v255, 0
      %v443 = vsel %vm276, %v256, 0
      %v446 = vsel %vm276, %v257, 0
      %v449 = vsel %vm276, %v258, 0
      %v452 = vsel %vm276, %v259, 0
      %v455 = vsel %vm276, %v260, 0
      %v458 = vsel %vm276, %v261, 0
      %v461 = vsel %vm276, %v262, 0
      %v464 = vsel %vm276, %v263, 0
      %v467 = vsel %vm276, %v264, 0
      %vm469 = vcmask 1042432
      %v471 = vsel %vm469, %v268, 0
      %473 = vmatprep.subr.mxu0 0.0
      %v474 = vand.u32 %v265, 4294901760
      %475 = vmatpush1.msra.mxu0 %v474
      %476 = vmatprep.subr.mxu0 0.0
      %v477 = vand.u32 %v266, 4294901760
      %478 = vmatpush1.msra.mxu0 %v477
      %479 = vmatprep.subr.mxu0 0.0
      %v480 = vand.u32 %v267, 4294901760
      %481 = vmatpush1.msra.mxu0 %v480
      %482 = vmatprep.subr.mxu0 0.0
      %v483 = vand.u32 %v471, 4294901760
      %484 = vmatpush1.msra.mxu0 %v483
      %485 = vmatprep.subr.mxu0 0.0
      %486 = vmatpush1.msra.mxu0 0.0
      %487 = vmatprep.subr.mxu0 0.0
      %488 = vmatpush1.msra.mxu0 0.0
      %489 = vmatprep.subr.mxu0 0.0
      %490 = vmatpush1.msra.mxu0 0.0
      %491 = vmatprep.subr.mxu0 0.0
      %492 = vmatpush1.msra.mxu0 0.0
      %493 = vmatprep.subr.mxu0 0.0
      %494 = vmatpush1.msra.mxu0 0.0
      %495 = vmatprep.subr.mxu0 0.0
      %496 = vmatpush1.msra.mxu0 0.0
      %497 = vmatprep.subr.mxu0 0.0
      %498 = vmatpush1.msra.mxu0 0.0
      %499 = vmatprep.subr.mxu0 0.0
      %500 = vmatpush1.msra.mxu0 0.0
      %501 = vmatprep.subr.mxu0 0.0
      %502 = vmatpush1.msra.mxu0 0.0
      %503 = vmatprep.subr.mxu0 0.0
      %504 = vmatpush1.msra.mxu0 0.0
      %505 = vmatprep.subr.mxu0 0.0
      %506 = vmatpush1.msra.mxu0 0.0
      %507 = vmatprep.subr.mxu0 0.0
      %508 = vmatpush1.msra.mxu0 0.0
      %509 = vmatprep.subr.mxu0 0.0
      %510 = vmatpush1.msra.mxu0 0.0
      %511 = vmatprep.subr.mxu0 0.0
      %512 = vmatpush1.msra.mxu0 0.0
      %513 = vmatprep.subr.mxu0 0.0
      %514 = vmatpush1.msra.mxu0 0.0
      %515 = vmatprep.subr.mxu0 0.0
      %516 = vmatpush1.msra.mxu0 0.0
      %517 = vmatprep.subr.mxu0 0.0
      %518 = vmatpush1.msra.mxu0 0.0
      %519 = vmatprep.subr.mxu0 0.0
      %520 = vmatpush1.msra.mxu0 0.0
      %521 = vmatprep.subr.mxu0 0.0
      %522 = vmatpush1.msra.mxu0 0.0
      %523 = vmatprep.subr.mxu0 0.0
      %524 = vmatpush1.msra.mxu0 0.0
      %525 = vmatprep.subr.mxu0 0.0
      %526 = vmatpush1.msra.mxu0 0.0
      %527 = vmatprep.subr.mxu0 0.0
      %528 = vmatpush1.msra.mxu0 0.0
      %529 = vmatprep.subr.mxu0 0.0
      %530 = vmatpush1.msra.mxu0 0.0
      %531 = vmatprep.subr.mxu0 0.0
      %532 = vmatpush1.msra.mxu0 0.0
      %533 = vmatprep.subr.mxu0 0.0
      %534 = vmatpush1.msra.mxu0 0.0
      %535 = vmatprep.subr.mxu0 0.0
      %536 = vmatpush1.msra.mxu0 0.0
      %537 = vmatprep.subr.mxu0 0.0
      %538 = vmatpush1.msra.mxu0 0.0
      %539 = vmatprep.subr.mxu0 0.0
      %540 = vmatpush1.msra.mxu0 0.0
      %541 = vmatprep.mubr.f32.mxu0 0.0
      %v542 = vand.u32 %v278, 4294901760
      %v543 = vsub.f32 %v278, %v542
      %v544 = vand.u32 %v543, 4294901760
      %v545 = vsub.f32 %v543, %v544
      %v546 = vand.u32 %v545, 4294901760
      %547 = vmatmul.mubr.f32.gmra.mrb[0].mxu0 %v546
      %v548 = vpop.f32.mrb[0].mxu0
      %v549 = vadd.f32 %v274, %v548
      %v550 = vpop.f32.mrb[0].mxu0
      %551 = vmatprep.mubr.f32.mxu0 0.0
      %v552 = vand.u32 %v281, 4294901760
      %v553 = vsub.f32 %v281, %v552
      %v554 = vand.u32 %v553, 4294901760
      %v555 = vsub.f32 %v553, %v554
      %v556 = vand.u32 %v555, 4294901760
      %557 = vmatmul.mubr.f32.gmra.mrb[0].mxu0 %v556
      %v558 = vpop.f32.mrb[0].mxu0
      %v559 = vadd.f32 %v274, %v558
      %v560 = vpop.f32.mrb[0].mxu0
      %561 = vmatprep.mubr.f32.mxu0 0.0
      %v562 = vand.u32 %v284, 4294901760
      %v563 = vsub.f32 %v284, %v562
      %v564 = vand.u32 %v563, 4294901760
      %v565 = vsub.f32 %v563, %v564
      %v566 = vand.u32 %v565, 4294901760
      %567 = vmatmul.mubr.f32.gmra.mrb[0].mxu0 %v566
      %v568 = vpop.f32.mrb[0].mxu0
      %v569 = vadd.f32 %v274, %v568
      %v570 = vpop.f32.mrb[0].mxu0
      %571 = vmatprep.mubr.f32.mxu0 0.0
      %v572 = vand.u32 %v287, 4294901760
      %v573 = vsub.f32 %v287, %v572
      %v574 = vand.u32 %v573, 4294901760
      %v575 = vsub.f32 %v573, %v574
      %v576 = vand.u32 %v575, 4294901760
      %577 = vmatmul.mubr.f32.gmra.mrb[0].mxu0 %v576
      %v578 = vpop.f32.mrb[0].mxu0
      %v579 = vadd.f32 %v274, %v578
      %v580 = vpop.f32.mrb[0].mxu0
      %581 = vmatprep.mubr.f32.mxu0 0.0
      %v582 = vand.u32 %v290, 4294901760
      %v583 = vsub.f32 %v290, %v582
      %v584 = vand.u32 %v583, 4294901760
      %v585 = vsub.f32 %v583, %v584
      %v586 = vand.u32 %v585, 4294901760
      %587 = vmatmul.mubr.f32.gmra.mrb[0].mxu0 %v586
      %v588 = vpop.f32.mrb[0].mxu0
      %v589 = vadd.f32 %v274, %v588
      %v590 = vpop.f32.mrb[0].mxu0
      %591 = vmatprep.mubr.f32.mxu0 0.0
      %v592 = vand.u32 %v293, 4294901760
      %v593 = vsub.f32 %v293, %v592
      %v594 = vand.u32 %v593, 4294901760
      %v595 = vsub.f32 %v593, %v594
      %v596 = vand.u32 %v595, 4294901760
      %597 = vmatmul.mubr.f32.gmra.mrb[0].mxu0 %v596
      %v598 = vpop.f32.mrb[0].mxu0
      %v599 = vadd.f32 %v274, %v598
      %v600 = vpop.f32.mrb[0].mxu0
      %601 = vmatprep.mubr.f32.mxu0 0.0
      %v602 = vand.u32 %v296, 4294901760
      %v603 = vsub.f32 %v296, %v602
      %v604 = vand.u32 %v603, 4294901760
      %v605 = vsub.f32 %v603, %v604
      %v606 = vand.u32 %v605, 4294901760
      %607 = vmatmul.mubr.f32.gmra.mrb[0].mxu0 %v606
      %v608 = vpop.f32.mrb[0].mxu0
      %v609 = vadd.f32 %v274, %v608
      %v610 = vpop.f32.mrb[0].mxu0
      %611 = vmatprep.mubr.f32.mxu0 0.0
      %v612 = vand.u32 %v299, 4294901760
      %v613 = vsub.f32 %v299, %v612
      %v614 = vand.u32 %v613, 4294901760
      %v615 = vsub.f32 %v613, %v614
      %v616 = vand.u32 %v615, 4294901760
      %617 = vmatmul.mubr.f32.gmra.mrb[0].mxu0 %v616
      %v618 = vpop.f32.mrb[0].mxu0
      %v619 = vadd.f32 %v274, %v618
      %v620 = vpop.f32.mrb[0].mxu0
      %621 = vmatprep.mubr.f32.mxu0 0.0
      %v622 = vand.u32 %v302, 4294901760
      %v623 = vsub.f32 %v302, %v622
      %v624 = vand.u32 %v623, 4294901760
      %v625 = vsub.f32 %v623, %v624
      %v626 = vand.u32 %v625, 4294901760
      %627 = vmatmul.mubr.f32.gmra.mrb[0].mxu0 %v626
      %v628 = vpop.f32.mrb[0].mxu0
      %v629 = vadd.f32 %v274, %v628
      %v630 = vpop.f32.mrb[0].mxu0
      %631 = vmatprep.mubr.f32.mxu0 0.0
      %v632 = vand.u32 %v305, 4294901760
      %v633 = vsub.f32 %v305, %v632
      %v634 = vand.u32 %v633, 4294901760
      %v635 = vsub.f32 %v633, %v634
      %v636 = vand.u32 %v635, 4294901760
      %637 = vmatmul.mubr.f32.gmra.mrb[0].mxu0 %v636
      %v638 = vpop.f32.mrb[0].mxu0
      %v639 = vadd.f32 %v274, %v638
      %v640 = vpop.f32.mrb[0].mxu0
      %641 = vmatprep.mubr.f32.mxu0 0.0
      %v642 = vand.u32 %v308, 4294901760
      %v643 = vsub.f32 %v308, %v642
      %v644 = vand.u32 %v643, 4294901760
      %v645 = vsub.f32 %v643, %v644
      %v646 = vand.u32 %v645, 4294901760
      %647 = vmatmul.mubr.f32.gmra.mrb[0].mxu0 %v646
      %v648 = vpop.f32.mrb[0].mxu0
      %v649 = vadd.f32 %v274, %v648
      %v650 = vpop.f32.mrb[0].mxu0
      %651 = vmatprep.mubr.f32.mxu0 0.0
      %v652 = vand.u32 %v311, 4294901760
      %v653 = vsub.f32 %v311, %v652
      %v654 = vand.u32 %v653, 4294901760
      %v655 = vsub.f32 %v653, %v654
      %v656 = vand.u32 %v655, 4294901760
      %657 = vmatmul.mubr.f32.gmra.mrb[0].mxu0 %v656
      %v658 = vpop.f32.mrb[0].mxu0
      %v659 = vadd.f32 %v274, %v658
      %v660 = vpop.f32.mrb[0].mxu0
      %661 = vmatprep.mubr.f32.mxu0 0.0
      %v662 = vand.u32 %v314, 4294901760
      %v663 = vsub.f32 %v314, %v662
      %v664 = vand.u32 %v663, 4294901760
      %v665 = vsub.f32 %v663, %v664
      %v666 = vand.u32 %v665, 4294901760
      %667 = vmatmul.mubr.f32.gmra.mrb[0].mxu0 %v666
      %v668 = vpop.f32.mrb[0].mxu0
      %v669 = vadd.f32 %v274, %v668
      %v670 = vpop.f32.mrb[0].mxu0
      %671 = vmatprep.mubr.f32.mxu0 0.0
      %v672 = vand.u32 %v317, 4294901760
      %v673 = vsub.f32 %v317, %v672
      %v674 = vand.u32 %v673, 4294901760
      %v675 = vsub.f32 %v673, %v674
      %v676 = vand.u32 %v675, 4294901760
      %677 = vmatmul.mubr.f32.gmra.mrb[0].mxu0 %v676
      %v678 = vpop.f32.mrb[0].mxu0
      %v679 = vadd.f32 %v274, %v678
      %v680 = vpop.f32.mrb[0].mxu0
      %681 = vmatprep.mubr.f32.mxu0 0.0
      %v682 = vand.u32 %v320, 4294901760
      %v683 = vsub.f32 %v320, %v682
      %v684 = vand.u32 %v683, 4294901760
      %v685 = vsub.f32 %v683, %v684
      %v686 = vand.u32 %v685, 4294901760
      %687 = vmatmul.mubr.f32.gmra.mrb[0].mxu0 %v686
      %v688 = vpop.f32.mrb[0].mxu0
      %v689 = vadd.f32 %v274, %v688
      %v690 = vpop.f32.mrb[0].mxu0
      %691 = vmatprep.mubr.f32.mxu0 0.0
      %v692 = vand.u32 %v323, 4294901760
      %v693 = vsub.f32 %v323, %v692
      %v694 = vand.u32 %v693, 4294901760
      %v695 = vsub.f32 %v693, %v694
      %v696 = vand.u32 %v695, 4294901760
      %697 = vmatmul.mubr.f32.gmra.mrb[0].mxu0 %v696
      %v698 = vpop.f32.mrb[0].mxu0
      %v699 = vadd.f32 %v274, %v698
      %v700 = vpop.f32.mrb[0].mxu0
      %701 = vmatprep.mubr.f32.mxu0 0.0
      %v702 = vand.u32 %v326, 4294901760
      %v703 = vsub.f32 %v326, %v702
      %v704 = vand.u32 %v703, 4294901760
      %v705 = vsub.f32 %v703, %v704
      %v706 = vand.u32 %v705, 4294901760
      %707 = vmatmul.mubr.f32.gmra.mrb[0].mxu0 %v706
      %v708 = vpop.f32.mrb[0].mxu0
      %v709 = vadd.f32 %v274, %v708
      %v710 = vpop.f32.mrb[0].mxu0
      %711 = vmatprep.mubr.f32.mxu0 0.0
      %v712 = vand.u32 %v329, 4294901760
      %v713 = vsub.f32 %v329, %v712
      %v714 = vand.u32 %v713, 4294901760
      %v715 = vsub.f32 %v713, %v714
      %v716 = vand.u32 %v715, 4294901760
      %717 = vmatmul.mubr.f32.gmra.mrb[0].mxu0 %v716
      %v718 = vpop.f32.mrb[0].mxu0
      %v719 = vadd.f32 %v274, %v718
      %v720 = vpop.f32.mrb[0].mxu0
      %721 = vmatprep.mubr.f32.mxu0 0.0
      %v722 = vand.u32 %v332, 4294901760
      %v723 = vsub.f32 %v332, %v722
      %v724 = vand.u32 %v723, 4294901760
      %v725 = vsub.f32 %v723, %v724
      %v726 = vand.u32 %v725, 4294901760
      %727 = vmatmul.mubr.f32.gmra.mrb[0].mxu0 %v726
      %v728 = vpop.f32.mrb[0].mxu0
      %v729 = vadd.f32 %v274, %v728
      %v730 = vpop.f32.mrb[0].mxu0
      %731 = vmatprep.mubr.f32.mxu0 0.0
      %v732 = vand.u32 %v335, 4294901760
      %v733 = vsub.f32 %v335, %v732
      %v734 = vand.u32 %v733, 4294901760
      %v735 = vsub.f32 %v733, %v734
      %v736 = vand.u32 %v735, 4294901760
      %737 = vmatmul.mubr.f32.gmra.mrb[0].mxu0 %v736
      %v738 = vpop.f32.mrb[0].mxu0
      %v739 = vadd.f32 %v274, %v738
      %v740 = vpop.f32.mrb[0].mxu0
      %741 = vmatprep.mubr.f32.mxu0 0.0
      %v742 = vand.u32 %v338, 4294901760
      %v743 = vsub.f32 %v338, %v742
      %v744 = vand.u32 %v743, 4294901760
      %v745 = vsub.f32 %v743, %v744
      %v746 = vand.u32 %v745, 4294901760
      %747 = vmatmul.mubr.f32.gmra.mrb[0].mxu0 %v746
      %v748 = vpop.f32.mrb[0].mxu0
      %v749 = vadd.f32 %v274, %v748
      %v750 = vpop.f32.mrb[0].mxu0
      %751 = vmatprep.mubr.f32.mxu0 0.0
      %v752 = vand.u32 %v341, 4294901760
      %v753 = vsub.f32 %v341, %v752
      %v754 = vand.u32 %v753, 4294901760
      %v755 = vsub.f32 %v753, %v754
      %v756 = vand.u32 %v755, 4294901760
      %757 = vmatmul.mubr.f32.gmra.mrb[0].mxu0 %v756
      %v758 = vpop.f32.mrb[0].mxu0
      %v759 = vadd.f32 %v274, %v758
      %v760 = vpop.f32.mrb[0].mxu0
      %761 = vmatprep.mubr.f32.mxu0 0.0
      %v762 = vand.u32 %v344, 4294901760
      %v763 = vsub.f32 %v344, %v762
      %v764 = vand.u32 %v763, 4294901760
      %v765 = vsub.f32 %v763, %v764
      %v766 = vand.u32 %v765, 4294901760
      %767 = vmatmul.mubr.f32.gmra.mrb[0].mxu0 %v766
      %v768 = vpop.f32.mrb[0].mxu0
      %v769 = vadd.f32 %v274, %v768
      %v770 = vpop.f32.mrb[0].mxu0
      %771 = vmatprep.mubr.f32.mxu0 0.0
      %v772 = vand.u32 %v347, 4294901760
      %v773 = vsub.f32 %v347, %v772
      %v774 = vand.u32 %v773, 4294901760
      %v775 = vsub.f32 %v773, %v774
      %v776 = vand.u32 %v775, 4294901760
      %777 = vmatmul.mubr.f32.gmra.mrb[0].mxu0 %v776
      %v778 = vpop.f32.mrb[0].mxu0
      %v779 = vadd.f32 %v274, %v778
      %v780 = vpop.f32.mrb[0].mxu0
      %781 = vmatprep.mubr.f32.mxu0 0.0
      %v782 = vand.u32 %v350, 4294901760
      %v783 = vsub.f32 %v350, %v782
      %v784 = vand.u32 %v783, 4294901760
      %v785 = vsub.f32 %v783, %v784
      %v786 = vand.u32 %v785, 4294901760
      %787 = vmatmul.mubr.f32.gmra.mrb[0].mxu0 %v786
      %v788 = vpop.f32.mrb[0].mxu0
      %v789 = vadd.f32 %v274, %v788
      %v790 = vpop.f32.mrb[0].mxu0
      %791 = vmatprep.mubr.f32.mxu0 0.0
      %v792 = vand.u32 %v353, 4294901760
      %v793 = vsub.f32 %v353, %v792
      %v794 = vand.u32 %v793, 4294901760
      %v795 = vsub.f32 %v793, %v794
      %v796 = vand.u32 %v795, 4294901760
      %797 = vmatmul.mubr.f32.gmra.mrb[0].mxu0 %v796
      %v798 = vpop.f32.mrb[0].mxu0
      %v799 = vadd.f32 %v274, %v798
      %v800 = vpop.f32.mrb[0].mxu0
      %801 = vmatprep.mubr.f32.mxu0 0.0
      %v802 = vand.u32 %v356, 4294901760
      %v803 = vsub.f32 %v356, %v802
      %v804 = vand.u32 %v803, 4294901760
      %v805 = vsub.f32 %v803, %v804
      %v806 = vand.u32 %v805, 4294901760
      %807 = vmatmul.mubr.f32.gmra.mrb[0].mxu0 %v806
      %v808 = vpop.f32.mrb[0].mxu0
      %v809 = vadd.f32 %v274, %v808
      %v810 = vpop.f32.mrb[0].mxu0
      %811 = vmatprep.mubr.f32.mxu0 0.0
      %v812 = vand.u32 %v359, 4294901760
      %v813 = vsub.f32 %v359, %v812
      %v814 = vand.u32 %v813, 4294901760
      %v815 = vsub.f32 %v813, %v814
      %v816 = vand.u32 %v815, 4294901760
      %817 = vmatmul.mubr.f32.gmra.mrb[0].mxu0 %v816
      %v818 = vpop.f32.mrb[0].mxu0
      %v819 = vadd.f32 %v274, %v818
      %v820 = vpop.f32.mrb[0].mxu0
      %821 = vmatprep.mubr.f32.mxu0 0.0
      %v822 = vand.u32 %v362, 4294901760
      %v823 = vsub.f32 %v362, %v822
      %v824 = vand.u32 %v823, 4294901760
      %v825 = vsub.f32 %v823, %v824
      %v826 = vand.u32 %v825, 4294901760
      %827 = vmatmul.mubr.f32.gmra.mrb[0].mxu0 %v826
      %v828 = vpop.f32.mrb[0].mxu0
      %v829 = vadd.f32 %v274, %v828
      %v830 = vpop.f32.mrb[0].mxu0
      %831 = vmatprep.mubr.f32.mxu0 0.0
      %v832 = vand.u32 %v365, 4294901760
      %v833 = vsub.f32 %v365, %v832
      %v834 = vand.u32 %v833, 4294901760
      %v835 = vsub.f32 %v833, %v834
      %v836 = vand.u32 %v835, 4294901760
      %837 = vmatmul.mubr.f32.gmra.mrb[0].mxu0 %v836
      %v838 = vpop.f32.mrb[0].mxu0
      %v839 = vadd.f32 %v274, %v838
      %v840 = vpop.f32.mrb[0].mxu0
      %841 = vmatprep.mubr.f32.mxu0 0.0
      %v842 = vand.u32 %v368, 4294901760
      %v843 = vsub.f32 %v368, %v842
      %v844 = vand.u32 %v843, 4294901760
      %v845 = vsub.f32 %v843, %v844
      %v846 = vand.u32 %v845, 4294901760
      %847 = vmatmul.mubr.f32.gmra.mrb[0].mxu0 %v846
      %v848 = vpop.f32.mrb[0].mxu0
      %v849 = vadd.f32 %v274, %v848
      %v850 = vpop.f32.mrb[0].mxu0
      %851 = vmatprep.mubr.f32.mxu0 0.0
      %v852 = vand.u32 %v371, 4294901760
      %v853 = vsub.f32 %v371, %v852
      %v854 = vand.u32 %v853, 4294901760
      %v855 = vsub.f32 %v853, %v854
      %v856 = vand.u32 %v855, 4294901760
      %857 = vmatmul.mubr.f32.gmra.mrb[0].mxu0 %v856
      %v858 = vpop.f32.mrb[0].mxu0
      %v859 = vadd.f32 %v274, %v858
      %v860 = vpop.f32.mrb[0].mxu0
      %861 = vmatprep.mubr.f32.mxu0 0.0
      %v862 = vand.u32 %v374, 4294901760
      %v863 = vsub.f32 %v374, %v862
      %v864 = vand.u32 %v863, 4294901760
      %v865 = vsub.f32 %v863, %v864
      %v866 = vand.u32 %v865, 4294901760
      %867 = vmatmul.mubr.f32.gmra.mrb[0].mxu0 %v866
      %v868 = vpop.f32.mrb[0].mxu0
      %v869 = vadd.f32 %v274, %v868
      %v870 = vpop.f32.mrb[0].mxu0
      %871 = vmatprep.mubr.f32.mxu0 0.0
      %v872 = vand.u32 %v377, 4294901760
      %v873 = vsub.f32 %v377, %v872
      %v874 = vand.u32 %v873, 4294901760
      %v875 = vsub.f32 %v873, %v874
      %v876 = vand.u32 %v875, 4294901760
      %877 = vmatmul.mubr.f32.gmra.mrb[0].mxu0 %v876
      %v878 = vpop.f32.mrb[0].mxu0
      %v879 = vadd.f32 %v274, %v878
      %v880 = vpop.f32.mrb[0].mxu0
      %881 = vmatprep.mubr.f32.mxu0 0.0
      %v882 = vand.u32 %v380, 4294901760
      %v883 = vsub.f32 %v380, %v882
      %v884 = vand.u32 %v883, 4294901760
      %v885 = vsub.f32 %v883, %v884
      %v886 = vand.u32 %v885, 4294901760
      %887 = vmatmul.mubr.f32.gmra.mrb[0].mxu0 %v886
      %v888 = vpop.f32.mrb[0].mxu0
      %v889 = vadd.f32 %v274, %v888
      %v890 = vpop.f32.mrb[0].mxu0
      %891 = vmatprep.mubr.f32.mxu0 0.0
      %v892 = vand.u32 %v383, 4294901760
      %v893 = vsub.f32 %v383, %v892
      %v894 = vand.u32 %v893, 4294901760
      %v895 = vsub.f32 %v893, %v894
      %v896 = vand.u32 %v895, 4294901760
      %897 = vmatmul.mubr.f32.gmra.mrb[0].mxu0 %v896
      %v898 = vpop.f32.mrb[0].mxu0
      %v899 = vadd.f32 %v274, %v898
      %v900 = vpop.f32.mrb[0].mxu0
      %901 = vmatprep.mubr.f32.mxu0 0.0
      %v902 = vand.u32 %v386, 4294901760
      %v903 = vsub.f32 %v386, %v902
      %v904 = vand.u32 %v903, 4294901760
      %v905 = vsub.f32 %v903, %v904
      %v906 = vand.u32 %v905, 4294901760
      %907 = vmatmul.mubr.f32.gmra.mrb[0].mxu0 %v906
      %v908 = vpop.f32.mrb[0].mxu0
      %v909 = vadd.f32 %v274, %v908
      %v910 = vpop.f32.mrb[0].mxu0
      %911 = vmatprep.mubr.f32.mxu0 0.0
      %v912 = vand.u32 %v389, 4294901760
      %v913 = vsub.f32 %v389, %v912
      %v914 = vand.u32 %v913, 4294901760
      %v915 = vsub.f32 %v913, %v914
      %v916 = vand.u32 %v915, 4294901760
      %917 = vmatmul.mubr.f32.gmra.mrb[0].mxu0 %v916
      %v918 = vpop.f32.mrb[0].mxu0
      %v919 = vadd.f32 %v274, %v918
      %v920 = vpop.f32.mrb[0].mxu0
      %921 = vmatprep.mubr.f32.mxu0 0.0
      %v922 = vand.u32 %v392, 4294901760
      %v923 = vsub.f32 %v392, %v922
      %v924 = vand.u32 %v923, 4294901760
      %v925 = vsub.f32 %v923, %v924
      %v926 = vand.u32 %v925, 4294901760
      %927 = vmatmul.mubr.f32.gmra.mrb[0].mxu0 %v926
      %v928 = vpop.f32.mrb[0].mxu0
      %v929 = vadd.f32 %v274, %v928
      %v930 = vpop.f32.mrb[0].mxu0
      %931 = vmatprep.mubr.f32.mxu0 0.0
      %v932 = vand.u32 %v395, 4294901760
      %v933 = vsub.f32 %v395, %v932
      %v934 = vand.u32 %v933, 4294901760
      %v935 = vsub.f32 %v933, %v934
      %v936 = vand.u32 %v935, 4294901760
      %937 = vmatmul.mubr.f32.gmra.mrb[0].mxu0 %v936
      %v938 = vpop.f32.mrb[0].mxu0
      %v939 = vadd.f32 %v274, %v938
      %v940 = vpop.f32.mrb[0].mxu0
      %941 = vmatprep.mubr.f32.mxu0 0.0
      %v942 = vand.u32 %v398, 4294901760
      %v943 = vsub.f32 %v398, %v942
      %v944 = vand.u32 %v943, 4294901760
      %v945 = vsub.f32 %v943, %v944
      %v946 = vand.u32 %v945, 4294901760
      %947 = vmatmul.mubr.f32.gmra.mrb[0].mxu0 %v946
      %v948 = vpop.f32.mrb[0].mxu0
      %v949 = vadd.f32 %v274, %v948
      %v950 = vpop.f32.mrb[0].mxu0
      %951 = vmatprep.mubr.f32.mxu0 0.0
      %v952 = vand.u32 %v401, 4294901760
      %v953 = vsub.f32 %v401, %v952
      %v954 = vand.u32 %v953, 4294901760
      %v955 = vsub.f32 %v953, %v954
      %v956 = vand.u32 %v955, 4294901760
      %957 = vmatmul.mubr.f32.gmra.mrb[0].mxu0 %v956
      %v958 = vpop.f32.mrb[0].mxu0
      %v959 = vadd.f32 %v274, %v958
      %v960 = vpop.f32.mrb[0].mxu0
      %961 = vmatprep.mubr.f32.mxu0 0.0
      %v962 = vand.u32 %v404, 4294901760
      %v963 = vsub.f32 %v404, %v962
      %v964 = vand.u32 %v963, 4294901760
      %v965 = vsub.f32 %v963, %v964
      %v966 = vand.u32 %v965, 4294901760
      %967 = vmatmul.mubr.f32.gmra.mrb[0].mxu0 %v966
      %v968 = vpop.f32.mrb[0].mxu0
      %v969 = vadd.f32 %v274, %v968
      %v970 = vpop.f32.mrb[0].mxu0
      %971 = vmatprep.mubr.f32.mxu0 0.0
      %v972 = vand.u32 %v407, 4294901760
      %v973 = vsub.f32 %v407, %v972
      %v974 = vand.u32 %v973, 4294901760
      %v975 = vsub.f32 %v973, %v974
      %v976 = vand.u32 %v975, 4294901760
      %977 = vmatmul.mubr.f32.gmra.mrb[0].mxu0 %v976
      %v978 = vpop.f32.mrb[0].mxu0
      %v979 = vadd.f32 %v274, %v978
      %v980 = vpop.f32.mrb[0].mxu0
      %981 = vmatprep.mubr.f32.mxu0 0.0
      %v982 = vand.u32 %v410, 4294901760
      %v983 = vsub.f32 %v410, %v982
      %v984 = vand.u32 %v983, 4294901760
      %v985 = vsub.f32 %v983, %v984
      %v986 = vand.u32 %v985, 4294901760
      %987 = vmatmul.mubr.f32.gmra.mrb[0].mxu0 %v986
      %v988 = vpop.f32.mrb[0].mxu0
      %v989 = vadd.f32 %v274, %v988
      %v990 = vpop.f32.mrb[0].mxu0
      %991 = vmatprep.mubr.f32.mxu0 0.0
      %v992 = vand.u32 %v413, 4294901760
      %v993 = vsub.f32 %v413, %v992
      %v994 = vand.u32 %v993, 4294901760
      %v995 = vsub.f32 %v993, %v994
      %v996 = vand.u32 %v995, 4294901760
      %997 = vmatmul.mubr.f32.gmra.mrb[0].mxu0 %v996
      %v998 = vpop.f32.mrb[0].mxu0
      %v999 = vadd.f32 %v274, %v998
      %v1000 = vpop.f32.mrb[0].mxu0
      %1001 = vmatprep.mubr.f32.mxu0 0.0
      %v1002 = vand.u32 %v416, 4294901760
      %v1003 = vsub.f32 %v416, %v1002
      %v1004 = vand.u32 %v1003, 4294901760
      %v1005 = vsub.f32 %v1003, %v1004
      %v1006 = vand.u32 %v1005, 4294901760
      %1007 = vmatmul.mubr.f32.gmra.mrb[0].mxu0 %v1006
      %v1008 = vpop.f32.mrb[0].mxu0
      %v1009 = vadd.f32 %v274, %v1008
      %v1010 = vpop.f32.mrb[0].mxu0
      %1011 = vmatprep.mubr.f32.mxu0 0.0
      %v1012 = vand.u32 %v419, 4294901760
      %v1013 = vsub.f32 %v419, %v1012
      %v1014 = vand.u32 %v1013, 4294901760
      %v1015 = vsub.f32 %v1013, %v1014
      %v1016 = vand.u32 %v1015, 4294901760
      %1017 = vmatmul.mubr.f32.gmra.mrb[0].mxu0 %v1016
      %v1018 = vpop.f32.mrb[0].mxu0
      %v1019 = vadd.f32 %v274, %v1018
      %v1020 = vpop.f32.mrb[0].mxu0
      %1021 = vmatprep.mubr.f32.mxu0 0.0
      %v1022 = vand.u32 %v422, 4294901760
      %v1023 = vsub.f32 %v422, %v1022
      %v1024 = vand.u32 %v1023, 4294901760
      %v1025 = vsub.f32 %v1023, %v1024
      %v1026 = vand.u32 %v1025, 4294901760
      %1027 = vmatmul.mubr.f32.gmra.mrb[0].mxu0 %v1026
      %v1028 = vpop.f32.mrb[0].mxu0
      %v1029 = vadd.f32 %v274, %v1028
      %v1030 = vpop.f32.mrb[0].mxu0
      %1031 = vmatprep.mubr.f32.mxu0 0.0
      %v1032 = vand.u32 %v425, 4294901760
      %v1033 = vsub.f32 %v425, %v1032
      %v1034 = vand.u32 %v1033, 4294901760
      %v1035 = vsub.f32 %v1033, %v1034
      %v1036 = vand.u32 %v1035, 4294901760
      %1037 = vmatmul.mubr.f32.gmra.mrb[0].mxu0 %v1036
      %v1038 = vpop.f32.mrb[0].mxu0
      %v1039 = vadd.f32 %v274, %v1038
      %v1040 = vpop.f32.mrb[0].mxu0
      %1041 = vmatprep.mubr.f32.mxu0 0.0
      %v1042 = vand.u32 %v428, 4294901760
      %v1043 = vsub.f32 %v428, %v1042
      %v1044 = vand.u32 %v1043, 4294901760
      %v1045 = vsub.f32 %v1043, %v1044
      %v1046 = vand.u32 %v1045, 4294901760
      %1047 = vmatmul.mubr.f32.gmra.mrb[0].mxu0 %v1046
      %v1048 = vpop.f32.mrb[0].mxu0
      %v1049 = vadd.f32 %v274, %v1048
      %v1050 = vpop.f32.mrb[0].mxu0
      %1051 = vmatprep.mubr.f32.mxu0 0.0
      %v1052 = vand.u32 %v431, 4294901760
      %v1053 = vsub.f32 %v431, %v1052
      %v1054 = vand.u32 %v1053, 4294901760
      %v1055 = vsub.f32 %v1053, %v1054
      %v1056 = vand.u32 %v1055, 4294901760
      %1057 = vmatmul.mubr.f32.gmra.mrb[0].mxu0 %v1056
      %v1058 = vpop.f32.mrb[0].mxu0
      %v1059 = vadd.f32 %v274, %v1058
      %v1060 = vpop.f32.mrb[0].mxu0
      %1061 = vmatprep.mubr.f32.mxu0 0.0
      %v1062 = vand.u32 %v434, 4294901760
      %v1063 = vsub.f32 %v434, %v1062
      %v1064 = vand.u32 %v1063, 4294901760
      %v1065 = vsub.f32 %v1063, %v1064
      %v1066 = vand.u32 %v1065, 4294901760
      %1067 = vmatmul.mubr.f32.gmra.mrb[0].mxu0 %v1066
      %v1068 = vpop.f32.mrb[0].mxu0
      %v1069 = vadd.f32 %v274, %v1068
      %v1070 = vpop.f32.mrb[0].mxu0
      %1071 = vmatprep.mubr.f32.mxu0 0.0
      %v1072 = vand.u32 %v437, 4294901760
      %v1073 = vsub.f32 %v437, %v1072
      %v1074 = vand.u32 %v1073, 4294901760
      %v1075 = vsub.f32 %v1073, %v1074
      %v1076 = vand.u32 %v1075, 4294901760
      %1077 = vmatmul.mubr.f32.gmra.mrb[0].mxu0 %v1076
      %v1078 = vpop.f32.mrb[0].mxu0
      %v1079 = vadd.f32 %v274, %v1078
      %v1080 = vpop.f32.mrb[0].mxu0
      %1081 = vmatprep.mubr.f32.mxu0 0.0
      %v1082 = vand.u32 %v440, 4294901760
      %v1083 = vsub.f32 %v440, %v1082
      %v1084 = vand.u32 %v1083, 4294901760
      %v1085 = vsub.f32 %v1083, %v1084
      %v1086 = vand.u32 %v1085, 4294901760
      %1087 = vmatmul.mubr.f32.gmra.mrb[0].mxu0 %v1086
      %v1088 = vpop.f32.mrb[0].mxu0
      %v1089 = vadd.f32 %v274, %v1088
      %v1090 = vpop.f32.mrb[0].mxu0
      %1091 = vmatprep.mubr.f32.mxu0 0.0
      %v1092 = vand.u32 %v443, 4294901760
      %v1093 = vsub.f32 %v443, %v1092
      %v1094 = vand.u32 %v1093, 4294901760
      %v1095 = vsub.f32 %v1093, %v1094
      %v1096 = vand.u32 %v1095, 4294901760
      %1097 = vmatmul.mubr.f32.gmra.mrb[0].mxu0 %v1096
      %v1098 = vpop.f32.mrb[0].mxu0
      %v1099 = vadd.f32 %v274, %v1098
      %v1100 = vpop.f32.mrb[0].mxu0
      %1101 = vmatprep.mubr.f32.mxu0 0.0
      %v1102 = vand.u32 %v446, 4294901760
      %v1103 = vsub.f32 %v446, %v1102
      %v1104 = vand.u32 %v1103, 4294901760
      %v1105 = vsub.f32 %v1103, %v1104
      %v1106 = vand.u32 %v1105, 4294901760
      %1107 = vmatmul.mubr.f32.gmra.mrb[0].mxu0 %v1106
      %v1108 = vpop.f32.mrb[0].mxu0
      %v1109 = vadd.f32 %v274, %v1108
      %v1110 = vpop.f32.mrb[0].mxu0
      %1111 = vmatprep.mubr.f32.mxu0 0.0
      %v1112 = vand.u32 %v449, 4294901760
      %v1113 = vsub.f32 %v449, %v1112
      %v1114 = vand.u32 %v1113, 4294901760
      %v1115 = vsub.f32 %v1113, %v1114
      %v1116 = vand.u32 %v1115, 4294901760
      %1117 = vmatmul.mubr.f32.gmra.mrb[0].mxu0 %v1116
      %v1118 = vpop.f32.mrb[0].mxu0
      %v1119 = vadd.f32 %v274, %v1118
      %v1120 = vpop.f32.mrb[0].mxu0
      %1121 = vmatprep.mubr.f32.mxu0 0.0
      %v1122 = vand.u32 %v452, 4294901760
      %v1123 = vsub.f32 %v452, %v1122
      %v1124 = vand.u32 %v1123, 4294901760
      %v1125 = vsub.f32 %v1123, %v1124
      %v1126 = vand.u32 %v1125, 4294901760
      %1127 = vmatmul.mubr.f32.gmra.mrb[0].mxu0 %v1126
      %v1128 = vpop.f32.mrb[0].mxu0
      %v1129 = vadd.f32 %v274, %v1128
      %v1130 = vpop.f32.mrb[0].mxu0
      %1131 = vmatprep.mubr.f32.mxu0 0.0
      %v1132 = vand.u32 %v455, 4294901760
      %v1133 = vsub.f32 %v455, %v1132
      %v1134 = vand.u32 %v1133, 4294901760
      %v1135 = vsub.f32 %v1133, %v1134
      %v1136 = vand.u32 %v1135, 4294901760
      %1137 = vmatmul.mubr.f32.gmra.mrb[0].mxu0 %v1136
      %v1138 = vpop.f32.mrb[0].mxu0
      %v1139 = vadd.f32 %v274, %v1138
      %v1140 = vpop.f32.mrb[0].mxu0
      %1141 = vmatprep.mubr.f32.mxu0 0.0
      %v1142 = vand.u32 %v458, 4294901760
      %v1143 = vsub.f32 %v458, %v1142
      %v1144 = vand.u32 %v1143, 4294901760
      %v1145 = vsub.f32 %v1143, %v1144
      %v1146 = vand.u32 %v1145, 4294901760
      %1147 = vmatmul.mubr.f32.gmra.mrb[0].mxu0 %v1146
      %v1148 = vpop.f32.mrb[0].mxu0
      %v1149 = vadd.f32 %v274, %v1148
      %v1150 = vpop.f32.mrb[0].mxu0
      %1151 = vmatprep.mubr.f32.mxu0 0.0
      %v1152 = vand.u32 %v461, 4294901760
      %v1153 = vsub.f32 %v461, %v1152
      %v1154 = vand.u32 %v1153, 4294901760
      %v1155 = vsub.f32 %v1153, %v1154
      %v1156 = vand.u32 %v1155, 4294901760
      %1157 = vmatmul.mubr.f32.gmra.mrb[0].mxu0 %v1156
      %v1158 = vpop.f32.mrb[0].mxu0
      %v1159 = vadd.f32 %v274, %v1158
      %v1160 = vpop.f32.mrb[0].mxu0
      %1161 = vmatprep.mubr.f32.mxu0 0.0
      %v1162 = vand.u32 %v464, 4294901760
      %v1163 = vsub.f32 %v464, %v1162
      %v1164 = vand.u32 %v1163, 4294901760
      %v1165 = vsub.f32 %v1163, %v1164
      %v1166 = vand.u32 %v1165, 4294901760
      %1167 = vmatmul.mubr.f32.gmra.mrb[0].mxu0 %v1166
      %v1168 = vpop.f32.mrb[0].mxu0
      %v1169 = vadd.f32 %v274, %v1168
      %v1170 = vpop.f32.mrb[0].mxu0
      %1171 = vmatprep.mubr.f32.mxu0 0.0
      %v1172 = vand.u32 %v467, 4294901760
      %v1173 = vsub.f32 %v467, %v1172
      %v1174 = vand.u32 %v1173, 4294901760
      %v1175 = vsub.f32 %v1173, %v1174
      %v1176 = vand.u32 %v1175, 4294901760
      %1177 = vmatmul.mubr.f32.gmra.mrb[0].mxu0 %v1176
      %v1178 = vpop.f32.mrb[0].mxu0
      %v1179 = vadd.f32 %v274, %v1178
      %v1180 = vpop.f32.mrb[0].mxu0
      %1181 = vdwg.mxu0
      %1182 = vmatprep.subr.mxu0 0.0
      %v1183 = vand.u32 %v265, 4294901760
      %v1184 = vsub.f32 %v265, %v1183
      %v1185 = vand.u32 %v1184, 4294901760
      %v1186 = vsub.f32 %v1184, %v1185
      %v1187 = vand.u32 %v1186, 4294901760
      %1188 = vmatpush1.msra.mxu0 %v1187
      %1189 = vmatprep.subr.mxu0 0.0
      %v1190 = vand.u32 %v266, 4294901760
      %v1191 = vsub.f32 %v266, %v1190
      %v1192 = vand.u32 %v1191, 4294901760
      %v1193 = vsub.f32 %v1191, %v1192
      %v1194 = vand.u32 %v1193, 4294901760
      %1195 = vmatpush1.msra.mxu0 %v1194
      %1196 = vmatprep.subr.mxu0 0.0
      %v1197 = vand.u32 %v267, 4294901760
      %v1198 = vsub.f32 %v267, %v1197
      %v1199 = vand.u32 %v1198, 4294901760
      %v1200 = vsub.f32 %v1198, %v1199
      %v1201 = vand.u32 %v1200, 4294901760
      %1202 = vmatpush1.msra.mxu0 %v1201
      %1203 = vmatprep.subr.mxu0 0.0
      %v1204 = vand.u32 %v471, 4294901760
      %v1205 = vsub.f32 %v471, %v1204
      %v1206 = vand.u32 %v1205, 4294901760
      %v1207 = vsub.f32 %v1205, %v1206
      %v1208 = vand.u32 %v1207, 4294901760
      %1209 = vmatpush1.msra.mxu0 %v1208
      %1210 = vmatprep.subr.mxu0 0.0
      %1211 = vmatpush1.msra.mxu0 0.0
      %1212 = vmatprep.subr.mxu0 0.0
      %1213 = vmatpush1.msra.mxu0 0.0
      %1214 = vmatprep.subr.mxu0 0.0
      %1215 = vmatpush1.msra.mxu0 0.0
      %1216 = vmatprep.subr.mxu0 0.0
      %1217 = vmatpush1.msra.mxu0 0.0
      %1218 = vmatprep.subr.mxu0 0.0
      %1219 = vmatpush1.msra.mxu0 0.0
      %1220 = vmatprep.subr.mxu0 0.0
      %1221 = vmatpush1.msra.mxu0 0.0
      %1222 = vmatprep.subr.mxu0 0.0
      %1223 = vmatpush1.msra.mxu0 0.0
      %1224 = vmatprep.subr.mxu0 0.0
      %1225 = vmatpush1.msra.mxu0 0.0
      %1226 = vmatprep.subr.mxu0 0.0
      %1227 = vmatpush1.msra.mxu0 0.0
      %1228 = vmatprep.subr.mxu0 0.0
      %1229 = vmatpush1.msra.mxu0 0.0
      %1230 = vmatprep.subr.mxu0 0.0
      %1231 = vmatpush1.msra.mxu0 0.0
      %1232 = vmatprep.subr.mxu0 0.0
      %1233 = vmatpush1.msra.mxu0 0.0
      %1234 = vmatprep.subr.mxu0 0.0
      %1235 = vmatpush1.msra.mxu0 0.0
      %1236 = vmatprep.subr.mxu0 0.0
      %1237 = vmatpush1.msra.mxu0 0.0
      %1238 = vmatprep.subr.mxu0 0.0
      %1239 = vmatpush1.msra.mxu0 0.0
      %1240 = vmatprep.subr.mxu0 0.0
      %1241 = vmatpush1.msra.mxu0 0.0
      %1242 = vmatprep.subr.mxu0 0.0
      %1243 = vmatpush1.msra.mxu0 0.0
      %1244 = vmatprep.subr.mxu0 0.0
      %1245 = vmatpush1.msra.mxu0 0.0
      %1246 = vmatprep.subr.mxu0 0.0
      %1247 = vmatpush1.msra.mxu0 0.0
      %1248 = vmatprep.subr.mxu0 0.0
      %1249 = vmatpush1.msra.mxu0 0.0
      %1250 = vmatprep.subr.mxu0 0.0
      %1251 = vmatpush1.msra.mxu0 0.0
      %1252 = vmatprep.subr.mxu0 0.0
      %1253 = vmatpush1.msra.mxu0 0.0
      %1254 = vmatprep.subr.mxu0 0.0
      %1255 = vmatpush1.msra.mxu0 0.0
      %1256 = vmatprep.subr.mxu0 0.0
      %1257 = vmatpush1.msra.mxu0 0.0
      %1258 = vmatprep.subr.mxu0 0.0
      %1259 = vmatpush1.msra.mxu0 0.0
      %1260 = vmatprep.subr.mxu0 0.0
      %1261 = vmatpush1.msra.mxu0 0.0
      %1262 = vmatprep.subr.mxu0 0.0
      %1263 = vmatpush1.msra.mxu0 0.0
      %1264 = vmatprep.subr.mxu0 0.0
      %1265 = vmatpush1.msra.mxu0 0.0
      %1266 = vmatprep.mubr.f32.mxu0 0.0
      %v1267 = vand.u32 %v278, 4294901760
      %1268 = vmatmul.mubr.f32.gmra.mrb[0].mxu0 %v1267
      %v1269 = vpop.f32.mrb[0].mxu0
      %v1270 = vadd.f32 %v549, %v1269
      %v1271 = vpop.f32.mrb[0].mxu0
      %1272 = vmatprep.mubr.f32.mxu0 0.0
      %v1273 = vand.u32 %v281, 4294901760
      %1274 = vmatmul.mubr.f32.gmra.mrb[0].mxu0 %v1273
      %v1275 = vpop.f32.mrb[0].mxu0
      %v1276 = vadd.f32 %v559, %v1275
      %v1277 = vpop.f32.mrb[0].mxu0
      %1278 = vmatprep.mubr.f32.mxu0 0.0
      %v1279 = vand.u32 %v284, 4294901760
      %1280 = vmatmul.mubr.f32.gmra.mrb[0].mxu0 %v1279
      %v1281 = vpop.f32.mrb[0].mxu0
      %v1282 = vadd.f32 %v569, %v1281
      %v1283 = vpop.f32.mrb[0].mxu0
      %1284 = vmatprep.mubr.f32.mxu0 0.0
      %v1285 = vand.u32 %v287, 4294901760
      %1286 = vmatmul.mubr.f32.gmra.mrb[0].mxu0 %v1285
      %v1287 = vpop.f32.mrb[0].mxu0
      %v1288 = vadd.f32 %v579, %v1287
      %v1289 = vpop.f32.mrb[0].mxu0
      %1290 = vmatprep.mubr.f32.mxu0 0.0
      %v1291 = vand.u32 %v290, 4294901760
      %1292 = vmatmul.mubr.f32.gmra.mrb[0].mxu0 %v1291
      %v1293 = vpop.f32.mrb[0].mxu0
      %v1294 = vadd.f32 %v589, %v1293
      %v1295 = vpop.f32.mrb[0].mxu0
      %1296 = vmatprep.mubr.f32.mxu0 0.0
      %v1297 = vand.u32 %v293, 4294901760
      %1298 = vmatmul.mubr.f32.gmra.mrb[0].mxu0 %v1297
      %v1299 = vpop.f32.mrb[0].mxu0
      %v1300 = vadd.f32 %v599, %v1299
      %v1301 = vpop.f32.mrb[0].mxu0
      %1302 = vmatprep.mubr.f32.mxu0 0.0
      %v1303 = vand.u32 %v296, 4294901760
      %1304 = vmatmul.mubr.f32.gmra.mrb[0].mxu0 %v1303
      %v1305 = vpop.f32.mrb[0].mxu0
      %v1306 = vadd.f32 %v609, %v1305
      %v1307 = vpop.f32.mrb[0].mxu0
      %1308 = vmatprep.mubr.f32.mxu0 0.0
      %v1309 = vand.u32 %v299, 4294901760
      %1310 = vmatmul.mubr.f32.gmra.mrb[0].mxu0 %v1309
      %v1311 = vpop.f32.mrb[0].mxu0
      %v1312 = vadd.f32 %v619, %v1311
      %v1313 = vpop.f32.mrb[0].mxu0
      %1314 = vmatprep.mubr.f32.mxu0 0.0
      %v1315 = vand.u32 %v302, 4294901760
      %1316 = vmatmul.mubr.f32.gmra.mrb[0].mxu0 %v1315
      %v1317 = vpop.f32.mrb[0].mxu0
      %v1318 = vadd.f32 %v629, %v1317
      %v1319 = vpop.f32.mrb[0].mxu0
      %1320 = vmatprep.mubr.f32.mxu0 0.0
      %v1321 = vand.u32 %v305, 4294901760
      %1322 = vmatmul.mubr.f32.gmra.mrb[0].mxu0 %v1321
      %v1323 = vpop.f32.mrb[0].mxu0
      %v1324 = vadd.f32 %v639, %v1323
      %v1325 = vpop.f32.mrb[0].mxu0
      %1326 = vmatprep.mubr.f32.mxu0 0.0
      %v1327 = vand.u32 %v308, 4294901760
      %1328 = vmatmul.mubr.f32.gmra.mrb[0].mxu0 %v1327
      %v1329 = vpop.f32.mrb[0].mxu0
      %v1330 = vadd.f32 %v649, %v1329
      %v1331 = vpop.f32.mrb[0].mxu0
      %1332 = vmatprep.mubr.f32.mxu0 0.0
      %v1333 = vand.u32 %v311, 4294901760
      %1334 = vmatmul.mubr.f32.gmra.mrb[0].mxu0 %v1333
      %v1335 = vpop.f32.mrb[0].mxu0
      %v1336 = vadd.f32 %v659, %v1335
      %v1337 = vpop.f32.mrb[0].mxu0
      %1338 = vmatprep.mubr.f32.mxu0 0.0
      %v1339 = vand.u32 %v314, 4294901760
      %1340 = vmatmul.mubr.f32.gmra.mrb[0].mxu0 %v1339
      %v1341 = vpop.f32.mrb[0].mxu0
      %v1342 = vadd.f32 %v669, %v1341
      %v1343 = vpop.f32.mrb[0].mxu0
      %1344 = vmatprep.mubr.f32.mxu0 0.0
      %v1345 = vand.u32 %v317, 4294901760
      %1346 = vmatmul.mubr.f32.gmra.mrb[0].mxu0 %v1345
      %v1347 = vpop.f32.mrb[0].mxu0
      %v1348 = vadd.f32 %v679, %v1347
      %v1349 = vpop.f32.mrb[0].mxu0
      %1350 = vmatprep.mubr.f32.mxu0 0.0
      %v1351 = vand.u32 %v320, 4294901760
      %1352 = vmatmul.mubr.f32.gmra.mrb[0].mxu0 %v1351
      %v1353 = vpop.f32.mrb[0].mxu0
      %v1354 = vadd.f32 %v689, %v1353
      %v1355 = vpop.f32.mrb[0].mxu0
      %1356 = vmatprep.mubr.f32.mxu0 0.0
      %v1357 = vand.u32 %v323, 4294901760
      %1358 = vmatmul.mubr.f32.gmra.mrb[0].mxu0 %v1357
      %v1359 = vpop.f32.mrb[0].mxu0
      %v1360 = vadd.f32 %v699, %v1359
      %v1361 = vpop.f32.mrb[0].mxu0
      %1362 = vmatprep.mubr.f32.mxu0 0.0
      %v1363 = vand.u32 %v326, 4294901760
      %1364 = vmatmul.mubr.f32.gmra.mrb[0].mxu0 %v1363
      %v1365 = vpop.f32.mrb[0].mxu0
      %v1366 = vadd.f32 %v709, %v1365
      %v1367 = vpop.f32.mrb[0].mxu0
      %1368 = vmatprep.mubr.f32.mxu0 0.0
      %v1369 = vand.u32 %v329, 4294901760
      %1370 = vmatmul.mubr.f32.gmra.mrb[0].mxu0 %v1369
      %v1371 = vpop.f32.mrb[0].mxu0
      %v1372 = vadd.f32 %v719, %v1371
      %v1373 = vpop.f32.mrb[0].mxu0
      %1374 = vmatprep.mubr.f32.mxu0 0.0
      %v1375 = vand.u32 %v332, 4294901760
      %1376 = vmatmul.mubr.f32.gmra.mrb[0].mxu0 %v1375
      %v1377 = vpop.f32.mrb[0].mxu0
      %v1378 = vadd.f32 %v729, %v1377
      %v1379 = vpop.f32.mrb[0].mxu0
      %1380 = vmatprep.mubr.f32.mxu0 0.0
      %v1381 = vand.u32 %v335, 4294901760
      %1382 = vmatmul.mubr.f32.gmra.mrb[0].mxu0 %v1381
      %v1383 = vpop.f32.mrb[0].mxu0
      %v1384 = vadd.f32 %v739, %v1383
      %v1385 = vpop.f32.mrb[0].mxu0
      %1386 = vmatprep.mubr.f32.mxu0 0.0
      %v1387 = vand.u32 %v338, 4294901760
      %1388 = vmatmul.mubr.f32.gmra.mrb[0].mxu0 %v1387
      %v1389 = vpop.f32.mrb[0].mxu0
      %v1390 = vadd.f32 %v749, %v1389
      %v1391 = vpop.f32.mrb[0].mxu0
      %1392 = vmatprep.mubr.f32.mxu0 0.0
      %v1393 = vand.u32 %v341, 4294901760
      %1394 = vmatmul.mubr.f32.gmra.mrb[0].mxu0 %v1393
      %v1395 = vpop.f32.mrb[0].mxu0
      %v1396 = vadd.f32 %v759, %v1395
      %v1397 = vpop.f32.mrb[0].mxu0
      %1398 = vmatprep.mubr.f32.mxu0 0.0
      %v1399 = vand.u32 %v344, 4294901760
      %1400 = vmatmul.mubr.f32.gmra.mrb[0].mxu0 %v1399
      %v1401 = vpop.f32.mrb[0].mxu0
      %v1402 = vadd.f32 %v769, %v1401
      %v1403 = vpop.f32.mrb[0].mxu0
      %1404 = vmatprep.mubr.f32.mxu0 0.0
      %v1405 = vand.u32 %v347, 4294901760
      %1406 = vmatmul.mubr.f32.gmra.mrb[0].mxu0 %v1405
      %v1407 = vpop.f32.mrb[0].mxu0
      %v1408 = vadd.f32 %v779, %v1407
      %v1409 = vpop.f32.mrb[0].mxu0
      %1410 = vmatprep.mubr.f32.mxu0 0.0
      %v1411 = vand.u32 %v350, 4294901760
      %1412 = vmatmul.mubr.f32.gmra.mrb[0].mxu0 %v1411
      %v1413 = vpop.f32.mrb[0].mxu0
      %v1414 = vadd.f32 %v789, %v1413
      %v1415 = vpop.f32.mrb[0].mxu0
      %1416 = vmatprep.mubr.f32.mxu0 0.0
      %v1417 = vand.u32 %v353, 4294901760
      %1418 = vmatmul.mubr.f32.gmra.mrb[0].mxu0 %v1417
      %v1419 = vpop.f32.mrb[0].mxu0
      %v1420 = vadd.f32 %v799, %v1419
      %v1421 = vpop.f32.mrb[0].mxu0
      %1422 = vmatprep.mubr.f32.mxu0 0.0
      %v1423 = vand.u32 %v356, 4294901760
      %1424 = vmatmul.mubr.f32.gmra.mrb[0].mxu0 %v1423
      %v1425 = vpop.f32.mrb[0].mxu0
      %v1426 = vadd.f32 %v809, %v1425
      %v1427 = vpop.f32.mrb[0].mxu0
      %1428 = vmatprep.mubr.f32.mxu0 0.0
      %v1429 = vand.u32 %v359, 4294901760
      %1430 = vmatmul.mubr.f32.gmra.mrb[0].mxu0 %v1429
      %v1431 = vpop.f32.mrb[0].mxu0
      %v1432 = vadd.f32 %v819, %v1431
      %v1433 = vpop.f32.mrb[0].mxu0
      %1434 = vmatprep.mubr.f32.mxu0 0.0
      %v1435 = vand.u32 %v362, 4294901760
      %1436 = vmatmul.mubr.f32.gmra.mrb[0].mxu0 %v1435
      %v1437 = vpop.f32.mrb[0].mxu0
      %v1438 = vadd.f32 %v829, %v1437
      %v1439 = vpop.f32.mrb[0].mxu0
      %1440 = vmatprep.mubr.f32.mxu0 0.0
      %v1441 = vand.u32 %v365, 4294901760
      %1442 = vmatmul.mubr.f32.gmra.mrb[0].mxu0 %v1441
      %v1443 = vpop.f32.mrb[0].mxu0
      %v1444 = vadd.f32 %v839, %v1443
      %v1445 = vpop.f32.mrb[0].mxu0
      %1446 = vmatprep.mubr.f32.mxu0 0.0
      %v1447 = vand.u32 %v368, 4294901760
      %1448 = vmatmul.mubr.f32.gmra.mrb[0].mxu0 %v1447
      %v1449 = vpop.f32.mrb[0].mxu0
      %v1450 = vadd.f32 %v849, %v1449
      %v1451 = vpop.f32.mrb[0].mxu0
      %1452 = vmatprep.mubr.f32.mxu0 0.0
      %v1453 = vand.u32 %v371, 4294901760
      %1454 = vmatmul.mubr.f32.gmra.mrb[0].mxu0 %v1453
      %v1455 = vpop.f32.mrb[0].mxu0
      %v1456 = vadd.f32 %v859, %v1455
      %v1457 = vpop.f32.mrb[0].mxu0
      %1458 = vmatprep.mubr.f32.mxu0 0.0
      %v1459 = vand.u32 %v374, 4294901760
      %1460 = vmatmul.mubr.f32.gmra.mrb[0].mxu0 %v1459
      %v1461 = vpop.f32.mrb[0].mxu0
      %v1462 = vadd.f32 %v869, %v1461
      %v1463 = vpop.f32.mrb[0].mxu0
      %1464 = vmatprep.mubr.f32.mxu0 0.0
      %v1465 = vand.u32 %v377, 4294901760
      %1466 = vmatmul.mubr.f32.gmra.mrb[0].mxu0 %v1465
      %v1467 = vpop.f32.mrb[0].mxu0
      %v1468 = vadd.f32 %v879, %v1467
      %v1469 = vpop.f32.mrb[0].mxu0
      %1470 = vmatprep.mubr.f32.mxu0 0.0
      %v1471 = vand.u32 %v380, 4294901760
      %1472 = vmatmul.mubr.f32.gmra.mrb[0].mxu0 %v1471
      %v1473 = vpop.f32.mrb[0].mxu0
      %v1474 = vadd.f32 %v889, %v1473
      %v1475 = vpop.f32.mrb[0].mxu0
      %1476 = vmatprep.mubr.f32.mxu0 0.0
      %v1477 = vand.u32 %v383, 4294901760
      %1478 = vmatmul.mubr.f32.gmra.mrb[0].mxu0 %v1477
      %v1479 = vpop.f32.mrb[0].mxu0
      %v1480 = vadd.f32 %v899, %v1479
      %v1481 = vpop.f32.mrb[0].mxu0
      %1482 = vmatprep.mubr.f32.mxu0 0.0
      %v1483 = vand.u32 %v386, 4294901760
      %1484 = vmatmul.mubr.f32.gmra.mrb[0].mxu0 %v1483
      %v1485 = vpop.f32.mrb[0].mxu0
      %v1486 = vadd.f32 %v909, %v1485
      %v1487 = vpop.f32.mrb[0].mxu0
      %1488 = vmatprep.mubr.f32.mxu0 0.0
      %v1489 = vand.u32 %v389, 4294901760
      %1490 = vmatmul.mubr.f32.gmra.mrb[0].mxu0 %v1489
      %v1491 = vpop.f32.mrb[0].mxu0
      %v1492 = vadd.f32 %v919, %v1491
      %v1493 = vpop.f32.mrb[0].mxu0
      %1494 = vmatprep.mubr.f32.mxu0 0.0
      %v1495 = vand.u32 %v392, 4294901760
      %1496 = vmatmul.mubr.f32.gmra.mrb[0].mxu0 %v1495
      %v1497 = vpop.f32.mrb[0].mxu0
      %v1498 = vadd.f32 %v929, %v1497
      %v1499 = vpop.f32.mrb[0].mxu0
      %1500 = vmatprep.mubr.f32.mxu0 0.0
      %v1501 = vand.u32 %v395, 4294901760
      %1502 = vmatmul.mubr.f32.gmra.mrb[0].mxu0 %v1501
      %v1503 = vpop.f32.mrb[0].mxu0
      %v1504 = vadd.f32 %v939, %v1503
      %v1505 = vpop.f32.mrb[0].mxu0
      %1506 = vmatprep.mubr.f32.mxu0 0.0
      %v1507 = vand.u32 %v398, 4294901760
      %1508 = vmatmul.mubr.f32.gmra.mrb[0].mxu0 %v1507
      %v1509 = vpop.f32.mrb[0].mxu0
      %v1510 = vadd.f32 %v949, %v1509
      %v1511 = vpop.f32.mrb[0].mxu0
      %1512 = vmatprep.mubr.f32.mxu0 0.0
      %v1513 = vand.u32 %v401, 4294901760
      %1514 = vmatmul.mubr.f32.gmra.mrb[0].mxu0 %v1513
      %v1515 = vpop.f32.mrb[0].mxu0
      %v1516 = vadd.f32 %v959, %v1515
      %v1517 = vpop.f32.mrb[0].mxu0
      %1518 = vmatprep.mubr.f32.mxu0 0.0
      %v1519 = vand.u32 %v404, 4294901760
      %1520 = vmatmul.mubr.f32.gmra.mrb[0].mxu0 %v1519
      %v1521 = vpop.f32.mrb[0].mxu0
      %v1522 = vadd.f32 %v969, %v1521
      %v1523 = vpop.f32.mrb[0].mxu0
      %1524 = vmatprep.mubr.f32.mxu0 0.0
      %v1525 = vand.u32 %v407, 4294901760
      %1526 = vmatmul.mubr.f32.gmra.mrb[0].mxu0 %v1525
      %v1527 = vpop.f32.mrb[0].mxu0
      %v1528 = vadd.f32 %v979, %v1527
      %v1529 = vpop.f32.mrb[0].mxu0
      %1530 = vmatprep.mubr.f32.mxu0 0.0
      %v1531 = vand.u32 %v410, 4294901760
      %1532 = vmatmul.mubr.f32.gmra.mrb[0].mxu0 %v1531
      %v1533 = vpop.f32.mrb[0].mxu0
      %v1534 = vadd.f32 %v989, %v1533
      %v1535 = vpop.f32.mrb[0].mxu0
      %1536 = vmatprep.mubr.f32.mxu0 0.0
      %v1537 = vand.u32 %v413, 4294901760
      %1538 = vmatmul.mubr.f32.gmra.mrb[0].mxu0 %v1537
      %v1539 = vpop.f32.mrb[0].mxu0
      %v1540 = vadd.f32 %v999, %v1539
      %v1541 = vpop.f32.mrb[0].mxu0
      %1542 = vmatprep.mubr.f32.mxu0 0.0
      %v1543 = vand.u32 %v416, 4294901760
      %1544 = vmatmul.mubr.f32.gmra.mrb[0].mxu0 %v1543
      %v1545 = vpop.f32.mrb[0].mxu0
      %v1546 = vadd.f32 %v1009, %v1545
      %v1547 = vpop.f32.mrb[0].mxu0
      %1548 = vmatprep.mubr.f32.mxu0 0.0
      %v1549 = vand.u32 %v419, 4294901760
      %1550 = vmatmul.mubr.f32.gmra.mrb[0].mxu0 %v1549
      %v1551 = vpop.f32.mrb[0].mxu0
      %v1552 = vadd.f32 %v1019, %v1551
      %v1553 = vpop.f32.mrb[0].mxu0
      %1554 = vmatprep.mubr.f32.mxu0 0.0
      %v1555 = vand.u32 %v422, 4294901760
      %1556 = vmatmul.mubr.f32.gmra.mrb[0].mxu0 %v1555
      %v1557 = vpop.f32.mrb[0].mxu0
      %v1558 = vadd.f32 %v1029, %v1557
      %v1559 = vpop.f32.mrb[0].mxu0
      %1560 = vmatprep.mubr.f32.mxu0 0.0
      %v1561 = vand.u32 %v425, 4294901760
      %1562 = vmatmul.mubr.f32.gmra.mrb[0].mxu0 %v1561
      %v1563 = vpop.f32.mrb[0].mxu0
      %v1564 = vadd.f32 %v1039, %v1563
      %v1565 = vpop.f32.mrb[0].mxu0
      %1566 = vmatprep.mubr.f32.mxu0 0.0
      %v1567 = vand.u32 %v428, 4294901760
      %1568 = vmatmul.mubr.f32.gmra.mrb[0].mxu0 %v1567
      %v1569 = vpop.f32.mrb[0].mxu0
      %v1570 = vadd.f32 %v1049, %v1569
      %v1571 = vpop.f32.mrb[0].mxu0
      %1572 = vmatprep.mubr.f32.mxu0 0.0
      %v1573 = vand.u32 %v431, 4294901760
      %1574 = vmatmul.mubr.f32.gmra.mrb[0].mxu0 %v1573
      %v1575 = vpop.f32.mrb[0].mxu0
      %v1576 = vadd.f32 %v1059, %v1575
      %v1577 = vpop.f32.mrb[0].mxu0
      %1578 = vmatprep.mubr.f32.mxu0 0.0
      %v1579 = vand.u32 %v434, 4294901760
      %1580 = vmatmul.mubr.f32.gmra.mrb[0].mxu0 %v1579
      %v1581 = vpop.f32.mrb[0].mxu0
      %v1582 = vadd.f32 %v1069, %v1581
      %v1583 = vpop.f32.mrb[0].mxu0
      %1584 = vmatprep.mubr.f32.mxu0 0.0
      %v1585 = vand.u32 %v437, 4294901760
      %1586 = vmatmul.mubr.f32.gmra.mrb[0].mxu0 %v1585
      %v1587 = vpop.f32.mrb[0].mxu0
      %v1588 = vadd.f32 %v1079, %v1587
      %v1589 = vpop.f32.mrb[0].mxu0
      %1590 = vmatprep.mubr.f32.mxu0 0.0
      %v1591 = vand.u32 %v440, 4294901760
      %1592 = vmatmul.mubr.f32.gmra.mrb[0].mxu0 %v1591
      %v1593 = vpop.f32.mrb[0].mxu0
      %v1594 = vadd.f32 %v1089, %v1593
      %v1595 = vpop.f32.mrb[0].mxu0
      %1596 = vmatprep.mubr.f32.mxu0 0.0
      %v1597 = vand.u32 %v443, 4294901760
      %1598 = vmatmul.mubr.f32.gmra.mrb[0].mxu0 %v1597
      %v1599 = vpop.f32.mrb[0].mxu0
      %v1600 = vadd.f32 %v1099, %v1599
      %v1601 = vpop.f32.mrb[0].mxu0
      %1602 = vmatprep.mubr.f32.mxu0 0.0
      %v1603 = vand.u32 %v446, 4294901760
      %1604 = vmatmul.mubr.f32.gmra.mrb[0].mxu0 %v1603
      %v1605 = vpop.f32.mrb[0].mxu0
      %v1606 = vadd.f32 %v1109, %v1605
      %v1607 = vpop.f32.mrb[0].mxu0
      %1608 = vmatprep.mubr.f32.mxu0 0.0
      %v1609 = vand.u32 %v449, 4294901760
      %1610 = vmatmul.mubr.f32.gmra.mrb[0].mxu0 %v1609
      %v1611 = vpop.f32.mrb[0].mxu0
      %v1612 = vadd.f32 %v1119, %v1611
      %v1613 = vpop.f32.mrb[0].mxu0
      %1614 = vmatprep.mubr.f32.mxu0 0.0
      %v1615 = vand.u32 %v452, 4294901760
      %1616 = vmatmul.mubr.f32.gmra.mrb[0].mxu0 %v1615
      %v1617 = vpop.f32.mrb[0].mxu0
      %v1618 = vadd.f32 %v1129, %v1617
      %v1619 = vpop.f32.mrb[0].mxu0
      %1620 = vmatprep.mubr.f32.mxu0 0.0
      %v1621 = vand.u32 %v455, 4294901760
      %1622 = vmatmul.mubr.f32.gmra.mrb[0].mxu0 %v1621
      %v1623 = vpop.f32.mrb[0].mxu0
      %v1624 = vadd.f32 %v1139, %v1623
      %v1625 = vpop.f32.mrb[0].mxu0
      %1626 = vmatprep.mubr.f32.mxu0 0.0
      %v1627 = vand.u32 %v458, 4294901760
      %1628 = vmatmul.mubr.f32.gmra.mrb[0].mxu0 %v1627
      %v1629 = vpop.f32.mrb[0].mxu0
      %v1630 = vadd.f32 %v1149, %v1629
      %v1631 = vpop.f32.mrb[0].mxu0
      %1632 = vmatprep.mubr.f32.mxu0 0.0
      %v1633 = vand.u32 %v461, 4294901760
      %1634 = vmatmul.mubr.f32.gmra.mrb[0].mxu0 %v1633
      %v1635 = vpop.f32.mrb[0].mxu0
      %v1636 = vadd.f32 %v1159, %v1635
      %v1637 = vpop.f32.mrb[0].mxu0
      %1638 = vmatprep.mubr.f32.mxu0 0.0
      %v1639 = vand.u32 %v464, 4294901760
      %1640 = vmatmul.mubr.f32.gmra.mrb[0].mxu0 %v1639
      %v1641 = vpop.f32.mrb[0].mxu0
      %v1642 = vadd.f32 %v1169, %v1641
      %v1643 = vpop.f32.mrb[0].mxu0
      %1644 = vmatprep.mubr.f32.mxu0 0.0
      %v1645 = vand.u32 %v467, 4294901760
      %1646 = vmatmul.mubr.f32.gmra.mrb[0].mxu0 %v1645
      %v1647 = vpop.f32.mrb[0].mxu0
      %v1648 = vadd.f32 %v1179, %v1647
      %v1649 = vpop.f32.mrb[0].mxu0
      %1650 = vdwg.mxu0
      %1651 = vmatprep.subr.mxu0 0.0
      %v1652 = vand.u32 %v265, 4294901760
      %v1653 = vsub.f32 %v265, %v1652
      %1654 = vmatpush1.msra.mxu0 %v1653
      %1655 = vmatprep.subr.mxu0 0.0
      %v1656 = vand.u32 %v266, 4294901760
      %v1657 = vsub.f32 %v266, %v1656
      %1658 = vmatpush1.msra.mxu0 %v1657
      %1659 = vmatprep.subr.mxu0 0.0
      %v1660 = vand.u32 %v267, 4294901760
      %v1661 = vsub.f32 %v267, %v1660
      %1662 = vmatpush1.msra.mxu0 %v1661
      %1663 = vmatprep.subr.mxu0 0.0
      %v1664 = vand.u32 %v471, 4294901760
      %v1665 = vsub.f32 %v471, %v1664
      %1666 = vmatpush1.msra.mxu0 %v1665
      %1667 = vmatprep.subr.mxu0 0.0
      %1668 = vmatpush1.msra.mxu0 0.0
      %1669 = vmatprep.subr.mxu0 0.0
      %1670 = vmatpush1.msra.mxu0 0.0
      %1671 = vmatprep.subr.mxu0 0.0
      %1672 = vmatpush1.msra.mxu0 0.0
      %1673 = vmatprep.subr.mxu0 0.0
      %1674 = vmatpush1.msra.mxu0 0.0
      %1675 = vmatprep.subr.mxu0 0.0
      %1676 = vmatpush1.msra.mxu0 0.0
      %1677 = vmatprep.subr.mxu0 0.0
      %1678 = vmatpush1.msra.mxu0 0.0
      %1679 = vmatprep.subr.mxu0 0.0
      %1680 = vmatpush1.msra.mxu0 0.0
      %1681 = vmatprep.subr.mxu0 0.0
      %1682 = vmatpush1.msra.mxu0 0.0
      %1683 = vmatprep.subr.mxu0 0.0
      %1684 = vmatpush1.msra.mxu0 0.0
      %1685 = vmatprep.subr.mxu0 0.0
      %1686 = vmatpush1.msra.mxu0 0.0
      %1687 = vmatprep.subr.mxu0 0.0
      %1688 = vmatpush1.msra.mxu0 0.0
      %1689 = vmatprep.subr.mxu0 0.0
      %1690 = vmatpush1.msra.mxu0 0.0
      %1691 = vmatprep.subr.mxu0 0.0
      %1692 = vmatpush1.msra.mxu0 0.0
      %1693 = vmatprep.subr.mxu0 0.0
      %1694 = vmatpush1.msra.mxu0 0.0
      %1695 = vmatprep.subr.mxu0 0.0
      %1696 = vmatpush1.msra.mxu0 0.0
      %1697 = vmatprep.subr.mxu0 0.0
      %1698 = vmatpush1.msra.mxu0 0.0
      %1699 = vmatprep.subr.mxu0 0.0
      %1700 = vmatpush1.msra.mxu0 0.0
      %1701 = vmatprep.subr.mxu0 0.0
      %1702 = vmatpush1.msra.mxu0 0.0
      %1703 = vmatprep.subr.mxu0 0.0
      %1704 = vmatpush1.msra.mxu0 0.0
      %1705 = vmatprep.subr.mxu0 0.0
      %1706 = vmatpush1.msra.mxu0 0.0
      %1707 = vmatprep.subr.mxu0 0.0
      %1708 = vmatpush1.msra.mxu0 0.0
      %1709 = vmatprep.subr.mxu0 0.0
      %1710 = vmatpush1.msra.mxu0 0.0
      %1711 = vmatprep.subr.mxu0 0.0
      %1712 = vmatpush1.msra.mxu0 0.0
      %1713 = vmatprep.subr.mxu0 0.0
      %1714 = vmatpush1.msra.mxu0 0.0
      %1715 = vmatprep.subr.mxu0 0.0
      %1716 = vmatpush1.msra.mxu0 0.0
      %1717 = vmatprep.subr.mxu0 0.0
      %1718 = vmatpush1.msra.mxu0 0.0
      %1719 = vmatprep.subr.mxu0 0.0
      %1720 = vmatpush1.msra.mxu0 0.0
      %1721 = vmatprep.subr.mxu0 0.0
      %1722 = vmatpush1.msra.mxu0 0.0
      %1723 = vmatprep.mubr.f32.mxu0 0.0
      %v1724 = vand.u32 %v278, 4294901760
      %v1725 = vsub.f32 %v278, %v1724
      %1726 = vmatmul.mubr.f32.gmra.mrb[0].mxu0 %v1725
      %v1727 = vpop.f32.mrb[0].mxu0
      %v1728 = vadd.f32 %v1270, %v1727
      %v1729 = vpop.f32.mrb[0].mxu0
      %1730 = vmatprep.mubr.f32.mxu0 0.0
      %v1731 = vand.u32 %v281, 4294901760
      %v1732 = vsub.f32 %v281, %v1731
      %1733 = vmatmul.mubr.f32.gmra.mrb[0].mxu0 %v1732
      %v1734 = vpop.f32.mrb[0].mxu0
      %v1735 = vadd.f32 %v1276, %v1734
      %v1736 = vpop.f32.mrb[0].mxu0
      %1737 = vmatprep.mubr.f32.mxu0 0.0
      %v1738 = vand.u32 %v284, 4294901760
      %v1739 = vsub.f32 %v284, %v1738
      %1740 = vmatmul.mubr.f32.gmra.mrb[0].mxu0 %v1739
      %v1741 = vpop.f32.mrb[0].mxu0
      %v1742 = vadd.f32 %v1282, %v1741
      %v1743 = vpop.f32.mrb[0].mxu0
      %1744 = vmatprep.mubr.f32.mxu0 0.0
      %v1745 = vand.u32 %v287, 4294901760
      %v1746 = vsub.f32 %v287, %v1745
      %1747 = vmatmul.mubr.f32.gmra.mrb[0].mxu0 %v1746
      %v1748 = vpop.f32.mrb[0].mxu0
      %v1749 = vadd.f32 %v1288, %v1748
      %v1750 = vpop.f32.mrb[0].mxu0
      %1751 = vmatprep.mubr.f32.mxu0 0.0
      %v1752 = vand.u32 %v290, 4294901760
      %v1753 = vsub.f32 %v290, %v1752
      %1754 = vmatmul.mubr.f32.gmra.mrb[0].mxu0 %v1753
      %v1755 = vpop.f32.mrb[0].mxu0
      %v1756 = vadd.f32 %v1294, %v1755
      %v1757 = vpop.f32.mrb[0].mxu0
      %1758 = vmatprep.mubr.f32.mxu0 0.0
      %v1759 = vand.u32 %v293, 4294901760
      %v1760 = vsub.f32 %v293, %v1759
      %1761 = vmatmul.mubr.f32.gmra.mrb[0].mxu0 %v1760
      %v1762 = vpop.f32.mrb[0].mxu0
      %v1763 = vadd.f32 %v1300, %v1762
      %v1764 = vpop.f32.mrb[0].mxu0
      %1765 = vmatprep.mubr.f32.mxu0 0.0
      %v1766 = vand.u32 %v296, 4294901760
      %v1767 = vsub.f32 %v296, %v1766
      %1768 = vmatmul.mubr.f32.gmra.mrb[0].mxu0 %v1767
      %v1769 = vpop.f32.mrb[0].mxu0
      %v1770 = vadd.f32 %v1306, %v1769
      %v1771 = vpop.f32.mrb[0].mxu0
      %1772 = vmatprep.mubr.f32.mxu0 0.0
      %v1773 = vand.u32 %v299, 4294901760
      %v1774 = vsub.f32 %v299, %v1773
      %1775 = vmatmul.mubr.f32.gmra.mrb[0].mxu0 %v1774
      %v1776 = vpop.f32.mrb[0].mxu0
      %v1777 = vadd.f32 %v1312, %v1776
      %v1778 = vpop.f32.mrb[0].mxu0
      %1779 = vmatprep.mubr.f32.mxu0 0.0
      %v1780 = vand.u32 %v302, 4294901760
      %v1781 = vsub.f32 %v302, %v1780
      %1782 = vmatmul.mubr.f32.gmra.mrb[0].mxu0 %v1781
      %v1783 = vpop.f32.mrb[0].mxu0
      %v1784 = vadd.f32 %v1318, %v1783
      %v1785 = vpop.f32.mrb[0].mxu0
      %1786 = vmatprep.mubr.f32.mxu0 0.0
      %v1787 = vand.u32 %v305, 4294901760
      %v1788 = vsub.f32 %v305, %v1787
      %1789 = vmatmul.mubr.f32.gmra.mrb[0].mxu0 %v1788
      %v1790 = vpop.f32.mrb[0].mxu0
      %v1791 = vadd.f32 %v1324, %v1790
      %v1792 = vpop.f32.mrb[0].mxu0
      %1793 = vmatprep.mubr.f32.mxu0 0.0
      %v1794 = vand.u32 %v308, 4294901760
      %v1795 = vsub.f32 %v308, %v1794
      %1796 = vmatmul.mubr.f32.gmra.mrb[0].mxu0 %v1795
      %v1797 = vpop.f32.mrb[0].mxu0
      %v1798 = vadd.f32 %v1330, %v1797
      %v1799 = vpop.f32.mrb[0].mxu0
      %1800 = vmatprep.mubr.f32.mxu0 0.0
      %v1801 = vand.u32 %v311, 4294901760
      %v1802 = vsub.f32 %v311, %v1801
      %1803 = vmatmul.mubr.f32.gmra.mrb[0].mxu0 %v1802
      %v1804 = vpop.f32.mrb[0].mxu0
      %v1805 = vadd.f32 %v1336, %v1804
      %v1806 = vpop.f32.mrb[0].mxu0
      %1807 = vmatprep.mubr.f32.mxu0 0.0
      %v1808 = vand.u32 %v314, 4294901760
      %v1809 = vsub.f32 %v314, %v1808
      %1810 = vmatmul.mubr.f32.gmra.mrb[0].mxu0 %v1809
      %v1811 = vpop.f32.mrb[0].mxu0
      %v1812 = vadd.f32 %v1342, %v1811
      %v1813 = vpop.f32.mrb[0].mxu0
      %1814 = vmatprep.mubr.f32.mxu0 0.0
      %v1815 = vand.u32 %v317, 4294901760
      %v1816 = vsub.f32 %v317, %v1815
      %1817 = vmatmul.mubr.f32.gmra.mrb[0].mxu0 %v1816
      %v1818 = vpop.f32.mrb[0].mxu0
      %v1819 = vadd.f32 %v1348, %v1818
      %v1820 = vpop.f32.mrb[0].mxu0
      %1821 = vmatprep.mubr.f32.mxu0 0.0
      %v1822 = vand.u32 %v320, 4294901760
      %v1823 = vsub.f32 %v320, %v1822
      %1824 = vmatmul.mubr.f32.gmra.mrb[0].mxu0 %v1823
      %v1825 = vpop.f32.mrb[0].mxu0
      %v1826 = vadd.f32 %v1354, %v1825
      %v1827 = vpop.f32.mrb[0].mxu0
      %1828 = vmatprep.mubr.f32.mxu0 0.0
      %v1829 = vand.u32 %v323, 4294901760
      %v1830 = vsub.f32 %v323, %v1829
      %1831 = vmatmul.mubr.f32.gmra.mrb[0].mxu0 %v1830
      %v1832 = vpop.f32.mrb[0].mxu0
      %v1833 = vadd.f32 %v1360, %v1832
      %v1834 = vpop.f32.mrb[0].mxu0
      %1835 = vmatprep.mubr.f32.mxu0 0.0
      %v1836 = vand.u32 %v326, 4294901760
      %v1837 = vsub.f32 %v326, %v1836
      %1838 = vmatmul.mubr.f32.gmra.mrb[0].mxu0 %v1837
      %v1839 = vpop.f32.mrb[0].mxu0
      %v1840 = vadd.f32 %v1366, %v1839
      %v1841 = vpop.f32.mrb[0].mxu0
      %1842 = vmatprep.mubr.f32.mxu0 0.0
      %v1843 = vand.u32 %v329, 4294901760
      %v1844 = vsub.f32 %v329, %v1843
      %1845 = vmatmul.mubr.f32.gmra.mrb[0].mxu0 %v1844
      %v1846 = vpop.f32.mrb[0].mxu0
      %v1847 = vadd.f32 %v1372, %v1846
      %v1848 = vpop.f32.mrb[0].mxu0
      %1849 = vmatprep.mubr.f32.mxu0 0.0
      %v1850 = vand.u32 %v332, 4294901760
      %v1851 = vsub.f32 %v332, %v1850
      %1852 = vmatmul.mubr.f32.gmra.mrb[0].mxu0 %v1851
      %v1853 = vpop.f32.mrb[0].mxu0
      %v1854 = vadd.f32 %v1378, %v1853
      %v1855 = vpop.f32.mrb[0].mxu0
      %1856 = vmatprep.mubr.f32.mxu0 0.0
      %v1857 = vand.u32 %v335, 4294901760
      %v1858 = vsub.f32 %v335, %v1857
      %1859 = vmatmul.mubr.f32.gmra.mrb[0].mxu0 %v1858
      %v1860 = vpop.f32.mrb[0].mxu0
      %v1861 = vadd.f32 %v1384, %v1860
      %v1862 = vpop.f32.mrb[0].mxu0
      %1863 = vmatprep.mubr.f32.mxu0 0.0
      %v1864 = vand.u32 %v338, 4294901760
      %v1865 = vsub.f32 %v338, %v1864
      %1866 = vmatmul.mubr.f32.gmra.mrb[0].mxu0 %v1865
      %v1867 = vpop.f32.mrb[0].mxu0
      %v1868 = vadd.f32 %v1390, %v1867
      %v1869 = vpop.f32.mrb[0].mxu0
      %1870 = vmatprep.mubr.f32.mxu0 0.0
      %v1871 = vand.u32 %v341, 4294901760
      %v1872 = vsub.f32 %v341, %v1871
      %1873 = vmatmul.mubr.f32.gmra.mrb[0].mxu0 %v1872
      %v1874 = vpop.f32.mrb[0].mxu0
      %v1875 = vadd.f32 %v1396, %v1874
      %v1876 = vpop.f32.mrb[0].mxu0
      %1877 = vmatprep.mubr.f32.mxu0 0.0
      %v1878 = vand.u32 %v344, 4294901760
      %v1879 = vsub.f32 %v344, %v1878
      %1880 = vmatmul.mubr.f32.gmra.mrb[0].mxu0 %v1879
      %v1881 = vpop.f32.mrb[0].mxu0
      %v1882 = vadd.f32 %v1402, %v1881
      %v1883 = vpop.f32.mrb[0].mxu0
      %1884 = vmatprep.mubr.f32.mxu0 0.0
      %v1885 = vand.u32 %v347, 4294901760
      %v1886 = vsub.f32 %v347, %v1885
      %1887 = vmatmul.mubr.f32.gmra.mrb[0].mxu0 %v1886
      %v1888 = vpop.f32.mrb[0].mxu0
      %v1889 = vadd.f32 %v1408, %v1888
      %v1890 = vpop.f32.mrb[0].mxu0
      %1891 = vmatprep.mubr.f32.mxu0 0.0
      %v1892 = vand.u32 %v350, 4294901760
      %v1893 = vsub.f32 %v350, %v1892
      %1894 = vmatmul.mubr.f32.gmra.mrb[0].mxu0 %v1893
      %v1895 = vpop.f32.mrb[0].mxu0
      %v1896 = vadd.f32 %v1414, %v1895
      %v1897 = vpop.f32.mrb[0].mxu0
      %1898 = vmatprep.mubr.f32.mxu0 0.0
      %v1899 = vand.u32 %v353, 4294901760
      %v1900 = vsub.f32 %v353, %v1899
      %1901 = vmatmul.mubr.f32.gmra.mrb[0].mxu0 %v1900
      %v1902 = vpop.f32.mrb[0].mxu0
      %v1903 = vadd.f32 %v1420, %v1902
      %v1904 = vpop.f32.mrb[0].mxu0
      %1905 = vmatprep.mubr.f32.mxu0 0.0
      %v1906 = vand.u32 %v356, 4294901760
      %v1907 = vsub.f32 %v356, %v1906
      %1908 = vmatmul.mubr.f32.gmra.mrb[0].mxu0 %v1907
      %v1909 = vpop.f32.mrb[0].mxu0
      %v1910 = vadd.f32 %v1426, %v1909
      %v1911 = vpop.f32.mrb[0].mxu0
      %1912 = vmatprep.mubr.f32.mxu0 0.0
      %v1913 = vand.u32 %v359, 4294901760
      %v1914 = vsub.f32 %v359, %v1913
      %1915 = vmatmul.mubr.f32.gmra.mrb[0].mxu0 %v1914
      %v1916 = vpop.f32.mrb[0].mxu0
      %v1917 = vadd.f32 %v1432, %v1916
      %v1918 = vpop.f32.mrb[0].mxu0
      %1919 = vmatprep.mubr.f32.mxu0 0.0
      %v1920 = vand.u32 %v362, 4294901760
      %v1921 = vsub.f32 %v362, %v1920
      %1922 = vmatmul.mubr.f32.gmra.mrb[0].mxu0 %v1921
      %v1923 = vpop.f32.mrb[0].mxu0
      %v1924 = vadd.f32 %v1438, %v1923
      %v1925 = vpop.f32.mrb[0].mxu0
      %1926 = vmatprep.mubr.f32.mxu0 0.0
      %v1927 = vand.u32 %v365, 4294901760
      %v1928 = vsub.f32 %v365, %v1927
      %1929 = vmatmul.mubr.f32.gmra.mrb[0].mxu0 %v1928
      %v1930 = vpop.f32.mrb[0].mxu0
      %v1931 = vadd.f32 %v1444, %v1930
      %v1932 = vpop.f32.mrb[0].mxu0
      %1933 = vmatprep.mubr.f32.mxu0 0.0
      %v1934 = vand.u32 %v368, 4294901760
      %v1935 = vsub.f32 %v368, %v1934
      %1936 = vmatmul.mubr.f32.gmra.mrb[0].mxu0 %v1935
      %v1937 = vpop.f32.mrb[0].mxu0
      %v1938 = vadd.f32 %v1450, %v1937
      %v1939 = vpop.f32.mrb[0].mxu0
      %1940 = vmatprep.mubr.f32.mxu0 0.0
      %v1941 = vand.u32 %v371, 4294901760
      %v1942 = vsub.f32 %v371, %v1941
      %1943 = vmatmul.mubr.f32.gmra.mrb[0].mxu0 %v1942
      %v1944 = vpop.f32.mrb[0].mxu0
      %v1945 = vadd.f32 %v1456, %v1944
      %v1946 = vpop.f32.mrb[0].mxu0
      %1947 = vmatprep.mubr.f32.mxu0 0.0
      %v1948 = vand.u32 %v374, 4294901760
      %v1949 = vsub.f32 %v374, %v1948
      %1950 = vmatmul.mubr.f32.gmra.mrb[0].mxu0 %v1949
      %v1951 = vpop.f32.mrb[0].mxu0
      %v1952 = vadd.f32 %v1462, %v1951
      %v1953 = vpop.f32.mrb[0].mxu0
      %1954 = vmatprep.mubr.f32.mxu0 0.0
      %v1955 = vand.u32 %v377, 4294901760
      %v1956 = vsub.f32 %v377, %v1955
      %1957 = vmatmul.mubr.f32.gmra.mrb[0].mxu0 %v1956
      %v1958 = vpop.f32.mrb[0].mxu0
      %v1959 = vadd.f32 %v1468, %v1958
      %v1960 = vpop.f32.mrb[0].mxu0
      %1961 = vmatprep.mubr.f32.mxu0 0.0
      %v1962 = vand.u32 %v380, 4294901760
      %v1963 = vsub.f32 %v380, %v1962
      %1964 = vmatmul.mubr.f32.gmra.mrb[0].mxu0 %v1963
      %v1965 = vpop.f32.mrb[0].mxu0
      %v1966 = vadd.f32 %v1474, %v1965
      %v1967 = vpop.f32.mrb[0].mxu0
      %1968 = vmatprep.mubr.f32.mxu0 0.0
      %v1969 = vand.u32 %v383, 4294901760
      %v1970 = vsub.f32 %v383, %v1969
      %1971 = vmatmul.mubr.f32.gmra.mrb[0].mxu0 %v1970
      %v1972 = vpop.f32.mrb[0].mxu0
      %v1973 = vadd.f32 %v1480, %v1972
      %v1974 = vpop.f32.mrb[0].mxu0
      %1975 = vmatprep.mubr.f32.mxu0 0.0
      %v1976 = vand.u32 %v386, 4294901760
      %v1977 = vsub.f32 %v386, %v1976
      %1978 = vmatmul.mubr.f32.gmra.mrb[0].mxu0 %v1977
      %v1979 = vpop.f32.mrb[0].mxu0
      %v1980 = vadd.f32 %v1486, %v1979
      %v1981 = vpop.f32.mrb[0].mxu0
      %1982 = vmatprep.mubr.f32.mxu0 0.0
      %v1983 = vand.u32 %v389, 4294901760
      %v1984 = vsub.f32 %v389, %v1983
      %1985 = vmatmul.mubr.f32.gmra.mrb[0].mxu0 %v1984
      %v1986 = vpop.f32.mrb[0].mxu0
      %v1987 = vadd.f32 %v1492, %v1986
      %v1988 = vpop.f32.mrb[0].mxu0
      %1989 = vmatprep.mubr.f32.mxu0 0.0
      %v1990 = vand.u32 %v392, 4294901760
      %v1991 = vsub.f32 %v392, %v1990
      %1992 = vmatmul.mubr.f32.gmra.mrb[0].mxu0 %v1991
      %v1993 = vpop.f32.mrb[0].mxu0
      %v1994 = vadd.f32 %v1498, %v1993
      %v1995 = vpop.f32.mrb[0].mxu0
      %1996 = vmatprep.mubr.f32.mxu0 0.0
      %v1997 = vand.u32 %v395, 4294901760
      %v1998 = vsub.f32 %v395, %v1997
      %1999 = vmatmul.mubr.f32.gmra.mrb[0].mxu0 %v1998
      %v2000 = vpop.f32.mrb[0].mxu0
      %v2001 = vadd.f32 %v1504, %v2000
      %v2002 = vpop.f32.mrb[0].mxu0
      %2003 = vmatprep.mubr.f32.mxu0 0.0
      %v2004 = vand.u32 %v398, 4294901760
      %v2005 = vsub.f32 %v398, %v2004
      %2006 = vmatmul.mubr.f32.gmra.mrb[0].mxu0 %v2005
      %v2007 = vpop.f32.mrb[0].mxu0
      %v2008 = vadd.f32 %v1510, %v2007
      %v2009 = vpop.f32.mrb[0].mxu0
      %2010 = vmatprep.mubr.f32.mxu0 0.0
      %v2011 = vand.u32 %v401, 4294901760
      %v2012 = vsub.f32 %v401, %v2011
      %2013 = vmatmul.mubr.f32.gmra.mrb[0].mxu0 %v2012
      %v2014 = vpop.f32.mrb[0].mxu0
      %v2015 = vadd.f32 %v1516, %v2014
      %v2016 = vpop.f32.mrb[0].mxu0
      %2017 = vmatprep.mubr.f32.mxu0 0.0
      %v2018 = vand.u32 %v404, 4294901760
      %v2019 = vsub.f32 %v404, %v2018
      %2020 = vmatmul.mubr.f32.gmra.mrb[0].mxu0 %v2019
      %v2021 = vpop.f32.mrb[0].mxu0
      %v2022 = vadd.f32 %v1522, %v2021
      %v2023 = vpop.f32.mrb[0].mxu0
      %2024 = vmatprep.mubr.f32.mxu0 0.0
      %v2025 = vand.u32 %v407, 4294901760
      %v2026 = vsub.f32 %v407, %v2025
      %2027 = vmatmul.mubr.f32.gmra.mrb[0].mxu0 %v2026
      %v2028 = vpop.f32.mrb[0].mxu0
      %v2029 = vadd.f32 %v1528, %v2028
      %v2030 = vpop.f32.mrb[0].mxu0
      %2031 = vmatprep.mubr.f32.mxu0 0.0
      %v2032 = vand.u32 %v410, 4294901760
      %v2033 = vsub.f32 %v410, %v2032
      %2034 = vmatmul.mubr.f32.gmra.mrb[0].mxu0 %v2033
      %v2035 = vpop.f32.mrb[0].mxu0
      %v2036 = vadd.f32 %v1534, %v2035
      %v2037 = vpop.f32.mrb[0].mxu0
      %2038 = vmatprep.mubr.f32.mxu0 0.0
      %v2039 = vand.u32 %v413, 4294901760
      %v2040 = vsub.f32 %v413, %v2039
      %2041 = vmatmul.mubr.f32.gmra.mrb[0].mxu0 %v2040
      %v2042 = vpop.f32.mrb[0].mxu0
      %v2043 = vadd.f32 %v1540, %v2042
      %v2044 = vpop.f32.mrb[0].mxu0
      %2045 = vmatprep.mubr.f32.mxu0 0.0
      %v2046 = vand.u32 %v416, 4294901760
      %v2047 = vsub.f32 %v416, %v2046
      %2048 = vmatmul.mubr.f32.gmra.mrb[0].mxu0 %v2047
      %v2049 = vpop.f32.mrb[0].mxu0
      %v2050 = vadd.f32 %v1546, %v2049
      %v2051 = vpop.f32.mrb[0].mxu0
      %2052 = vmatprep.mubr.f32.mxu0 0.0
      %v2053 = vand.u32 %v419, 4294901760
      %v2054 = vsub.f32 %v419, %v2053
      %2055 = vmatmul.mubr.f32.gmra.mrb[0].mxu0 %v2054
      %v2056 = vpop.f32.mrb[0].mxu0
      %v2057 = vadd.f32 %v1552, %v2056
      %v2058 = vpop.f32.mrb[0].mxu0
      %2059 = vmatprep.mubr.f32.mxu0 0.0
      %v2060 = vand.u32 %v422, 4294901760
      %v2061 = vsub.f32 %v422, %v2060
      %2062 = vmatmul.mubr.f32.gmra.mrb[0].mxu0 %v2061
      %v2063 = vpop.f32.mrb[0].mxu0
      %v2064 = vadd.f32 %v1558, %v2063
      %v2065 = vpop.f32.mrb[0].mxu0
      %2066 = vmatprep.mubr.f32.mxu0 0.0
      %v2067 = vand.u32 %v425, 4294901760
      %v2068 = vsub.f32 %v425, %v2067
      %2069 = vmatmul.mubr.f32.gmra.mrb[0].mxu0 %v2068
      %v2070 = vpop.f32.mrb[0].mxu0
      %v2071 = vadd.f32 %v1564, %v2070
      %v2072 = vpop.f32.mrb[0].mxu0
      %2073 = vmatprep.mubr.f32.mxu0 0.0
      %v2074 = vand.u32 %v428, 4294901760
      %v2075 = vsub.f32 %v428, %v2074
      %2076 = vmatmul.mubr.f32.gmra.mrb[0].mxu0 %v2075
      %v2077 = vpop.f32.mrb[0].mxu0
      %v2078 = vadd.f32 %v1570, %v2077
      %v2079 = vpop.f32.mrb[0].mxu0
      %2080 = vmatprep.mubr.f32.mxu0 0.0
      %v2081 = vand.u32 %v431, 4294901760
      %v2082 = vsub.f32 %v431, %v2081
      %2083 = vmatmul.mubr.f32.gmra.mrb[0].mxu0 %v2082
      %v2084 = vpop.f32.mrb[0].mxu0
      %v2085 = vadd.f32 %v1576, %v2084
      %v2086 = vpop.f32.mrb[0].mxu0
      %2087 = vmatprep.mubr.f32.mxu0 0.0
      %v2088 = vand.u32 %v434, 4294901760
      %v2089 = vsub.f32 %v434, %v2088
      %2090 = vmatmul.mubr.f32.gmra.mrb[0].mxu0 %v2089
      %v2091 = vpop.f32.mrb[0].mxu0
      %v2092 = vadd.f32 %v1582, %v2091
      %v2093 = vpop.f32.mrb[0].mxu0
      %2094 = vmatprep.mubr.f32.mxu0 0.0
      %v2095 = vand.u32 %v437, 4294901760
      %v2096 = vsub.f32 %v437, %v2095
      %2097 = vmatmul.mubr.f32.gmra.mrb[0].mxu0 %v2096
      %v2098 = vpop.f32.mrb[0].mxu0
      %v2099 = vadd.f32 %v1588, %v2098
      %v2100 = vpop.f32.mrb[0].mxu0
      %2101 = vmatprep.mubr.f32.mxu0 0.0
      %v2102 = vand.u32 %v440, 4294901760
      %v2103 = vsub.f32 %v440, %v2102
      %2104 = vmatmul.mubr.f32.gmra.mrb[0].mxu0 %v2103
      %v2105 = vpop.f32.mrb[0].mxu0
      %v2106 = vadd.f32 %v1594, %v2105
      %v2107 = vpop.f32.mrb[0].mxu0
      %2108 = vmatprep.mubr.f32.mxu0 0.0
      %v2109 = vand.u32 %v443, 4294901760
      %v2110 = vsub.f32 %v443, %v2109
      %2111 = vmatmul.mubr.f32.gmra.mrb[0].mxu0 %v2110
      %v2112 = vpop.f32.mrb[0].mxu0
      %v2113 = vadd.f32 %v1600, %v2112
      %v2114 = vpop.f32.mrb[0].mxu0
      %2115 = vmatprep.mubr.f32.mxu0 0.0
      %v2116 = vand.u32 %v446, 4294901760
      %v2117 = vsub.f32 %v446, %v2116
      %2118 = vmatmul.mubr.f32.gmra.mrb[0].mxu0 %v2117
      %v2119 = vpop.f32.mrb[0].mxu0
      %v2120 = vadd.f32 %v1606, %v2119
      %v2121 = vpop.f32.mrb[0].mxu0
      %2122 = vmatprep.mubr.f32.mxu0 0.0
      %v2123 = vand.u32 %v449, 4294901760
      %v2124 = vsub.f32 %v449, %v2123
      %2125 = vmatmul.mubr.f32.gmra.mrb[0].mxu0 %v2124
      %v2126 = vpop.f32.mrb[0].mxu0
      %v2127 = vadd.f32 %v1612, %v2126
      %v2128 = vpop.f32.mrb[0].mxu0
      %2129 = vmatprep.mubr.f32.mxu0 0.0
      %v2130 = vand.u32 %v452, 4294901760
      %v2131 = vsub.f32 %v452, %v2130
      %2132 = vmatmul.mubr.f32.gmra.mrb[0].mxu0 %v2131
      %v2133 = vpop.f32.mrb[0].mxu0
      %v2134 = vadd.f32 %v1618, %v2133
      %v2135 = vpop.f32.mrb[0].mxu0
      %2136 = vmatprep.mubr.f32.mxu0 0.0
      %v2137 = vand.u32 %v455, 4294901760
      %v2138 = vsub.f32 %v455, %v2137
      %2139 = vmatmul.mubr.f32.gmra.mrb[0].mxu0 %v2138
      %v2140 = vpop.f32.mrb[0].mxu0
      %v2141 = vadd.f32 %v1624, %v2140
      %v2142 = vpop.f32.mrb[0].mxu0
      %2143 = vmatprep.mubr.f32.mxu0 0.0
      %v2144 = vand.u32 %v458, 4294901760
      %v2145 = vsub.f32 %v458, %v2144
      %2146 = vmatmul.mubr.f32.gmra.mrb[0].mxu0 %v2145
      %v2147 = vpop.f32.mrb[0].mxu0
      %v2148 = vadd.f32 %v1630, %v2147
      %v2149 = vpop.f32.mrb[0].mxu0
      %2150 = vmatprep.mubr.f32.mxu0 0.0
      %v2151 = vand.u32 %v461, 4294901760
      %v2152 = vsub.f32 %v461, %v2151
      %2153 = vmatmul.mubr.f32.gmra.mrb[0].mxu0 %v2152
      %v2154 = vpop.f32.mrb[0].mxu0
      %v2155 = vadd.f32 %v1636, %v2154
      %v2156 = vpop.f32.mrb[0].mxu0
      %2157 = vmatprep.mubr.f32.mxu0 0.0
      %v2158 = vand.u32 %v464, 4294901760
      %v2159 = vsub.f32 %v464, %v2158
      %2160 = vmatmul.mubr.f32.gmra.mrb[0].mxu0 %v2159
      %v2161 = vpop.f32.mrb[0].mxu0
      %v2162 = vadd.f32 %v1642, %v2161
      %v2163 = vpop.f32.mrb[0].mxu0
      %2164 = vmatprep.mubr.f32.mxu0 0.0
      %v2165 = vand.u32 %v467, 4294901760
      %v2166 = vsub.f32 %v467, %v2165
      %2167 = vmatmul.mubr.f32.gmra.mrb[0].mxu0 %v2166
      %v2168 = vpop.f32.mrb[0].mxu0
      %v2169 = vadd.f32 %v1648, %v2168
      %v2170 = vpop.f32.mrb[0].mxu0
      %2171 = vdwg.mxu0
      %2172 = vmatprep.subr.mxu0 0.0
      %v2173 = vand.u32 %v265, 4294901760
      %2174 = vmatpush1.msra.mxu0 %v2173
      %2175 = vmatprep.subr.mxu0 0.0
      %v2176 = vand.u32 %v266, 4294901760
      %2177 = vmatpush1.msra.mxu0 %v2176
      %2178 = vmatprep.subr.mxu0 0.0
      %v2179 = vand.u32 %v267, 4294901760
      %2180 = vmatpush1.msra.mxu0 %v2179
      %2181 = vmatprep.subr.mxu0 0.0
      %v2182 = vand.u32 %v471, 4294901760
      %2183 = vmatpush1.msra.mxu0 %v2182
      %2184 = vmatprep.subr.mxu0 0.0
      %2185 = vmatpush1.msra.mxu0 0.0
      %2186 = vmatprep.subr.mxu0 0.0
      %2187 = vmatpush1.msra.mxu0 0.0
      %2188 = vmatprep.subr.mxu0 0.0
      %2189 = vmatpush1.msra.mxu0 0.0
      %2190 = vmatprep.subr.mxu0 0.0
      %2191 = vmatpush1.msra.mxu0 0.0
      %2192 = vmatprep.subr.mxu0 0.0
      %2193 = vmatpush1.msra.mxu0 0.0
      %2194 = vmatprep.subr.mxu0 0.0
      %2195 = vmatpush1.msra.mxu0 0.0
      %2196 = vmatprep.subr.mxu0 0.0
      %2197 = vmatpush1.msra.mxu0 0.0
      %2198 = vmatprep.subr.mxu0 0.0
      %2199 = vmatpush1.msra.mxu0 0.0
      %2200 = vmatprep.subr.mxu0 0.0
      %2201 = vmatpush1.msra.mxu0 0.0
      %2202 = vmatprep.subr.mxu0 0.0
      %2203 = vmatpush1.msra.mxu0 0.0
      %2204 = vmatprep.subr.mxu0 0.0
      %2205 = vmatpush1.msra.mxu0 0.0
      %2206 = vmatprep.subr.mxu0 0.0
      %2207 = vmatpush1.msra.mxu0 0.0
      %2208 = vmatprep.subr.mxu0 0.0
      %2209 = vmatpush1.msra.mxu0 0.0
      %2210 = vmatprep.subr.mxu0 0.0
      %2211 = vmatpush1.msra.mxu0 0.0
      %2212 = vmatprep.subr.mxu0 0.0
      %2213 = vmatpush1.msra.mxu0 0.0
      %2214 = vmatprep.subr.mxu0 0.0
      %2215 = vmatpush1.msra.mxu0 0.0
      %2216 = vmatprep.subr.mxu0 0.0
      %2217 = vmatpush1.msra.mxu0 0.0
      %2218 = vmatprep.subr.mxu0 0.0
      %2219 = vmatpush1.msra.mxu0 0.0
      %2220 = vmatprep.subr.mxu0 0.0
      %2221 = vmatpush1.msra.mxu0 0.0
      %2222 = vmatprep.subr.mxu0 0.0
      %2223 = vmatpush1.msra.mxu0 0.0
      %2224 = vmatprep.subr.mxu0 0.0
      %2225 = vmatpush1.msra.mxu0 0.0
      %2226 = vmatprep.subr.mxu0 0.0
      %2227 = vmatpush1.msra.mxu0 0.0
      %2228 = vmatprep.subr.mxu0 0.0
      %2229 = vmatpush1.msra.mxu0 0.0
      %2230 = vmatprep.subr.mxu0 0.0
      %2231 = vmatpush1.msra.mxu0 0.0
      %2232 = vmatprep.subr.mxu0 0.0
      %2233 = vmatpush1.msra.mxu0 0.0
      %2234 = vmatprep.subr.mxu0 0.0
      %2235 = vmatpush1.msra.mxu0 0.0
      %2236 = vmatprep.subr.mxu0 0.0
      %2237 = vmatpush1.msra.mxu0 0.0
      %2238 = vmatprep.subr.mxu0 0.0
      %2239 = vmatpush1.msra.mxu0 0.0
      %2240 = vmatprep.mubr.f32.mxu0 0.0
      %v2241 = vand.u32 %v278, 4294901760
      %v2242 = vsub.f32 %v278, %v2241
      %v2243 = vand.u32 %v2242, 4294901760
      %2244 = vmatmul.mubr.f32.gmra.mrb[0].mxu0 %v2243
      %v2245 = vpop.f32.mrb[0].mxu0
      %v2246 = vadd.f32 %v1728, %v2245
      %v2247 = vpop.f32.mrb[0].mxu0
      %2248 = vmatprep.mubr.f32.mxu0 0.0
      %v2249 = vand.u32 %v281, 4294901760
      %v2250 = vsub.f32 %v281, %v2249
      %v2251 = vand.u32 %v2250, 4294901760
      %2252 = vmatmul.mubr.f32.gmra.mrb[0].mxu0 %v2251
      %v2253 = vpop.f32.mrb[0].mxu0
      %v2254 = vadd.f32 %v1735, %v2253
      %v2255 = vpop.f32.mrb[0].mxu0
      %2256 = vmatprep.mubr.f32.mxu0 0.0
      %v2257 = vand.u32 %v284, 4294901760
      %v2258 = vsub.f32 %v284, %v2257
      %v2259 = vand.u32 %v2258, 4294901760
      %2260 = vmatmul.mubr.f32.gmra.mrb[0].mxu0 %v2259
      %v2261 = vpop.f32.mrb[0].mxu0
      %v2262 = vadd.f32 %v1742, %v2261
      %v2263 = vpop.f32.mrb[0].mxu0
      %2264 = vmatprep.mubr.f32.mxu0 0.0
      %v2265 = vand.u32 %v287, 4294901760
      %v2266 = vsub.f32 %v287, %v2265
      %v2267 = vand.u32 %v2266, 4294901760
      %2268 = vmatmul.mubr.f32.gmra.mrb[0].mxu0 %v2267
      %v2269 = vpop.f32.mrb[0].mxu0
      %v2270 = vadd.f32 %v1749, %v2269
      %v2271 = vpop.f32.mrb[0].mxu0
      %2272 = vmatprep.mubr.f32.mxu0 0.0
      %v2273 = vand.u32 %v290, 4294901760
      %v2274 = vsub.f32 %v290, %v2273
      %v2275 = vand.u32 %v2274, 4294901760
      %2276 = vmatmul.mubr.f32.gmra.mrb[0].mxu0 %v2275
      %v2277 = vpop.f32.mrb[0].mxu0
      %v2278 = vadd.f32 %v1756, %v2277
      %v2279 = vpop.f32.mrb[0].mxu0
      %2280 = vmatprep.mubr.f32.mxu0 0.0
      %v2281 = vand.u32 %v293, 4294901760
      %v2282 = vsub.f32 %v293, %v2281
      %v2283 = vand.u32 %v2282, 4294901760
      %2284 = vmatmul.mubr.f32.gmra.mrb[0].mxu0 %v2283
      %v2285 = vpop.f32.mrb[0].mxu0
      %v2286 = vadd.f32 %v1763, %v2285
      %v2287 = vpop.f32.mrb[0].mxu0
      %2288 = vmatprep.mubr.f32.mxu0 0.0
      %v2289 = vand.u32 %v296, 4294901760
      %v2290 = vsub.f32 %v296, %v2289
      %v2291 = vand.u32 %v2290, 4294901760
      %2292 = vmatmul.mubr.f32.gmra.mrb[0].mxu0 %v2291
      %v2293 = vpop.f32.mrb[0].mxu0
      %v2294 = vadd.f32 %v1770, %v2293
      %v2295 = vpop.f32.mrb[0].mxu0
      %2296 = vmatprep.mubr.f32.mxu0 0.0
      %v2297 = vand.u32 %v299, 4294901760
      %v2298 = vsub.f32 %v299, %v2297
      %v2299 = vand.u32 %v2298, 4294901760
      %2300 = vmatmul.mubr.f32.gmra.mrb[0].mxu0 %v2299
      %v2301 = vpop.f32.mrb[0].mxu0
      %v2302 = vadd.f32 %v1777, %v2301
      %v2303 = vpop.f32.mrb[0].mxu0
      %2304 = vmatprep.mubr.f32.mxu0 0.0
      %v2305 = vand.u32 %v302, 4294901760
      %v2306 = vsub.f32 %v302, %v2305
      %v2307 = vand.u32 %v2306, 4294901760
      %2308 = vmatmul.mubr.f32.gmra.mrb[0].mxu0 %v2307
      %v2309 = vpop.f32.mrb[0].mxu0
      %v2310 = vadd.f32 %v1784, %v2309
      %v2311 = vpop.f32.mrb[0].mxu0
      %2312 = vmatprep.mubr.f32.mxu0 0.0
      %v2313 = vand.u32 %v305, 4294901760
      %v2314 = vsub.f32 %v305, %v2313
      %v2315 = vand.u32 %v2314, 4294901760
      %2316 = vmatmul.mubr.f32.gmra.mrb[0].mxu0 %v2315
      %v2317 = vpop.f32.mrb[0].mxu0
      %v2318 = vadd.f32 %v1791, %v2317
      %v2319 = vpop.f32.mrb[0].mxu0
      %2320 = vmatprep.mubr.f32.mxu0 0.0
      %v2321 = vand.u32 %v308, 4294901760
      %v2322 = vsub.f32 %v308, %v2321
      %v2323 = vand.u32 %v2322, 4294901760
      %2324 = vmatmul.mubr.f32.gmra.mrb[0].mxu0 %v2323
      %v2325 = vpop.f32.mrb[0].mxu0
      %v2326 = vadd.f32 %v1798, %v2325
      %v2327 = vpop.f32.mrb[0].mxu0
      %2328 = vmatprep.mubr.f32.mxu0 0.0
      %v2329 = vand.u32 %v311, 4294901760
      %v2330 = vsub.f32 %v311, %v2329
      %v2331 = vand.u32 %v2330, 4294901760
      %2332 = vmatmul.mubr.f32.gmra.mrb[0].mxu0 %v2331
      %v2333 = vpop.f32.mrb[0].mxu0
      %v2334 = vadd.f32 %v1805, %v2333
      %v2335 = vpop.f32.mrb[0].mxu0
      %2336 = vmatprep.mubr.f32.mxu0 0.0
      %v2337 = vand.u32 %v314, 4294901760
      %v2338 = vsub.f32 %v314, %v2337
      %v2339 = vand.u32 %v2338, 4294901760
      %2340 = vmatmul.mubr.f32.gmra.mrb[0].mxu0 %v2339
      %v2341 = vpop.f32.mrb[0].mxu0
      %v2342 = vadd.f32 %v1812, %v2341
      %v2343 = vpop.f32.mrb[0].mxu0
      %2344 = vmatprep.mubr.f32.mxu0 0.0
      %v2345 = vand.u32 %v317, 4294901760
      %v2346 = vsub.f32 %v317, %v2345
      %v2347 = vand.u32 %v2346, 4294901760
      %2348 = vmatmul.mubr.f32.gmra.mrb[0].mxu0 %v2347
      %v2349 = vpop.f32.mrb[0].mxu0
      %v2350 = vadd.f32 %v1819, %v2349
      %v2351 = vpop.f32.mrb[0].mxu0
      %2352 = vmatprep.mubr.f32.mxu0 0.0
      %v2353 = vand.u32 %v320, 4294901760
      %v2354 = vsub.f32 %v320, %v2353
      %v2355 = vand.u32 %v2354, 4294901760
      %2356 = vmatmul.mubr.f32.gmra.mrb[0].mxu0 %v2355
      %v2357 = vpop.f32.mrb[0].mxu0
      %v2358 = vadd.f32 %v1826, %v2357
      %v2359 = vpop.f32.mrb[0].mxu0
      %2360 = vmatprep.mubr.f32.mxu0 0.0
      %v2361 = vand.u32 %v323, 4294901760
      %v2362 = vsub.f32 %v323, %v2361
      %v2363 = vand.u32 %v2362, 4294901760
      %2364 = vmatmul.mubr.f32.gmra.mrb[0].mxu0 %v2363
      %v2365 = vpop.f32.mrb[0].mxu0
      %v2366 = vadd.f32 %v1833, %v2365
      %v2367 = vpop.f32.mrb[0].mxu0
      %2368 = vmatprep.mubr.f32.mxu0 0.0
      %v2369 = vand.u32 %v326, 4294901760
      %v2370 = vsub.f32 %v326, %v2369
      %v2371 = vand.u32 %v2370, 4294901760
      %2372 = vmatmul.mubr.f32.gmra.mrb[0].mxu0 %v2371
      %v2373 = vpop.f32.mrb[0].mxu0
      %v2374 = vadd.f32 %v1840, %v2373
      %v2375 = vpop.f32.mrb[0].mxu0
      %2376 = vmatprep.mubr.f32.mxu0 0.0
      %v2377 = vand.u32 %v329, 4294901760
      %v2378 = vsub.f32 %v329, %v2377
      %v2379 = vand.u32 %v2378, 4294901760
      %2380 = vmatmul.mubr.f32.gmra.mrb[0].mxu0 %v2379
      %v2381 = vpop.f32.mrb[0].mxu0
      %v2382 = vadd.f32 %v1847, %v2381
      %v2383 = vpop.f32.mrb[0].mxu0
      %2384 = vmatprep.mubr.f32.mxu0 0.0
      %v2385 = vand.u32 %v332, 4294901760
      %v2386 = vsub.f32 %v332, %v2385
      %v2387 = vand.u32 %v2386, 4294901760
      %2388 = vmatmul.mubr.f32.gmra.mrb[0].mxu0 %v2387
      %v2389 = vpop.f32.mrb[0].mxu0
      %v2390 = vadd.f32 %v1854, %v2389
      %v2391 = vpop.f32.mrb[0].mxu0
      %2392 = vmatprep.mubr.f32.mxu0 0.0
      %v2393 = vand.u32 %v335, 4294901760
      %v2394 = vsub.f32 %v335, %v2393
      %v2395 = vand.u32 %v2394, 4294901760
      %2396 = vmatmul.mubr.f32.gmra.mrb[0].mxu0 %v2395
      %v2397 = vpop.f32.mrb[0].mxu0
      %v2398 = vadd.f32 %v1861, %v2397
      %v2399 = vpop.f32.mrb[0].mxu0
      %2400 = vmatprep.mubr.f32.mxu0 0.0
      %v2401 = vand.u32 %v338, 4294901760
      %v2402 = vsub.f32 %v338, %v2401
      %v2403 = vand.u32 %v2402, 4294901760
      %2404 = vmatmul.mubr.f32.gmra.mrb[0].mxu0 %v2403
      %v2405 = vpop.f32.mrb[0].mxu0
      %v2406 = vadd.f32 %v1868, %v2405
      %v2407 = vpop.f32.mrb[0].mxu0
      %2408 = vmatprep.mubr.f32.mxu0 0.0
      %v2409 = vand.u32 %v341, 4294901760
      %v2410 = vsub.f32 %v341, %v2409
      %v2411 = vand.u32 %v2410, 4294901760
      %2412 = vmatmul.mubr.f32.gmra.mrb[0].mxu0 %v2411
      %v2413 = vpop.f32.mrb[0].mxu0
      %v2414 = vadd.f32 %v1875, %v2413
      %v2415 = vpop.f32.mrb[0].mxu0
      %2416 = vmatprep.mubr.f32.mxu0 0.0
      %v2417 = vand.u32 %v344, 4294901760
      %v2418 = vsub.f32 %v344, %v2417
      %v2419 = vand.u32 %v2418, 4294901760
      %2420 = vmatmul.mubr.f32.gmra.mrb[0].mxu0 %v2419
      %v2421 = vpop.f32.mrb[0].mxu0
      %v2422 = vadd.f32 %v1882, %v2421
      %v2423 = vpop.f32.mrb[0].mxu0
      %2424 = vmatprep.mubr.f32.mxu0 0.0
      %v2425 = vand.u32 %v347, 4294901760
      %v2426 = vsub.f32 %v347, %v2425
      %v2427 = vand.u32 %v2426, 4294901760
      %2428 = vmatmul.mubr.f32.gmra.mrb[0].mxu0 %v2427
      %v2429 = vpop.f32.mrb[0].mxu0
      %v2430 = vadd.f32 %v1889, %v2429
      %v2431 = vpop.f32.mrb[0].mxu0
      %2432 = vmatprep.mubr.f32.mxu0 0.0
      %v2433 = vand.u32 %v350, 4294901760
      %v2434 = vsub.f32 %v350, %v2433
      %v2435 = vand.u32 %v2434, 4294901760
      %2436 = vmatmul.mubr.f32.gmra.mrb[0].mxu0 %v2435
      %v2437 = vpop.f32.mrb[0].mxu0
      %v2438 = vadd.f32 %v1896, %v2437
      %v2439 = vpop.f32.mrb[0].mxu0
      %2440 = vmatprep.mubr.f32.mxu0 0.0
      %v2441 = vand.u32 %v353, 4294901760
      %v2442 = vsub.f32 %v353, %v2441
      %v2443 = vand.u32 %v2442, 4294901760
      %2444 = vmatmul.mubr.f32.gmra.mrb[0].mxu0 %v2443
      %v2445 = vpop.f32.mrb[0].mxu0
      %v2446 = vadd.f32 %v1903, %v2445
      %v2447 = vpop.f32.mrb[0].mxu0
      %2448 = vmatprep.mubr.f32.mxu0 0.0
      %v2449 = vand.u32 %v356, 4294901760
      %v2450 = vsub.f32 %v356, %v2449
      %v2451 = vand.u32 %v2450, 4294901760
      %2452 = vmatmul.mubr.f32.gmra.mrb[0].mxu0 %v2451
      %v2453 = vpop.f32.mrb[0].mxu0
      %v2454 = vadd.f32 %v1910, %v2453
      %v2455 = vpop.f32.mrb[0].mxu0
      %2456 = vmatprep.mubr.f32.mxu0 0.0
      %v2457 = vand.u32 %v359, 4294901760
      %v2458 = vsub.f32 %v359, %v2457
      %v2459 = vand.u32 %v2458, 4294901760
      %2460 = vmatmul.mubr.f32.gmra.mrb[0].mxu0 %v2459
      %v2461 = vpop.f32.mrb[0].mxu0
      %v2462 = vadd.f32 %v1917, %v2461
      %v2463 = vpop.f32.mrb[0].mxu0
      %2464 = vmatprep.mubr.f32.mxu0 0.0
      %v2465 = vand.u32 %v362, 4294901760
      %v2466 = vsub.f32 %v362, %v2465
      %v2467 = vand.u32 %v2466, 4294901760
      %2468 = vmatmul.mubr.f32.gmra.mrb[0].mxu0 %v2467
      %v2469 = vpop.f32.mrb[0].mxu0
      %v2470 = vadd.f32 %v1924, %v2469
      %v2471 = vpop.f32.mrb[0].mxu0
      %2472 = vmatprep.mubr.f32.mxu0 0.0
      %v2473 = vand.u32 %v365, 4294901760
      %v2474 = vsub.f32 %v365, %v2473
      %v2475 = vand.u32 %v2474, 4294901760
      %2476 = vmatmul.mubr.f32.gmra.mrb[0].mxu0 %v2475
      %v2477 = vpop.f32.mrb[0].mxu0
      %v2478 = vadd.f32 %v1931, %v2477
      %v2479 = vpop.f32.mrb[0].mxu0
      %2480 = vmatprep.mubr.f32.mxu0 0.0
      %v2481 = vand.u32 %v368, 4294901760
      %v2482 = vsub.f32 %v368, %v2481
      %v2483 = vand.u32 %v2482, 4294901760
      %2484 = vmatmul.mubr.f32.gmra.mrb[0].mxu0 %v2483
      %v2485 = vpop.f32.mrb[0].mxu0
      %v2486 = vadd.f32 %v1938, %v2485
      %v2487 = vpop.f32.mrb[0].mxu0
      %2488 = vmatprep.mubr.f32.mxu0 0.0
      %v2489 = vand.u32 %v371, 4294901760
      %v2490 = vsub.f32 %v371, %v2489
      %v2491 = vand.u32 %v2490, 4294901760
      %2492 = vmatmul.mubr.f32.gmra.mrb[0].mxu0 %v2491
      %v2493 = vpop.f32.mrb[0].mxu0
      %v2494 = vadd.f32 %v1945, %v2493
      %v2495 = vpop.f32.mrb[0].mxu0
      %2496 = vmatprep.mubr.f32.mxu0 0.0
      %v2497 = vand.u32 %v374, 4294901760
      %v2498 = vsub.f32 %v374, %v2497
      %v2499 = vand.u32 %v2498, 4294901760
      %2500 = vmatmul.mubr.f32.gmra.mrb[0].mxu0 %v2499
      %v2501 = vpop.f32.mrb[0].mxu0
      %v2502 = vadd.f32 %v1952, %v2501
      %v2503 = vpop.f32.mrb[0].mxu0
      %2504 = vmatprep.mubr.f32.mxu0 0.0
      %v2505 = vand.u32 %v377, 4294901760
      %v2506 = vsub.f32 %v377, %v2505
      %v2507 = vand.u32 %v2506, 4294901760
      %2508 = vmatmul.mubr.f32.gmra.mrb[0].mxu0 %v2507
      %v2509 = vpop.f32.mrb[0].mxu0
      %v2510 = vadd.f32 %v1959, %v2509
      %v2511 = vpop.f32.mrb[0].mxu0
      %2512 = vmatprep.mubr.f32.mxu0 0.0
      %v2513 = vand.u32 %v380, 4294901760
      %v2514 = vsub.f32 %v380, %v2513
      %v2515 = vand.u32 %v2514, 4294901760
      %2516 = vmatmul.mubr.f32.gmra.mrb[0].mxu0 %v2515
      %v2517 = vpop.f32.mrb[0].mxu0
      %v2518 = vadd.f32 %v1966, %v2517
      %v2519 = vpop.f32.mrb[0].mxu0
      %2520 = vmatprep.mubr.f32.mxu0 0.0
      %v2521 = vand.u32 %v383, 4294901760
      %v2522 = vsub.f32 %v383, %v2521
      %v2523 = vand.u32 %v2522, 4294901760
      %2524 = vmatmul.mubr.f32.gmra.mrb[0].mxu0 %v2523
      %v2525 = vpop.f32.mrb[0].mxu0
      %v2526 = vadd.f32 %v1973, %v2525
      %v2527 = vpop.f32.mrb[0].mxu0
      %2528 = vmatprep.mubr.f32.mxu0 0.0
      %v2529 = vand.u32 %v386, 4294901760
      %v2530 = vsub.f32 %v386, %v2529
      %v2531 = vand.u32 %v2530, 4294901760
      %2532 = vmatmul.mubr.f32.gmra.mrb[0].mxu0 %v2531
      %v2533 = vpop.f32.mrb[0].mxu0
      %v2534 = vadd.f32 %v1980, %v2533
      %v2535 = vpop.f32.mrb[0].mxu0
      %2536 = vmatprep.mubr.f32.mxu0 0.0
      %v2537 = vand.u32 %v389, 4294901760
      %v2538 = vsub.f32 %v389, %v2537
      %v2539 = vand.u32 %v2538, 4294901760
      %2540 = vmatmul.mubr.f32.gmra.mrb[0].mxu0 %v2539
      %v2541 = vpop.f32.mrb[0].mxu0
      %v2542 = vadd.f32 %v1987, %v2541
      %v2543 = vpop.f32.mrb[0].mxu0
      %2544 = vmatprep.mubr.f32.mxu0 0.0
      %v2545 = vand.u32 %v392, 4294901760
      %v2546 = vsub.f32 %v392, %v2545
      %v2547 = vand.u32 %v2546, 4294901760
      %2548 = vmatmul.mubr.f32.gmra.mrb[0].mxu0 %v2547
      %v2549 = vpop.f32.mrb[0].mxu0
      %v2550 = vadd.f32 %v1994, %v2549
      %v2551 = vpop.f32.mrb[0].mxu0
      %2552 = vmatprep.mubr.f32.mxu0 0.0
      %v2553 = vand.u32 %v395, 4294901760
      %v2554 = vsub.f32 %v395, %v2553
      %v2555 = vand.u32 %v2554, 4294901760
      %2556 = vmatmul.mubr.f32.gmra.mrb[0].mxu0 %v2555
      %v2557 = vpop.f32.mrb[0].mxu0
      %v2558 = vadd.f32 %v2001, %v2557
      %v2559 = vpop.f32.mrb[0].mxu0
      %2560 = vmatprep.mubr.f32.mxu0 0.0
      %v2561 = vand.u32 %v398, 4294901760
      %v2562 = vsub.f32 %v398, %v2561
      %v2563 = vand.u32 %v2562, 4294901760
      %2564 = vmatmul.mubr.f32.gmra.mrb[0].mxu0 %v2563
      %v2565 = vpop.f32.mrb[0].mxu0
      %v2566 = vadd.f32 %v2008, %v2565
      %v2567 = vpop.f32.mrb[0].mxu0
      %2568 = vmatprep.mubr.f32.mxu0 0.0
      %v2569 = vand.u32 %v401, 4294901760
      %v2570 = vsub.f32 %v401, %v2569
      %v2571 = vand.u32 %v2570, 4294901760
      %2572 = vmatmul.mubr.f32.gmra.mrb[0].mxu0 %v2571
      %v2573 = vpop.f32.mrb[0].mxu0
      %v2574 = vadd.f32 %v2015, %v2573
      %v2575 = vpop.f32.mrb[0].mxu0
      %2576 = vmatprep.mubr.f32.mxu0 0.0
      %v2577 = vand.u32 %v404, 4294901760
      %v2578 = vsub.f32 %v404, %v2577
      %v2579 = vand.u32 %v2578, 4294901760
      %2580 = vmatmul.mubr.f32.gmra.mrb[0].mxu0 %v2579
      %v2581 = vpop.f32.mrb[0].mxu0
      %v2582 = vadd.f32 %v2022, %v2581
      %v2583 = vpop.f32.mrb[0].mxu0
      %2584 = vmatprep.mubr.f32.mxu0 0.0
      %v2585 = vand.u32 %v407, 4294901760
      %v2586 = vsub.f32 %v407, %v2585
      %v2587 = vand.u32 %v2586, 4294901760
      %2588 = vmatmul.mubr.f32.gmra.mrb[0].mxu0 %v2587
      %v2589 = vpop.f32.mrb[0].mxu0
      %v2590 = vadd.f32 %v2029, %v2589
      %v2591 = vpop.f32.mrb[0].mxu0
      %2592 = vmatprep.mubr.f32.mxu0 0.0
      %v2593 = vand.u32 %v410, 4294901760
      %v2594 = vsub.f32 %v410, %v2593
      %v2595 = vand.u32 %v2594, 4294901760
      %2596 = vmatmul.mubr.f32.gmra.mrb[0].mxu0 %v2595
      %v2597 = vpop.f32.mrb[0].mxu0
      %v2598 = vadd.f32 %v2036, %v2597
      %v2599 = vpop.f32.mrb[0].mxu0
      %2600 = vmatprep.mubr.f32.mxu0 0.0
      %v2601 = vand.u32 %v413, 4294901760
      %v2602 = vsub.f32 %v413, %v2601
      %v2603 = vand.u32 %v2602, 4294901760
      %2604 = vmatmul.mubr.f32.gmra.mrb[0].mxu0 %v2603
      %v2605 = vpop.f32.mrb[0].mxu0
      %v2606 = vadd.f32 %v2043, %v2605
      %v2607 = vpop.f32.mrb[0].mxu0
      %2608 = vmatprep.mubr.f32.mxu0 0.0
      %v2609 = vand.u32 %v416, 4294901760
      %v2610 = vsub.f32 %v416, %v2609
      %v2611 = vand.u32 %v2610, 4294901760
      %2612 = vmatmul.mubr.f32.gmra.mrb[0].mxu0 %v2611
      %v2613 = vpop.f32.mrb[0].mxu0
      %v2614 = vadd.f32 %v2050, %v2613
      %v2615 = vpop.f32.mrb[0].mxu0
      %2616 = vmatprep.mubr.f32.mxu0 0.0
      %v2617 = vand.u32 %v419, 4294901760
      %v2618 = vsub.f32 %v419, %v2617
      %v2619 = vand.u32 %v2618, 4294901760
      %2620 = vmatmul.mubr.f32.gmra.mrb[0].mxu0 %v2619
      %v2621 = vpop.f32.mrb[0].mxu0
      %v2622 = vadd.f32 %v2057, %v2621
      %v2623 = vpop.f32.mrb[0].mxu0
      %2624 = vmatprep.mubr.f32.mxu0 0.0
      %v2625 = vand.u32 %v422, 4294901760
      %v2626 = vsub.f32 %v422, %v2625
      %v2627 = vand.u32 %v2626, 4294901760
      %2628 = vmatmul.mubr.f32.gmra.mrb[0].mxu0 %v2627
      %v2629 = vpop.f32.mrb[0].mxu0
      %v2630 = vadd.f32 %v2064, %v2629
      %v2631 = vpop.f32.mrb[0].mxu0
      %2632 = vmatprep.mubr.f32.mxu0 0.0
      %v2633 = vand.u32 %v425, 4294901760
      %v2634 = vsub.f32 %v425, %v2633
      %v2635 = vand.u32 %v2634, 4294901760
      %2636 = vmatmul.mubr.f32.gmra.mrb[0].mxu0 %v2635
      %v2637 = vpop.f32.mrb[0].mxu0
      %v2638 = vadd.f32 %v2071, %v2637
      %v2639 = vpop.f32.mrb[0].mxu0
      %2640 = vmatprep.mubr.f32.mxu0 0.0
      %v2641 = vand.u32 %v428, 4294901760
      %v2642 = vsub.f32 %v428, %v2641
      %v2643 = vand.u32 %v2642, 4294901760
      %2644 = vmatmul.mubr.f32.gmra.mrb[0].mxu0 %v2643
      %v2645 = vpop.f32.mrb[0].mxu0
      %v2646 = vadd.f32 %v2078, %v2645
      %v2647 = vpop.f32.mrb[0].mxu0
      %2648 = vmatprep.mubr.f32.mxu0 0.0
      %v2649 = vand.u32 %v431, 4294901760
      %v2650 = vsub.f32 %v431, %v2649
      %v2651 = vand.u32 %v2650, 4294901760
      %2652 = vmatmul.mubr.f32.gmra.mrb[0].mxu0 %v2651
      %v2653 = vpop.f32.mrb[0].mxu0
      %v2654 = vadd.f32 %v2085, %v2653
      %v2655 = vpop.f32.mrb[0].mxu0
      %2656 = vmatprep.mubr.f32.mxu0 0.0
      %v2657 = vand.u32 %v434, 4294901760
      %v2658 = vsub.f32 %v434, %v2657
      %v2659 = vand.u32 %v2658, 4294901760
      %2660 = vmatmul.mubr.f32.gmra.mrb[0].mxu0 %v2659
      %v2661 = vpop.f32.mrb[0].mxu0
      %v2662 = vadd.f32 %v2092, %v2661
      %v2663 = vpop.f32.mrb[0].mxu0
      %2664 = vmatprep.mubr.f32.mxu0 0.0
      %v2665 = vand.u32 %v437, 4294901760
      %v2666 = vsub.f32 %v437, %v2665
      %v2667 = vand.u32 %v2666, 4294901760
      %2668 = vmatmul.mubr.f32.gmra.mrb[0].mxu0 %v2667
      %v2669 = vpop.f32.mrb[0].mxu0
      %v2670 = vadd.f32 %v2099, %v2669
      %v2671 = vpop.f32.mrb[0].mxu0
      %2672 = vmatprep.mubr.f32.mxu0 0.0
      %v2673 = vand.u32 %v440, 4294901760
      %v2674 = vsub.f32 %v440, %v2673
      %v2675 = vand.u32 %v2674, 4294901760
      %2676 = vmatmul.mubr.f32.gmra.mrb[0].mxu0 %v2675
      %v2677 = vpop.f32.mrb[0].mxu0
      %v2678 = vadd.f32 %v2106, %v2677
      %v2679 = vpop.f32.mrb[0].mxu0
      %2680 = vmatprep.mubr.f32.mxu0 0.0
      %v2681 = vand.u32 %v443, 4294901760
      %v2682 = vsub.f32 %v443, %v2681
      %v2683 = vand.u32 %v2682, 4294901760
      %2684 = vmatmul.mubr.f32.gmra.mrb[0].mxu0 %v2683
      %v2685 = vpop.f32.mrb[0].mxu0
      %v2686 = vadd.f32 %v2113, %v2685
      %v2687 = vpop.f32.mrb[0].mxu0
      %2688 = vmatprep.mubr.f32.mxu0 0.0
      %v2689 = vand.u32 %v446, 4294901760
      %v2690 = vsub.f32 %v446, %v2689
      %v2691 = vand.u32 %v2690, 4294901760
      %2692 = vmatmul.mubr.f32.gmra.mrb[0].mxu0 %v2691
      %v2693 = vpop.f32.mrb[0].mxu0
      %v2694 = vadd.f32 %v2120, %v2693
      %v2695 = vpop.f32.mrb[0].mxu0
      %2696 = vmatprep.mubr.f32.mxu0 0.0
      %v2697 = vand.u32 %v449, 4294901760
      %v2698 = vsub.f32 %v449, %v2697
      %v2699 = vand.u32 %v2698, 4294901760
      %2700 = vmatmul.mubr.f32.gmra.mrb[0].mxu0 %v2699
      %v2701 = vpop.f32.mrb[0].mxu0
      %v2702 = vadd.f32 %v2127, %v2701
      %v2703 = vpop.f32.mrb[0].mxu0
      %2704 = vmatprep.mubr.f32.mxu0 0.0
      %v2705 = vand.u32 %v452, 4294901760
      %v2706 = vsub.f32 %v452, %v2705
      %v2707 = vand.u32 %v2706, 4294901760
      %2708 = vmatmul.mubr.f32.gmra.mrb[0].mxu0 %v2707
      %v2709 = vpop.f32.mrb[0].mxu0
      %v2710 = vadd.f32 %v2134, %v2709
      %v2711 = vpop.f32.mrb[0].mxu0
      %2712 = vmatprep.mubr.f32.mxu0 0.0
      %v2713 = vand.u32 %v455, 4294901760
      %v2714 = vsub.f32 %v455, %v2713
      %v2715 = vand.u32 %v2714, 4294901760
      %2716 = vmatmul.mubr.f32.gmra.mrb[0].mxu0 %v2715
      %v2717 = vpop.f32.mrb[0].mxu0
      %v2718 = vadd.f32 %v2141, %v2717
      %v2719 = vpop.f32.mrb[0].mxu0
      %2720 = vmatprep.mubr.f32.mxu0 0.0
      %v2721 = vand.u32 %v458, 4294901760
      %v2722 = vsub.f32 %v458, %v2721
      %v2723 = vand.u32 %v2722, 4294901760
      %2724 = vmatmul.mubr.f32.gmra.mrb[0].mxu0 %v2723
      %v2725 = vpop.f32.mrb[0].mxu0
      %v2726 = vadd.f32 %v2148, %v2725
      %v2727 = vpop.f32.mrb[0].mxu0
      %2728 = vmatprep.mubr.f32.mxu0 0.0
      %v2729 = vand.u32 %v461, 4294901760
      %v2730 = vsub.f32 %v461, %v2729
      %v2731 = vand.u32 %v2730, 4294901760
      %2732 = vmatmul.mubr.f32.gmra.mrb[0].mxu0 %v2731
      %v2733 = vpop.f32.mrb[0].mxu0
      %v2734 = vadd.f32 %v2155, %v2733
      %v2735 = vpop.f32.mrb[0].mxu0
      %2736 = vmatprep.mubr.f32.mxu0 0.0
      %v2737 = vand.u32 %v464, 4294901760
      %v2738 = vsub.f32 %v464, %v2737
      %v2739 = vand.u32 %v2738, 4294901760
      %2740 = vmatmul.mubr.f32.gmra.mrb[0].mxu0 %v2739
      %v2741 = vpop.f32.mrb[0].mxu0
      %v2742 = vadd.f32 %v2162, %v2741
      %v2743 = vpop.f32.mrb[0].mxu0
      %2744 = vmatprep.mubr.f32.mxu0 0.0
      %v2745 = vand.u32 %v467, 4294901760
      %v2746 = vsub.f32 %v467, %v2745
      %v2747 = vand.u32 %v2746, 4294901760
      %2748 = vmatmul.mubr.f32.gmra.mrb[0].mxu0 %v2747
      %v2749 = vpop.f32.mrb[0].mxu0
      %v2750 = vadd.f32 %v2169, %v2749
      %v2751 = vpop.f32.mrb[0].mxu0
      %2752 = vdwg.mxu0
      %2753 = vmatprep.subr.mxu0 0.0
      %v2754 = vand.u32 %v265, 4294901760
      %v2755 = vsub.f32 %v265, %v2754
      %v2756 = vand.u32 %v2755, 4294901760
      %2757 = vmatpush1.msra.mxu0 %v2756
      %2758 = vmatprep.subr.mxu0 0.0
      %v2759 = vand.u32 %v266, 4294901760
      %v2760 = vsub.f32 %v266, %v2759
      %v2761 = vand.u32 %v2760, 4294901760
      %2762 = vmatpush1.msra.mxu0 %v2761
      %2763 = vmatprep.subr.mxu0 0.0
      %v2764 = vand.u32 %v267, 4294901760
      %v2765 = vsub.f32 %v267, %v2764
      %v2766 = vand.u32 %v2765, 4294901760
      %2767 = vmatpush1.msra.mxu0 %v2766
      %2768 = vmatprep.subr.mxu0 0.0
      %v2769 = vand.u32 %v471, 4294901760
      %v2770 = vsub.f32 %v471, %v2769
      %v2771 = vand.u32 %v2770, 4294901760
      %2772 = vmatpush1.msra.mxu0 %v2771
      %2773 = vmatprep.subr.mxu0 0.0
      %2774 = vmatpush1.msra.mxu0 0.0
      %2775 = vmatprep.subr.mxu0 0.0
      %2776 = vmatpush1.msra.mxu0 0.0
      %2777 = vmatprep.subr.mxu0 0.0
      %2778 = vmatpush1.msra.mxu0 0.0
      %2779 = vmatprep.subr.mxu0 0.0
      %2780 = vmatpush1.msra.mxu0 0.0
      %2781 = vmatprep.subr.mxu0 0.0
      %2782 = vmatpush1.msra.mxu0 0.0
      %2783 = vmatprep.subr.mxu0 0.0
      %2784 = vmatpush1.msra.mxu0 0.0
      %2785 = vmatprep.subr.mxu0 0.0
      %2786 = vmatpush1.msra.mxu0 0.0
      %2787 = vmatprep.subr.mxu0 0.0
      %2788 = vmatpush1.msra.mxu0 0.0
      %2789 = vmatprep.subr.mxu0 0.0
      %2790 = vmatpush1.msra.mxu0 0.0
      %2791 = vmatprep.subr.mxu0 0.0
      %2792 = vmatpush1.msra.mxu0 0.0
      %2793 = vmatprep.subr.mxu0 0.0
      %2794 = vmatpush1.msra.mxu0 0.0
      %2795 = vmatprep.subr.mxu0 0.0
      %2796 = vmatpush1.msra.mxu0 0.0
      %2797 = vmatprep.subr.mxu0 0.0
      %2798 = vmatpush1.msra.mxu0 0.0
      %2799 = vmatprep.subr.mxu0 0.0
      %2800 = vmatpush1.msra.mxu0 0.0
      %2801 = vmatprep.subr.mxu0 0.0
      %2802 = vmatpush1.msra.mxu0 0.0
      %2803 = vmatprep.subr.mxu0 0.0
      %2804 = vmatpush1.msra.mxu0 0.0
      %2805 = vmatprep.subr.mxu0 0.0
      %2806 = vmatpush1.msra.mxu0 0.0
      %2807 = vmatprep.subr.mxu0 0.0
      %2808 = vmatpush1.msra.mxu0 0.0
      %2809 = vmatprep.subr.mxu0 0.0
      %2810 = vmatpush1.msra.mxu0 0.0
      %2811 = vmatprep.subr.mxu0 0.0
      %2812 = vmatpush1.msra.mxu0 0.0
      %2813 = vmatprep.subr.mxu0 0.0
      %2814 = vmatpush1.msra.mxu0 0.0
      %2815 = vmatprep.subr.mxu0 0.0
      %2816 = vmatpush1.msra.mxu0 0.0
      %2817 = vmatprep.subr.mxu0 0.0
      %2818 = vmatpush1.msra.mxu0 0.0
      %2819 = vmatprep.subr.mxu0 0.0
      %2820 = vmatpush1.msra.mxu0 0.0
      %2821 = vmatprep.subr.mxu0 0.0
      %2822 = vmatpush1.msra.mxu0 0.0
      %2823 = vmatprep.subr.mxu0 0.0
      %2824 = vmatpush1.msra.mxu0 0.0
      %2825 = vmatprep.subr.mxu0 0.0
      %2826 = vmatpush1.msra.mxu0 0.0
      %2827 = vmatprep.subr.mxu0 0.0
      %2828 = vmatpush1.msra.mxu0 0.0
      %2829 = vmatprep.mubr.f32.mxu0 0.0
      %v2830 = vand.u32 %v278, 4294901760
      %2831 = vmatmul.mubr.f32.gmra.mrb[0].mxu0 %v2830
      %v2832 = vpop.f32.mrb[0].mxu0
      %v2833 = vadd.f32 %v2246, %v2832
      %v2834 = vpop.f32.mrb[0].mxu0
      %2835 = vmatprep.mubr.f32.mxu0 0.0
      %v2836 = vand.u32 %v281, 4294901760
      %2837 = vmatmul.mubr.f32.gmra.mrb[0].mxu0 %v2836
      %v2838 = vpop.f32.mrb[0].mxu0
      %v2839 = vadd.f32 %v2254, %v2838
      %v2840 = vpop.f32.mrb[0].mxu0
      %2841 = vmatprep.mubr.f32.mxu0 0.0
      %v2842 = vand.u32 %v284, 4294901760
      %2843 = vmatmul.mubr.f32.gmra.mrb[0].mxu0 %v2842
      %v2844 = vpop.f32.mrb[0].mxu0
      %v2845 = vadd.f32 %v2262, %v2844
      %v2846 = vpop.f32.mrb[0].mxu0
      %2847 = vmatprep.mubr.f32.mxu0 0.0
      %v2848 = vand.u32 %v287, 4294901760
      %2849 = vmatmul.mubr.f32.gmra.mrb[0].mxu0 %v2848
      %v2850 = vpop.f32.mrb[0].mxu0
      %v2851 = vadd.f32 %v2270, %v2850
      %v2852 = vpop.f32.mrb[0].mxu0
      %2853 = vmatprep.mubr.f32.mxu0 0.0
      %v2854 = vand.u32 %v290, 4294901760
      %2855 = vmatmul.mubr.f32.gmra.mrb[0].mxu0 %v2854
      %v2856 = vpop.f32.mrb[0].mxu0
      %v2857 = vadd.f32 %v2278, %v2856
      %v2858 = vpop.f32.mrb[0].mxu0
      %2859 = vmatprep.mubr.f32.mxu0 0.0
      %v2860 = vand.u32 %v293, 4294901760
      %2861 = vmatmul.mubr.f32.gmra.mrb[0].mxu0 %v2860
      %v2862 = vpop.f32.mrb[0].mxu0
      %v2863 = vadd.f32 %v2286, %v2862
      %v2864 = vpop.f32.mrb[0].mxu0
      %2865 = vmatprep.mubr.f32.mxu0 0.0
      %v2866 = vand.u32 %v296, 4294901760
      %2867 = vmatmul.mubr.f32.gmra.mrb[0].mxu0 %v2866
      %v2868 = vpop.f32.mrb[0].mxu0
      %v2869 = vadd.f32 %v2294, %v2868
      %v2870 = vpop.f32.mrb[0].mxu0
      %2871 = vmatprep.mubr.f32.mxu0 0.0
      %v2872 = vand.u32 %v299, 4294901760
      %2873 = vmatmul.mubr.f32.gmra.mrb[0].mxu0 %v2872
      %v2874 = vpop.f32.mrb[0].mxu0
      %v2875 = vadd.f32 %v2302, %v2874
      %v2876 = vpop.f32.mrb[0].mxu0
      %2877 = vmatprep.mubr.f32.mxu0 0.0
      %v2878 = vand.u32 %v302, 4294901760
      %2879 = vmatmul.mubr.f32.gmra.mrb[0].mxu0 %v2878
      %v2880 = vpop.f32.mrb[0].mxu0
      %v2881 = vadd.f32 %v2310, %v2880
      %v2882 = vpop.f32.mrb[0].mxu0
      %2883 = vmatprep.mubr.f32.mxu0 0.0
      %v2884 = vand.u32 %v305, 4294901760
      %2885 = vmatmul.mubr.f32.gmra.mrb[0].mxu0 %v2884
      %v2886 = vpop.f32.mrb[0].mxu0
      %v2887 = vadd.f32 %v2318, %v2886
      %v2888 = vpop.f32.mrb[0].mxu0
      %2889 = vmatprep.mubr.f32.mxu0 0.0
      %v2890 = vand.u32 %v308, 4294901760
      %2891 = vmatmul.mubr.f32.gmra.mrb[0].mxu0 %v2890
      %v2892 = vpop.f32.mrb[0].mxu0
      %v2893 = vadd.f32 %v2326, %v2892
      %v2894 = vpop.f32.mrb[0].mxu0
      %2895 = vmatprep.mubr.f32.mxu0 0.0
      %v2896 = vand.u32 %v311, 4294901760
      %2897 = vmatmul.mubr.f32.gmra.mrb[0].mxu0 %v2896
      %v2898 = vpop.f32.mrb[0].mxu0
      %v2899 = vadd.f32 %v2334, %v2898
      %v2900 = vpop.f32.mrb[0].mxu0
      %2901 = vmatprep.mubr.f32.mxu0 0.0
      %v2902 = vand.u32 %v314, 4294901760
      %2903 = vmatmul.mubr.f32.gmra.mrb[0].mxu0 %v2902
      %v2904 = vpop.f32.mrb[0].mxu0
      %v2905 = vadd.f32 %v2342, %v2904
      %v2906 = vpop.f32.mrb[0].mxu0
      %2907 = vmatprep.mubr.f32.mxu0 0.0
      %v2908 = vand.u32 %v317, 4294901760
      %2909 = vmatmul.mubr.f32.gmra.mrb[0].mxu0 %v2908
      %v2910 = vpop.f32.mrb[0].mxu0
      %v2911 = vadd.f32 %v2350, %v2910
      %v2912 = vpop.f32.mrb[0].mxu0
      %2913 = vmatprep.mubr.f32.mxu0 0.0
      %v2914 = vand.u32 %v320, 4294901760
      %2915 = vmatmul.mubr.f32.gmra.mrb[0].mxu0 %v2914
      %v2916 = vpop.f32.mrb[0].mxu0
      %v2917 = vadd.f32 %v2358, %v2916
      %v2918 = vpop.f32.mrb[0].mxu0
      %2919 = vmatprep.mubr.f32.mxu0 0.0
      %v2920 = vand.u32 %v323, 4294901760
      %2921 = vmatmul.mubr.f32.gmra.mrb[0].mxu0 %v2920
      %v2922 = vpop.f32.mrb[0].mxu0
      %v2923 = vadd.f32 %v2366, %v2922
      %v2924 = vpop.f32.mrb[0].mxu0
      %2925 = vmatprep.mubr.f32.mxu0 0.0
      %v2926 = vand.u32 %v326, 4294901760
      %2927 = vmatmul.mubr.f32.gmra.mrb[0].mxu0 %v2926
      %v2928 = vpop.f32.mrb[0].mxu0
      %v2929 = vadd.f32 %v2374, %v2928
      %v2930 = vpop.f32.mrb[0].mxu0
      %2931 = vmatprep.mubr.f32.mxu0 0.0
      %v2932 = vand.u32 %v329, 4294901760
      %2933 = vmatmul.mubr.f32.gmra.mrb[0].mxu0 %v2932
      %v2934 = vpop.f32.mrb[0].mxu0
      %v2935 = vadd.f32 %v2382, %v2934
      %v2936 = vpop.f32.mrb[0].mxu0
      %2937 = vmatprep.mubr.f32.mxu0 0.0
      %v2938 = vand.u32 %v332, 4294901760
      %2939 = vmatmul.mubr.f32.gmra.mrb[0].mxu0 %v2938
      %v2940 = vpop.f32.mrb[0].mxu0
      %v2941 = vadd.f32 %v2390, %v2940
      %v2942 = vpop.f32.mrb[0].mxu0
      %2943 = vmatprep.mubr.f32.mxu0 0.0
      %v2944 = vand.u32 %v335, 4294901760
      %2945 = vmatmul.mubr.f32.gmra.mrb[0].mxu0 %v2944
      %v2946 = vpop.f32.mrb[0].mxu0
      %v2947 = vadd.f32 %v2398, %v2946
      %v2948 = vpop.f32.mrb[0].mxu0
      %2949 = vmatprep.mubr.f32.mxu0 0.0
      %v2950 = vand.u32 %v338, 4294901760
      %2951 = vmatmul.mubr.f32.gmra.mrb[0].mxu0 %v2950
      %v2952 = vpop.f32.mrb[0].mxu0
      %v2953 = vadd.f32 %v2406, %v2952
      %v2954 = vpop.f32.mrb[0].mxu0
      %2955 = vmatprep.mubr.f32.mxu0 0.0
      %v2956 = vand.u32 %v341, 4294901760
      %2957 = vmatmul.mubr.f32.gmra.mrb[0].mxu0 %v2956
      %v2958 = vpop.f32.mrb[0].mxu0
      %v2959 = vadd.f32 %v2414, %v2958
      %v2960 = vpop.f32.mrb[0].mxu0
      %2961 = vmatprep.mubr.f32.mxu0 0.0
      %v2962 = vand.u32 %v344, 4294901760
      %2963 = vmatmul.mubr.f32.gmra.mrb[0].mxu0 %v2962
      %v2964 = vpop.f32.mrb[0].mxu0
      %v2965 = vadd.f32 %v2422, %v2964
      %v2966 = vpop.f32.mrb[0].mxu0
      %2967 = vmatprep.mubr.f32.mxu0 0.0
      %v2968 = vand.u32 %v347, 4294901760
      %2969 = vmatmul.mubr.f32.gmra.mrb[0].mxu0 %v2968
      %v2970 = vpop.f32.mrb[0].mxu0
      %v2971 = vadd.f32 %v2430, %v2970
      %v2972 = vpop.f32.mrb[0].mxu0
      %2973 = vmatprep.mubr.f32.mxu0 0.0
      %v2974 = vand.u32 %v350, 4294901760
      %2975 = vmatmul.mubr.f32.gmra.mrb[0].mxu0 %v2974
      %v2976 = vpop.f32.mrb[0].mxu0
      %v2977 = vadd.f32 %v2438, %v2976
      %v2978 = vpop.f32.mrb[0].mxu0
      %2979 = vmatprep.mubr.f32.mxu0 0.0
      %v2980 = vand.u32 %v353, 4294901760
      %2981 = vmatmul.mubr.f32.gmra.mrb[0].mxu0 %v2980
      %v2982 = vpop.f32.mrb[0].mxu0
      %v2983 = vadd.f32 %v2446, %v2982
      %v2984 = vpop.f32.mrb[0].mxu0
      %2985 = vmatprep.mubr.f32.mxu0 0.0
      %v2986 = vand.u32 %v356, 4294901760
      %2987 = vmatmul.mubr.f32.gmra.mrb[0].mxu0 %v2986
      %v2988 = vpop.f32.mrb[0].mxu0
      %v2989 = vadd.f32 %v2454, %v2988
      %v2990 = vpop.f32.mrb[0].mxu0
      %2991 = vmatprep.mubr.f32.mxu0 0.0
      %v2992 = vand.u32 %v359, 4294901760
      %2993 = vmatmul.mubr.f32.gmra.mrb[0].mxu0 %v2992
      %v2994 = vpop.f32.mrb[0].mxu0
      %v2995 = vadd.f32 %v2462, %v2994
      %v2996 = vpop.f32.mrb[0].mxu0
      %2997 = vmatprep.mubr.f32.mxu0 0.0
      %v2998 = vand.u32 %v362, 4294901760
      %2999 = vmatmul.mubr.f32.gmra.mrb[0].mxu0 %v2998
      %v3000 = vpop.f32.mrb[0].mxu0
      %v3001 = vadd.f32 %v2470, %v3000
      %v3002 = vpop.f32.mrb[0].mxu0
      %3003 = vmatprep.mubr.f32.mxu0 0.0
      %v3004 = vand.u32 %v365, 4294901760
      %3005 = vmatmul.mubr.f32.gmra.mrb[0].mxu0 %v3004
      %v3006 = vpop.f32.mrb[0].mxu0
      %v3007 = vadd.f32 %v2478, %v3006
      %v3008 = vpop.f32.mrb[0].mxu0
      %3009 = vmatprep.mubr.f32.mxu0 0.0
      %v3010 = vand.u32 %v368, 4294901760
      %3011 = vmatmul.mubr.f32.gmra.mrb[0].mxu0 %v3010
      %v3012 = vpop.f32.mrb[0].mxu0
      %v3013 = vadd.f32 %v2486, %v3012
      %v3014 = vpop.f32.mrb[0].mxu0
      %3015 = vmatprep.mubr.f32.mxu0 0.0
      %v3016 = vand.u32 %v371, 4294901760
      %3017 = vmatmul.mubr.f32.gmra.mrb[0].mxu0 %v3016
      %v3018 = vpop.f32.mrb[0].mxu0
      %v3019 = vadd.f32 %v2494, %v3018
      %v3020 = vpop.f32.mrb[0].mxu0
      %3021 = vmatprep.mubr.f32.mxu0 0.0
      %v3022 = vand.u32 %v374, 4294901760
      %3023 = vmatmul.mubr.f32.gmra.mrb[0].mxu0 %v3022
      %v3024 = vpop.f32.mrb[0].mxu0
      %v3025 = vadd.f32 %v2502, %v3024
      %v3026 = vpop.f32.mrb[0].mxu0
      %3027 = vmatprep.mubr.f32.mxu0 0.0
      %v3028 = vand.u32 %v377, 4294901760
      %3029 = vmatmul.mubr.f32.gmra.mrb[0].mxu0 %v3028
      %v3030 = vpop.f32.mrb[0].mxu0
      %v3031 = vadd.f32 %v2510, %v3030
      %v3032 = vpop.f32.mrb[0].mxu0
      %3033 = vmatprep.mubr.f32.mxu0 0.0
      %v3034 = vand.u32 %v380, 4294901760
      %3035 = vmatmul.mubr.f32.gmra.mrb[0].mxu0 %v3034
      %v3036 = vpop.f32.mrb[0].mxu0
      %v3037 = vadd.f32 %v2518, %v3036
      %v3038 = vpop.f32.mrb[0].mxu0
      %3039 = vmatprep.mubr.f32.mxu0 0.0
      %v3040 = vand.u32 %v383, 4294901760
      %3041 = vmatmul.mubr.f32.gmra.mrb[0].mxu0 %v3040
      %v3042 = vpop.f32.mrb[0].mxu0
      %v3043 = vadd.f32 %v2526, %v3042
      %v3044 = vpop.f32.mrb[0].mxu0
      %3045 = vmatprep.mubr.f32.mxu0 0.0
      %v3046 = vand.u32 %v386, 4294901760
      %3047 = vmatmul.mubr.f32.gmra.mrb[0].mxu0 %v3046
      %v3048 = vpop.f32.mrb[0].mxu0
      %v3049 = vadd.f32 %v2534, %v3048
      %v3050 = vpop.f32.mrb[0].mxu0
      %3051 = vmatprep.mubr.f32.mxu0 0.0
      %v3052 = vand.u32 %v389, 4294901760
      %3053 = vmatmul.mubr.f32.gmra.mrb[0].mxu0 %v3052
      %v3054 = vpop.f32.mrb[0].mxu0
      %v3055 = vadd.f32 %v2542, %v3054
      %v3056 = vpop.f32.mrb[0].mxu0
      %3057 = vmatprep.mubr.f32.mxu0 0.0
      %v3058 = vand.u32 %v392, 4294901760
      %3059 = vmatmul.mubr.f32.gmra.mrb[0].mxu0 %v3058
      %v3060 = vpop.f32.mrb[0].mxu0
      %v3061 = vadd.f32 %v2550, %v3060
      %v3062 = vpop.f32.mrb[0].mxu0
      %3063 = vmatprep.mubr.f32.mxu0 0.0
      %v3064 = vand.u32 %v395, 4294901760
      %3065 = vmatmul.mubr.f32.gmra.mrb[0].mxu0 %v3064
      %v3066 = vpop.f32.mrb[0].mxu0
      %v3067 = vadd.f32 %v2558, %v3066
      %v3068 = vpop.f32.mrb[0].mxu0
      %3069 = vmatprep.mubr.f32.mxu0 0.0
      %v3070 = vand.u32 %v398, 4294901760
      %3071 = vmatmul.mubr.f32.gmra.mrb[0].mxu0 %v3070
      %v3072 = vpop.f32.mrb[0].mxu0
      %v3073 = vadd.f32 %v2566, %v3072
      %v3074 = vpop.f32.mrb[0].mxu0
      %3075 = vmatprep.mubr.f32.mxu0 0.0
      %v3076 = vand.u32 %v401, 4294901760
      %3077 = vmatmul.mubr.f32.gmra.mrb[0].mxu0 %v3076
      %v3078 = vpop.f32.mrb[0].mxu0
      %v3079 = vadd.f32 %v2574, %v3078
      %v3080 = vpop.f32.mrb[0].mxu0
      %3081 = vmatprep.mubr.f32.mxu0 0.0
      %v3082 = vand.u32 %v404, 4294901760
      %3083 = vmatmul.mubr.f32.gmra.mrb[0].mxu0 %v3082
      %v3084 = vpop.f32.mrb[0].mxu0
      %v3085 = vadd.f32 %v2582, %v3084
      %v3086 = vpop.f32.mrb[0].mxu0
      %3087 = vmatprep.mubr.f32.mxu0 0.0
      %v3088 = vand.u32 %v407, 4294901760
      %3089 = vmatmul.mubr.f32.gmra.mrb[0].mxu0 %v3088
      %v3090 = vpop.f32.mrb[0].mxu0
      %v3091 = vadd.f32 %v2590, %v3090
      %v3092 = vpop.f32.mrb[0].mxu0
      %3093 = vmatprep.mubr.f32.mxu0 0.0
      %v3094 = vand.u32 %v410, 4294901760
      %3095 = vmatmul.mubr.f32.gmra.mrb[0].mxu0 %v3094
      %v3096 = vpop.f32.mrb[0].mxu0
      %v3097 = vadd.f32 %v2598, %v3096
      %v3098 = vpop.f32.mrb[0].mxu0
      %3099 = vmatprep.mubr.f32.mxu0 0.0
      %v3100 = vand.u32 %v413, 4294901760
      %3101 = vmatmul.mubr.f32.gmra.mrb[0].mxu0 %v3100
      %v3102 = vpop.f32.mrb[0].mxu0
      %v3103 = vadd.f32 %v2606, %v3102
      %v3104 = vpop.f32.mrb[0].mxu0
      %3105 = vmatprep.mubr.f32.mxu0 0.0
      %v3106 = vand.u32 %v416, 4294901760
      %3107 = vmatmul.mubr.f32.gmra.mrb[0].mxu0 %v3106
      %v3108 = vpop.f32.mrb[0].mxu0
      %v3109 = vadd.f32 %v2614, %v3108
      %v3110 = vpop.f32.mrb[0].mxu0
      %3111 = vmatprep.mubr.f32.mxu0 0.0
      %v3112 = vand.u32 %v419, 4294901760
      %3113 = vmatmul.mubr.f32.gmra.mrb[0].mxu0 %v3112
      %v3114 = vpop.f32.mrb[0].mxu0
      %v3115 = vadd.f32 %v2622, %v3114
      %v3116 = vpop.f32.mrb[0].mxu0
      %3117 = vmatprep.mubr.f32.mxu0 0.0
      %v3118 = vand.u32 %v422, 4294901760
      %3119 = vmatmul.mubr.f32.gmra.mrb[0].mxu0 %v3118
      %v3120 = vpop.f32.mrb[0].mxu0
      %v3121 = vadd.f32 %v2630, %v3120
      %v3122 = vpop.f32.mrb[0].mxu0
      %3123 = vmatprep.mubr.f32.mxu0 0.0
      %v3124 = vand.u32 %v425, 4294901760
      %3125 = vmatmul.mubr.f32.gmra.mrb[0].mxu0 %v3124
      %v3126 = vpop.f32.mrb[0].mxu0
      %v3127 = vadd.f32 %v2638, %v3126
      %v3128 = vpop.f32.mrb[0].mxu0
      %3129 = vmatprep.mubr.f32.mxu0 0.0
      %v3130 = vand.u32 %v428, 4294901760
      %3131 = vmatmul.mubr.f32.gmra.mrb[0].mxu0 %v3130
      %v3132 = vpop.f32.mrb[0].mxu0
      %v3133 = vadd.f32 %v2646, %v3132
      %v3134 = vpop.f32.mrb[0].mxu0
      %3135 = vmatprep.mubr.f32.mxu0 0.0
      %v3136 = vand.u32 %v431, 4294901760
      %3137 = vmatmul.mubr.f32.gmra.mrb[0].mxu0 %v3136
      %v3138 = vpop.f32.mrb[0].mxu0
      %v3139 = vadd.f32 %v2654, %v3138
      %v3140 = vpop.f32.mrb[0].mxu0
      %3141 = vmatprep.mubr.f32.mxu0 0.0
      %v3142 = vand.u32 %v434, 4294901760
      %3143 = vmatmul.mubr.f32.gmra.mrb[0].mxu0 %v3142
      %v3144 = vpop.f32.mrb[0].mxu0
      %v3145 = vadd.f32 %v2662, %v3144
      %v3146 = vpop.f32.mrb[0].mxu0
      %3147 = vmatprep.mubr.f32.mxu0 0.0
      %v3148 = vand.u32 %v437, 4294901760
      %3149 = vmatmul.mubr.f32.gmra.mrb[0].mxu0 %v3148
      %v3150 = vpop.f32.mrb[0].mxu0
      %v3151 = vadd.f32 %v2670, %v3150
      %v3152 = vpop.f32.mrb[0].mxu0
      %3153 = vmatprep.mubr.f32.mxu0 0.0
      %v3154 = vand.u32 %v440, 4294901760
      %3155 = vmatmul.mubr.f32.gmra.mrb[0].mxu0 %v3154
      %v3156 = vpop.f32.mrb[0].mxu0
      %v3157 = vadd.f32 %v2678, %v3156
      %v3158 = vpop.f32.mrb[0].mxu0
      %3159 = vmatprep.mubr.f32.mxu0 0.0
      %v3160 = vand.u32 %v443, 4294901760
      %3161 = vmatmul.mubr.f32.gmra.mrb[0].mxu0 %v3160
      %v3162 = vpop.f32.mrb[0].mxu0
      %v3163 = vadd.f32 %v2686, %v3162
      %v3164 = vpop.f32.mrb[0].mxu0
      %3165 = vmatprep.mubr.f32.mxu0 0.0
      %v3166 = vand.u32 %v446, 4294901760
      %3167 = vmatmul.mubr.f32.gmra.mrb[0].mxu0 %v3166
      %v3168 = vpop.f32.mrb[0].mxu0
      %v3169 = vadd.f32 %v2694, %v3168
      %v3170 = vpop.f32.mrb[0].mxu0
      %3171 = vmatprep.mubr.f32.mxu0 0.0
      %v3172 = vand.u32 %v449, 4294901760
      %3173 = vmatmul.mubr.f32.gmra.mrb[0].mxu0 %v3172
      %v3174 = vpop.f32.mrb[0].mxu0
      %v3175 = vadd.f32 %v2702, %v3174
      %v3176 = vpop.f32.mrb[0].mxu0
      %3177 = vmatprep.mubr.f32.mxu0 0.0
      %v3178 = vand.u32 %v452, 4294901760
      %3179 = vmatmul.mubr.f32.gmra.mrb[0].mxu0 %v3178
      %v3180 = vpop.f32.mrb[0].mxu0
      %v3181 = vadd.f32 %v2710, %v3180
      %v3182 = vpop.f32.mrb[0].mxu0
      %3183 = vmatprep.mubr.f32.mxu0 0.0
      %v3184 = vand.u32 %v455, 4294901760
      %3185 = vmatmul.mubr.f32.gmra.mrb[0].mxu0 %v3184
      %v3186 = vpop.f32.mrb[0].mxu0
      %v3187 = vadd.f32 %v2718, %v3186
      %v3188 = vpop.f32.mrb[0].mxu0
      %3189 = vmatprep.mubr.f32.mxu0 0.0
      %v3190 = vand.u32 %v458, 4294901760
      %3191 = vmatmul.mubr.f32.gmra.mrb[0].mxu0 %v3190
      %v3192 = vpop.f32.mrb[0].mxu0
      %v3193 = vadd.f32 %v2726, %v3192
      %v3194 = vpop.f32.mrb[0].mxu0
      %3195 = vmatprep.mubr.f32.mxu0 0.0
      %v3196 = vand.u32 %v461, 4294901760
      %3197 = vmatmul.mubr.f32.gmra.mrb[0].mxu0 %v3196
      %v3198 = vpop.f32.mrb[0].mxu0
      %v3199 = vadd.f32 %v2734, %v3198
      %v3200 = vpop.f32.mrb[0].mxu0
      %3201 = vmatprep.mubr.f32.mxu0 0.0
      %v3202 = vand.u32 %v464, 4294901760
      %3203 = vmatmul.mubr.f32.gmra.mrb[0].mxu0 %v3202
      %v3204 = vpop.f32.mrb[0].mxu0
      %v3205 = vadd.f32 %v2742, %v3204
      %v3206 = vpop.f32.mrb[0].mxu0
      %3207 = vmatprep.mubr.f32.mxu0 0.0
      %v3208 = vand.u32 %v467, 4294901760
      %3209 = vmatmul.mubr.f32.gmra.mrb[0].mxu0 %v3208
      %v3210 = vpop.f32.mrb[0].mxu0
      %v3211 = vadd.f32 %v2750, %v3210
      %v3212 = vpop.f32.mrb[0].mxu0
      %3213 = vdwg.mxu0
      %3214 = vmatprep.subr.mxu0 0.0
      %v3215 = vand.u32 %v265, 4294901760
      %3216 = vmatpush1.msra.mxu0 %v3215
      %3217 = vmatprep.subr.mxu0 0.0
      %v3218 = vand.u32 %v266, 4294901760
      %3219 = vmatpush1.msra.mxu0 %v3218
      %3220 = vmatprep.subr.mxu0 0.0
      %v3221 = vand.u32 %v267, 4294901760
      %3222 = vmatpush1.msra.mxu0 %v3221
      %3223 = vmatprep.subr.mxu0 0.0
      %v3224 = vand.u32 %v471, 4294901760
      %3225 = vmatpush1.msra.mxu0 %v3224
      %3226 = vmatprep.subr.mxu0 0.0
      %3227 = vmatpush1.msra.mxu0 0.0
      %3228 = vmatprep.subr.mxu0 0.0
      %3229 = vmatpush1.msra.mxu0 0.0
      %3230 = vmatprep.subr.mxu0 0.0
      %3231 = vmatpush1.msra.mxu0 0.0
      %3232 = vmatprep.subr.mxu0 0.0
      %3233 = vmatpush1.msra.mxu0 0.0
      %3234 = vmatprep.subr.mxu0 0.0
      %3235 = vmatpush1.msra.mxu0 0.0
      %3236 = vmatprep.subr.mxu0 0.0
      %3237 = vmatpush1.msra.mxu0 0.0
      %3238 = vmatprep.subr.mxu0 0.0
      %3239 = vmatpush1.msra.mxu0 0.0
      %3240 = vmatprep.subr.mxu0 0.0
      %3241 = vmatpush1.msra.mxu0 0.0
      %3242 = vmatprep.subr.mxu0 0.0
      %3243 = vmatpush1.msra.mxu0 0.0
      %3244 = vmatprep.subr.mxu0 0.0
      %3245 = vmatpush1.msra.mxu0 0.0
      %3246 = vmatprep.subr.mxu0 0.0
      %3247 = vmatpush1.msra.mxu0 0.0
      %3248 = vmatprep.subr.mxu0 0.0
      %3249 = vmatpush1.msra.mxu0 0.0
      %3250 = vmatprep.subr.mxu0 0.0
      %3251 = vmatpush1.msra.mxu0 0.0
      %3252 = vmatprep.subr.mxu0 0.0
      %3253 = vmatpush1.msra.mxu0 0.0
      %3254 = vmatprep.subr.mxu0 0.0
      %3255 = vmatpush1.msra.mxu0 0.0
      %3256 = vmatprep.subr.mxu0 0.0
      %3257 = vmatpush1.msra.mxu0 0.0
      %3258 = vmatprep.subr.mxu0 0.0
      %3259 = vmatpush1.msra.mxu0 0.0
      %3260 = vmatprep.subr.mxu0 0.0
      %3261 = vmatpush1.msra.mxu0 0.0
      %3262 = vmatprep.subr.mxu0 0.0
      %3263 = vmatpush1.msra.mxu0 0.0
      %3264 = vmatprep.subr.mxu0 0.0
      %3265 = vmatpush1.msra.mxu0 0.0
      %3266 = vmatprep.subr.mxu0 0.0
      %3267 = vmatpush1.msra.mxu0 0.0
      %3268 = vmatprep.subr.mxu0 0.0
      %3269 = vmatpush1.msra.mxu0 0.0
      %3270 = vmatprep.subr.mxu0 0.0
      %3271 = vmatpush1.msra.mxu0 0.0
      %3272 = vmatprep.subr.mxu0 0.0
      %3273 = vmatpush1.msra.mxu0 0.0
      %3274 = vmatprep.subr.mxu0 0.0
      %3275 = vmatpush1.msra.mxu0 0.0
      %3276 = vmatprep.subr.mxu0 0.0
      %3277 = vmatpush1.msra.mxu0 0.0
      %3278 = vmatprep.subr.mxu0 0.0
      %3279 = vmatpush1.msra.mxu0 0.0
      %3280 = vmatprep.subr.mxu0 0.0
      %3281 = vmatpush1.msra.mxu0 0.0
      %3282 = vmatprep.mubr.f32.mxu0 0.0
      %v3283 = vand.u32 %v278, 4294901760
      %3284 = vmatmul.mubr.f32.gmra.mrb[0].mxu0 %v3283
      %v3285 = vpop.f32.mrb[0].mxu0
      %v3286 = vadd.f32 %v2833, %v3285
      %v3287 = vpop.f32.mrb[0].mxu0
      %3288 = vmatprep.mubr.f32.mxu0 0.0
      %v3289 = vand.u32 %v281, 4294901760
      %3290 = vmatmul.mubr.f32.gmra.mrb[0].mxu0 %v3289
      %v3291 = vpop.f32.mrb[0].mxu0
      %v3292 = vadd.f32 %v2839, %v3291
      %v3293 = vpop.f32.mrb[0].mxu0
      %3294 = vmatprep.mubr.f32.mxu0 0.0
      %v3295 = vand.u32 %v284, 4294901760
      %3296 = vmatmul.mubr.f32.gmra.mrb[0].mxu0 %v3295
      %v3297 = vpop.f32.mrb[0].mxu0
      %v3298 = vadd.f32 %v2845, %v3297
      %v3299 = vpop.f32.mrb[0].mxu0
      %3300 = vmatprep.mubr.f32.mxu0 0.0
      %v3301 = vand.u32 %v287, 4294901760
      %3302 = vmatmul.mubr.f32.gmra.mrb[0].mxu0 %v3301
      %v3303 = vpop.f32.mrb[0].mxu0
      %v3304 = vadd.f32 %v2851, %v3303
      %v3305 = vpop.f32.mrb[0].mxu0
      %3306 = vmatprep.mubr.f32.mxu0 0.0
      %v3307 = vand.u32 %v290, 4294901760
      %3308 = vmatmul.mubr.f32.gmra.mrb[0].mxu0 %v3307
      %v3309 = vpop.f32.mrb[0].mxu0
      %v3310 = vadd.f32 %v2857, %v3309
      %v3311 = vpop.f32.mrb[0].mxu0
      %3312 = vmatprep.mubr.f32.mxu0 0.0
      %v3313 = vand.u32 %v293, 4294901760
      %3314 = vmatmul.mubr.f32.gmra.mrb[0].mxu0 %v3313
      %v3315 = vpop.f32.mrb[0].mxu0
      %v3316 = vadd.f32 %v2863, %v3315
      %v3317 = vpop.f32.mrb[0].mxu0
      %3318 = vmatprep.mubr.f32.mxu0 0.0
      %v3319 = vand.u32 %v296, 4294901760
      %3320 = vmatmul.mubr.f32.gmra.mrb[0].mxu0 %v3319
      %v3321 = vpop.f32.mrb[0].mxu0
      %v3322 = vadd.f32 %v2869, %v3321
      %v3323 = vpop.f32.mrb[0].mxu0
      %3324 = vmatprep.mubr.f32.mxu0 0.0
      %v3325 = vand.u32 %v299, 4294901760
      %3326 = vmatmul.mubr.f32.gmra.mrb[0].mxu0 %v3325
      %v3327 = vpop.f32.mrb[0].mxu0
      %v3328 = vadd.f32 %v2875, %v3327
      %v3329 = vpop.f32.mrb[0].mxu0
      %3330 = vmatprep.mubr.f32.mxu0 0.0
      %v3331 = vand.u32 %v302, 4294901760
      %3332 = vmatmul.mubr.f32.gmra.mrb[0].mxu0 %v3331
      %v3333 = vpop.f32.mrb[0].mxu0
      %v3334 = vadd.f32 %v2881, %v3333
      %v3335 = vpop.f32.mrb[0].mxu0
      %3336 = vmatprep.mubr.f32.mxu0 0.0
      %v3337 = vand.u32 %v305, 4294901760
      %3338 = vmatmul.mubr.f32.gmra.mrb[0].mxu0 %v3337
      %v3339 = vpop.f32.mrb[0].mxu0
      %v3340 = vadd.f32 %v2887, %v3339
      %v3341 = vpop.f32.mrb[0].mxu0
      %3342 = vmatprep.mubr.f32.mxu0 0.0
      %v3343 = vand.u32 %v308, 4294901760
      %3344 = vmatmul.mubr.f32.gmra.mrb[0].mxu0 %v3343
      %v3345 = vpop.f32.mrb[0].mxu0
      %v3346 = vadd.f32 %v2893, %v3345
      %v3347 = vpop.f32.mrb[0].mxu0
      %3348 = vmatprep.mubr.f32.mxu0 0.0
      %v3349 = vand.u32 %v311, 4294901760
      %3350 = vmatmul.mubr.f32.gmra.mrb[0].mxu0 %v3349
      %v3351 = vpop.f32.mrb[0].mxu0
      %v3352 = vadd.f32 %v2899, %v3351
      %v3353 = vpop.f32.mrb[0].mxu0
      %3354 = vmatprep.mubr.f32.mxu0 0.0
      %v3355 = vand.u32 %v314, 4294901760
      %3356 = vmatmul.mubr.f32.gmra.mrb[0].mxu0 %v3355
      %v3357 = vpop.f32.mrb[0].mxu0
      %v3358 = vadd.f32 %v2905, %v3357
      %v3359 = vpop.f32.mrb[0].mxu0
      %3360 = vmatprep.mubr.f32.mxu0 0.0
      %v3361 = vand.u32 %v317, 4294901760
      %3362 = vmatmul.mubr.f32.gmra.mrb[0].mxu0 %v3361
      %v3363 = vpop.f32.mrb[0].mxu0
      %v3364 = vadd.f32 %v2911, %v3363
      %v3365 = vpop.f32.mrb[0].mxu0
      %3366 = vmatprep.mubr.f32.mxu0 0.0
      %v3367 = vand.u32 %v320, 4294901760
      %3368 = vmatmul.mubr.f32.gmra.mrb[0].mxu0 %v3367
      %v3369 = vpop.f32.mrb[0].mxu0
      %v3370 = vadd.f32 %v2917, %v3369
      %v3371 = vpop.f32.mrb[0].mxu0
      %3372 = vmatprep.mubr.f32.mxu0 0.0
      %v3373 = vand.u32 %v323, 4294901760
      %3374 = vmatmul.mubr.f32.gmra.mrb[0].mxu0 %v3373
      %v3375 = vpop.f32.mrb[0].mxu0
      %v3376 = vadd.f32 %v2923, %v3375
      %v3377 = vpop.f32.mrb[0].mxu0
      %3378 = vmatprep.mubr.f32.mxu0 0.0
      %v3379 = vand.u32 %v326, 4294901760
      %3380 = vmatmul.mubr.f32.gmra.mrb[0].mxu0 %v3379
      %v3381 = vpop.f32.mrb[0].mxu0
      %v3382 = vadd.f32 %v2929, %v3381
      %v3383 = vpop.f32.mrb[0].mxu0
      %3384 = vmatprep.mubr.f32.mxu0 0.0
      %v3385 = vand.u32 %v329, 4294901760
      %3386 = vmatmul.mubr.f32.gmra.mrb[0].mxu0 %v3385
      %v3387 = vpop.f32.mrb[0].mxu0
      %v3388 = vadd.f32 %v2935, %v3387
      %v3389 = vpop.f32.mrb[0].mxu0
      %3390 = vmatprep.mubr.f32.mxu0 0.0
      %v3391 = vand.u32 %v332, 4294901760
      %3392 = vmatmul.mubr.f32.gmra.mrb[0].mxu0 %v3391
      %v3393 = vpop.f32.mrb[0].mxu0
      %v3394 = vadd.f32 %v2941, %v3393
      %v3395 = vpop.f32.mrb[0].mxu0
      %3396 = vmatprep.mubr.f32.mxu0 0.0
      %v3397 = vand.u32 %v335, 4294901760
      %3398 = vmatmul.mubr.f32.gmra.mrb[0].mxu0 %v3397
      %v3399 = vpop.f32.mrb[0].mxu0
      %v3400 = vadd.f32 %v2947, %v3399
      %v3401 = vpop.f32.mrb[0].mxu0
      %3402 = vmatprep.mubr.f32.mxu0 0.0
      %v3403 = vand.u32 %v338, 4294901760
      %3404 = vmatmul.mubr.f32.gmra.mrb[0].mxu0 %v3403
      %v3405 = vpop.f32.mrb[0].mxu0
      %v3406 = vadd.f32 %v2953, %v3405
      %v3407 = vpop.f32.mrb[0].mxu0
      %3408 = vmatprep.mubr.f32.mxu0 0.0
      %v3409 = vand.u32 %v341, 4294901760
      %3410 = vmatmul.mubr.f32.gmra.mrb[0].mxu0 %v3409
      %v3411 = vpop.f32.mrb[0].mxu0
      %v3412 = vadd.f32 %v2959, %v3411
      %v3413 = vpop.f32.mrb[0].mxu0
      %3414 = vmatprep.mubr.f32.mxu0 0.0
      %v3415 = vand.u32 %v344, 4294901760
      %3416 = vmatmul.mubr.f32.gmra.mrb[0].mxu0 %v3415
      %v3417 = vpop.f32.mrb[0].mxu0
      %v3418 = vadd.f32 %v2965, %v3417
      %v3419 = vpop.f32.mrb[0].mxu0
      %3420 = vmatprep.mubr.f32.mxu0 0.0
      %v3421 = vand.u32 %v347, 4294901760
      %3422 = vmatmul.mubr.f32.gmra.mrb[0].mxu0 %v3421
      %v3423 = vpop.f32.mrb[0].mxu0
      %v3424 = vadd.f32 %v2971, %v3423
      %v3425 = vpop.f32.mrb[0].mxu0
      %3426 = vmatprep.mubr.f32.mxu0 0.0
      %v3427 = vand.u32 %v350, 4294901760
      %3428 = vmatmul.mubr.f32.gmra.mrb[0].mxu0 %v3427
      %v3429 = vpop.f32.mrb[0].mxu0
      %v3430 = vadd.f32 %v2977, %v3429
      %v3431 = vpop.f32.mrb[0].mxu0
      %3432 = vmatprep.mubr.f32.mxu0 0.0
      %v3433 = vand.u32 %v353, 4294901760
      %3434 = vmatmul.mubr.f32.gmra.mrb[0].mxu0 %v3433
      %v3435 = vpop.f32.mrb[0].mxu0
      %v3436 = vadd.f32 %v2983, %v3435
      %v3437 = vpop.f32.mrb[0].mxu0
      %3438 = vmatprep.mubr.f32.mxu0 0.0
      %v3439 = vand.u32 %v356, 4294901760
      %3440 = vmatmul.mubr.f32.gmra.mrb[0].mxu0 %v3439
      %v3441 = vpop.f32.mrb[0].mxu0
      %v3442 = vadd.f32 %v2989, %v3441
      %v3443 = vpop.f32.mrb[0].mxu0
      %3444 = vmatprep.mubr.f32.mxu0 0.0
      %v3445 = vand.u32 %v359, 4294901760
      %3446 = vmatmul.mubr.f32.gmra.mrb[0].mxu0 %v3445
      %v3447 = vpop.f32.mrb[0].mxu0
      %v3448 = vadd.f32 %v2995, %v3447
      %v3449 = vpop.f32.mrb[0].mxu0
      %3450 = vmatprep.mubr.f32.mxu0 0.0
      %v3451 = vand.u32 %v362, 4294901760
      %3452 = vmatmul.mubr.f32.gmra.mrb[0].mxu0 %v3451
      %v3453 = vpop.f32.mrb[0].mxu0
      %v3454 = vadd.f32 %v3001, %v3453
      %v3455 = vpop.f32.mrb[0].mxu0
      %3456 = vmatprep.mubr.f32.mxu0 0.0
      %v3457 = vand.u32 %v365, 4294901760
      %3458 = vmatmul.mubr.f32.gmra.mrb[0].mxu0 %v3457
      %v3459 = vpop.f32.mrb[0].mxu0
      %v3460 = vadd.f32 %v3007, %v3459
      %v3461 = vpop.f32.mrb[0].mxu0
      %3462 = vmatprep.mubr.f32.mxu0 0.0
      %v3463 = vand.u32 %v368, 4294901760
      %3464 = vmatmul.mubr.f32.gmra.mrb[0].mxu0 %v3463
      %v3465 = vpop.f32.mrb[0].mxu0
      %v3466 = vadd.f32 %v3013, %v3465
      %v3467 = vpop.f32.mrb[0].mxu0
      %3468 = vmatprep.mubr.f32.mxu0 0.0
      %v3469 = vand.u32 %v371, 4294901760
      %3470 = vmatmul.mubr.f32.gmra.mrb[0].mxu0 %v3469
      %v3471 = vpop.f32.mrb[0].mxu0
      %v3472 = vadd.f32 %v3019, %v3471
      %v3473 = vpop.f32.mrb[0].mxu0
      %3474 = vmatprep.mubr.f32.mxu0 0.0
      %v3475 = vand.u32 %v374, 4294901760
      %3476 = vmatmul.mubr.f32.gmra.mrb[0].mxu0 %v3475
      %v3477 = vpop.f32.mrb[0].mxu0
      %v3478 = vadd.f32 %v3025, %v3477
      %v3479 = vpop.f32.mrb[0].mxu0
      %3480 = vmatprep.mubr.f32.mxu0 0.0
      %v3481 = vand.u32 %v377, 4294901760
      %3482 = vmatmul.mubr.f32.gmra.mrb[0].mxu0 %v3481
      %v3483 = vpop.f32.mrb[0].mxu0
      %v3484 = vadd.f32 %v3031, %v3483
      %v3485 = vpop.f32.mrb[0].mxu0
      %3486 = vmatprep.mubr.f32.mxu0 0.0
      %v3487 = vand.u32 %v380, 4294901760
      %3488 = vmatmul.mubr.f32.gmra.mrb[0].mxu0 %v3487
      %v3489 = vpop.f32.mrb[0].mxu0
      %v3490 = vadd.f32 %v3037, %v3489
      %v3491 = vpop.f32.mrb[0].mxu0
      %3492 = vmatprep.mubr.f32.mxu0 0.0
      %v3493 = vand.u32 %v383, 4294901760
      %3494 = vmatmul.mubr.f32.gmra.mrb[0].mxu0 %v3493
      %v3495 = vpop.f32.mrb[0].mxu0
      %v3496 = vadd.f32 %v3043, %v3495
      %v3497 = vpop.f32.mrb[0].mxu0
      %3498 = vmatprep.mubr.f32.mxu0 0.0
      %v3499 = vand.u32 %v386, 4294901760
      %3500 = vmatmul.mubr.f32.gmra.mrb[0].mxu0 %v3499
      %v3501 = vpop.f32.mrb[0].mxu0
      %v3502 = vadd.f32 %v3049, %v3501
      %v3503 = vpop.f32.mrb[0].mxu0
      %3504 = vmatprep.mubr.f32.mxu0 0.0
      %v3505 = vand.u32 %v389, 4294901760
      %3506 = vmatmul.mubr.f32.gmra.mrb[0].mxu0 %v3505
      %v3507 = vpop.f32.mrb[0].mxu0
      %v3508 = vadd.f32 %v3055, %v3507
      %v3509 = vpop.f32.mrb[0].mxu0
      %3510 = vmatprep.mubr.f32.mxu0 0.0
      %v3511 = vand.u32 %v392, 4294901760
      %3512 = vmatmul.mubr.f32.gmra.mrb[0].mxu0 %v3511
      %v3513 = vpop.f32.mrb[0].mxu0
      %v3514 = vadd.f32 %v3061, %v3513
      %v3515 = vpop.f32.mrb[0].mxu0
      %3516 = vmatprep.mubr.f32.mxu0 0.0
      %v3517 = vand.u32 %v395, 4294901760
      %3518 = vmatmul.mubr.f32.gmra.mrb[0].mxu0 %v3517
      %v3519 = vpop.f32.mrb[0].mxu0
      %v3520 = vadd.f32 %v3067, %v3519
      %v3521 = vpop.f32.mrb[0].mxu0
      %3522 = vmatprep.mubr.f32.mxu0 0.0
      %v3523 = vand.u32 %v398, 4294901760
      %3524 = vmatmul.mubr.f32.gmra.mrb[0].mxu0 %v3523
      %v3525 = vpop.f32.mrb[0].mxu0
      %v3526 = vadd.f32 %v3073, %v3525
      %v3527 = vpop.f32.mrb[0].mxu0
      %3528 = vmatprep.mubr.f32.mxu0 0.0
      %v3529 = vand.u32 %v401, 4294901760
      %3530 = vmatmul.mubr.f32.gmra.mrb[0].mxu0 %v3529
      %v3531 = vpop.f32.mrb[0].mxu0
      %v3532 = vadd.f32 %v3079, %v3531
      %v3533 = vpop.f32.mrb[0].mxu0
      %3534 = vmatprep.mubr.f32.mxu0 0.0
      %v3535 = vand.u32 %v404, 4294901760
      %3536 = vmatmul.mubr.f32.gmra.mrb[0].mxu0 %v3535
      %v3537 = vpop.f32.mrb[0].mxu0
      %v3538 = vadd.f32 %v3085, %v3537
      %v3539 = vpop.f32.mrb[0].mxu0
      %3540 = vmatprep.mubr.f32.mxu0 0.0
      %v3541 = vand.u32 %v407, 4294901760
      %3542 = vmatmul.mubr.f32.gmra.mrb[0].mxu0 %v3541
      %v3543 = vpop.f32.mrb[0].mxu0
      %v3544 = vadd.f32 %v3091, %v3543
      %v3545 = vpop.f32.mrb[0].mxu0
      %3546 = vmatprep.mubr.f32.mxu0 0.0
      %v3547 = vand.u32 %v410, 4294901760
      %3548 = vmatmul.mubr.f32.gmra.mrb[0].mxu0 %v3547
      %v3549 = vpop.f32.mrb[0].mxu0
      %v3550 = vadd.f32 %v3097, %v3549
      %v3551 = vpop.f32.mrb[0].mxu0
      %3552 = vmatprep.mubr.f32.mxu0 0.0
      %v3553 = vand.u32 %v413, 4294901760
      %3554 = vmatmul.mubr.f32.gmra.mrb[0].mxu0 %v3553
      %v3555 = vpop.f32.mrb[0].mxu0
      %v3556 = vadd.f32 %v3103, %v3555
      %v3557 = vpop.f32.mrb[0].mxu0
      %3558 = vmatprep.mubr.f32.mxu0 0.0
      %v3559 = vand.u32 %v416, 4294901760
      %3560 = vmatmul.mubr.f32.gmra.mrb[0].mxu0 %v3559
      %v3561 = vpop.f32.mrb[0].mxu0
      %v3562 = vadd.f32 %v3109, %v3561
      %v3563 = vpop.f32.mrb[0].mxu0
      %3564 = vmatprep.mubr.f32.mxu0 0.0
      %v3565 = vand.u32 %v419, 4294901760
      %3566 = vmatmul.mubr.f32.gmra.mrb[0].mxu0 %v3565
      %v3567 = vpop.f32.mrb[0].mxu0
      %v3568 = vadd.f32 %v3115, %v3567
      %v3569 = vpop.f32.mrb[0].mxu0
      %3570 = vmatprep.mubr.f32.mxu0 0.0
      %v3571 = vand.u32 %v422, 4294901760
      %3572 = vmatmul.mubr.f32.gmra.mrb[0].mxu0 %v3571
      %v3573 = vpop.f32.mrb[0].mxu0
      %v3574 = vadd.f32 %v3121, %v3573
      %v3575 = vpop.f32.mrb[0].mxu0
      %3576 = vmatprep.mubr.f32.mxu0 0.0
      %v3577 = vand.u32 %v425, 4294901760
      %3578 = vmatmul.mubr.f32.gmra.mrb[0].mxu0 %v3577
      %v3579 = vpop.f32.mrb[0].mxu0
      %v3580 = vadd.f32 %v3127, %v3579
      %v3581 = vpop.f32.mrb[0].mxu0
      %3582 = vmatprep.mubr.f32.mxu0 0.0
      %v3583 = vand.u32 %v428, 4294901760
      %3584 = vmatmul.mubr.f32.gmra.mrb[0].mxu0 %v3583
      %v3585 = vpop.f32.mrb[0].mxu0
      %v3586 = vadd.f32 %v3133, %v3585
      %v3587 = vpop.f32.mrb[0].mxu0
      %3588 = vmatprep.mubr.f32.mxu0 0.0
      %v3589 = vand.u32 %v431, 4294901760
      %3590 = vmatmul.mubr.f32.gmra.mrb[0].mxu0 %v3589
      %v3591 = vpop.f32.mrb[0].mxu0
      %v3592 = vadd.f32 %v3139, %v3591
      %v3593 = vpop.f32.mrb[0].mxu0
      %3594 = vmatprep.mubr.f32.mxu0 0.0
      %v3595 = vand.u32 %v434, 4294901760
      %3596 = vmatmul.mubr.f32.gmra.mrb[0].mxu0 %v3595
      %v3597 = vpop.f32.mrb[0].mxu0
      %v3598 = vadd.f32 %v3145, %v3597
      %v3599 = vpop.f32.mrb[0].mxu0
      %3600 = vmatprep.mubr.f32.mxu0 0.0
      %v3601 = vand.u32 %v437, 4294901760
      %3602 = vmatmul.mubr.f32.gmra.mrb[0].mxu0 %v3601
      %v3603 = vpop.f32.mrb[0].mxu0
      %v3604 = vadd.f32 %v3151, %v3603
      %v3605 = vpop.f32.mrb[0].mxu0
      %3606 = vmatprep.mubr.f32.mxu0 0.0
      %v3607 = vand.u32 %v440, 4294901760
      %3608 = vmatmul.mubr.f32.gmra.mrb[0].mxu0 %v3607
      %v3609 = vpop.f32.mrb[0].mxu0
      %v3610 = vadd.f32 %v3157, %v3609
      %v3611 = vpop.f32.mrb[0].mxu0
      %3612 = vmatprep.mubr.f32.mxu0 0.0
      %v3613 = vand.u32 %v443, 4294901760
      %3614 = vmatmul.mubr.f32.gmra.mrb[0].mxu0 %v3613
      %v3615 = vpop.f32.mrb[0].mxu0
      %v3616 = vadd.f32 %v3163, %v3615
      %v3617 = vpop.f32.mrb[0].mxu0
      %3618 = vmatprep.mubr.f32.mxu0 0.0
      %v3619 = vand.u32 %v446, 4294901760
      %3620 = vmatmul.mubr.f32.gmra.mrb[0].mxu0 %v3619
      %v3621 = vpop.f32.mrb[0].mxu0
      %v3622 = vadd.f32 %v3169, %v3621
      %v3623 = vpop.f32.mrb[0].mxu0
      %3624 = vmatprep.mubr.f32.mxu0 0.0
      %v3625 = vand.u32 %v449, 4294901760
      %3626 = vmatmul.mubr.f32.gmra.mrb[0].mxu0 %v3625
      %v3627 = vpop.f32.mrb[0].mxu0
      %v3628 = vadd.f32 %v3175, %v3627
      %v3629 = vpop.f32.mrb[0].mxu0
      %3630 = vmatprep.mubr.f32.mxu0 0.0
      %v3631 = vand.u32 %v452, 4294901760
      %3632 = vmatmul.mubr.f32.gmra.mrb[0].mxu0 %v3631
      %v3633 = vpop.f32.mrb[0].mxu0
      %v3634 = vadd.f32 %v3181, %v3633
      %v3635 = vpop.f32.mrb[0].mxu0
      %3636 = vmatprep.mubr.f32.mxu0 0.0
      %v3637 = vand.u32 %v455, 4294901760
      %3638 = vmatmul.mubr.f32.gmra.mrb[0].mxu0 %v3637
      %v3639 = vpop.f32.mrb[0].mxu0
      %v3640 = vadd.f32 %v3187, %v3639
      %v3641 = vpop.f32.mrb[0].mxu0
      %3642 = vmatprep.mubr.f32.mxu0 0.0
      %v3643 = vand.u32 %v458, 4294901760
      %3644 = vmatmul.mubr.f32.gmra.mrb[0].mxu0 %v3643
      %v3645 = vpop.f32.mrb[0].mxu0
      %v3646 = vadd.f32 %v3193, %v3645
      %v3647 = vpop.f32.mrb[0].mxu0
      %3648 = vmatprep.mubr.f32.mxu0 0.0
      %v3649 = vand.u32 %v461, 4294901760
      %3650 = vmatmul.mubr.f32.gmra.mrb[0].mxu0 %v3649
      %v3651 = vpop.f32.mrb[0].mxu0
      %v3652 = vadd.f32 %v3199, %v3651
      %v3653 = vpop.f32.mrb[0].mxu0
      %3654 = vmatprep.mubr.f32.mxu0 0.0
      %v3655 = vand.u32 %v464, 4294901760
      %3656 = vmatmul.mubr.f32.gmra.mrb[0].mxu0 %v3655
      %v3657 = vpop.f32.mrb[0].mxu0
      %v3658 = vadd.f32 %v3205, %v3657
      %v3659 = vpop.f32.mrb[0].mxu0
      %3660 = vmatprep.mubr.f32.mxu0 0.0
      %v3661 = vand.u32 %v467, 4294901760
      %3662 = vmatmul.mubr.f32.gmra.mrb[0].mxu0 %v3661
      %v3663 = vpop.f32.mrb[0].mxu0
      %v3664 = vadd.f32 %v3211, %v3663
      %v3665 = vpop.f32.mrb[0].mxu0
      %3666 = vdwg.mxu0
      %v3667 = vmax.f32 %v3286, 0.0
      %v3668 = vmax.f32 %v3292, 0.0
      %v3669 = vmax.f32 %v3298, 0.0
      %v3670 = vmax.f32 %v3304, 0.0
      %v3671 = vmax.f32 %v3310, 0.0
      %v3672 = vmax.f32 %v3316, 0.0
      %v3673 = vmax.f32 %v3322, 0.0
      %v3674 = vmax.f32 %v3328, 0.0
      %v3675 = vmax.f32 %v3334, 0.0
      %v3676 = vmax.f32 %v3340, 0.0
      %v3677 = vmax.f32 %v3346, 0.0
      %v3678 = vmax.f32 %v3352, 0.0
      %v3679 = vmax.f32 %v3358, 0.0
      %v3680 = vmax.f32 %v3364, 0.0
      %v3681 = vmax.f32 %v3370, 0.0
      %v3682 = vmax.f32 %v3376, 0.0
      %v3683 = vmax.f32 %v3382, 0.0
      %v3684 = vmax.f32 %v3388, 0.0
      %v3685 = vmax.f32 %v3394, 0.0
      %v3686 = vmax.f32 %v3400, 0.0
      %v3687 = vmax.f32 %v3406, 0.0
      %v3688 = vmax.f32 %v3412, 0.0
      %v3689 = vmax.f32 %v3418, 0.0
      %v3690 = vmax.f32 %v3424, 0.0
      %v3691 = vmax.f32 %v3430, 0.0
      %v3692 = vmax.f32 %v3436, 0.0
      %v3693 = vmax.f32 %v3442, 0.0
      %v3694 = vmax.f32 %v3448, 0.0
      %v3695 = vmax.f32 %v3454, 0.0
      %v3696 = vmax.f32 %v3460, 0.0
      %v3697 = vmax.f32 %v3466, 0.0
      %v3698 = vmax.f32 %v3472, 0.0
      %v3699 = vmax.f32 %v3478, 0.0
      %v3700 = vmax.f32 %v3484, 0.0
      %v3701 = vmax.f32 %v3490, 0.0
      %v3702 = vmax.f32 %v3496, 0.0
      %v3703 = vmax.f32 %v3502, 0.0
      %v3704 = vmax.f32 %v3508, 0.0
      %v3705 = vmax.f32 %v3514, 0.0
      %v3706 = vmax.f32 %v3520, 0.0
      %v3707 = vmax.f32 %v3526, 0.0
      %v3708 = vmax.f32 %v3532, 0.0
      %v3709 = vmax.f32 %v3538, 0.0
      %v3710 = vmax.f32 %v3544, 0.0
      %v3711 = vmax.f32 %v3550, 0.0
      %v3712 = vmax.f32 %v3556, 0.0
      %v3713 = vmax.f32 %v3562, 0.0
      %v3714 = vmax.f32 %v3568, 0.0
      %v3715 = vmax.f32 %v3574, 0.0
      %v3716 = vmax.f32 %v3580, 0.0
      %v3717 = vmax.f32 %v3586, 0.0
      %v3718 = vmax.f32 %v3592, 0.0
      %v3719 = vmax.f32 %v3598, 0.0
      %v3720 = vmax.f32 %v3604, 0.0
      %v3721 = vmax.f32 %v3610, 0.0
      %v3722 = vmax.f32 %v3616, 0.0
      %v3723 = vmax.f32 %v3622, 0.0
      %v3724 = vmax.f32 %v3628, 0.0
      %v3725 = vmax.f32 %v3634, 0.0
      %v3726 = vmax.f32 %v3640, 0.0
      %v3727 = vmax.f32 %v3646, 0.0
      %v3728 = vmax.f32 %v3652, 0.0
      %v3729 = vmax.f32 %v3658, 0.0
      %v3730 = vmax.f32 %v3664, 0.0
      %v3731 = vld [vmem:[%s3] sm:$0x1]
      %v3733 = vlaneseq
      %v3734 = vshrl.u32 %v3733, 7
      %v3735 = vsub.s32 0, %v3734
      %v3736 = vrot.slane %v3731, %v3735
      %v3738 = vmul.f32 %v3667, %v3736
      %v3739 = vmul.f32 %v3668, %v3736
      %v3740 = vmul.f32 %v3669, %v3736
      %v3741 = vmul.f32 %v3670, %v3736
      %v3742 = vmul.f32 %v3671, %v3736
      %v3743 = vmul.f32 %v3672, %v3736
      %v3744 = vmul.f32 %v3673, %v3736
      %v3745 = vmul.f32 %v3674, %v3736
      %v3746 = vmul.f32 %v3675, %v3736
      %v3747 = vmul.f32 %v3676, %v3736
      %v3748 = vmul.f32 %v3677, %v3736
      %v3749 = vmul.f32 %v3678, %v3736
      %v3750 = vmul.f32 %v3679, %v3736
      %v3751 = vmul.f32 %v3680, %v3736
      %v3752 = vmul.f32 %v3681, %v3736
      %v3753 = vmul.f32 %v3682, %v3736
      %v3754 = vmul.f32 %v3683, %v3736
      %v3755 = vmul.f32 %v3684, %v3736
      %v3756 = vmul.f32 %v3685, %v3736
      %v3757 = vmul.f32 %v3686, %v3736
      %v3758 = vmul.f32 %v3687, %v3736
      %v3759 = vmul.f32 %v3688, %v3736
      %v3760 = vmul.f32 %v3689, %v3736
      %v3761 = vmul.f32 %v3690, %v3736
      %v3762 = vmul.f32 %v3691, %v3736
      %v3763 = vmul.f32 %v3692, %v3736
      %v3764 = vmul.f32 %v3693, %v3736
      %v3765 = vmul.f32 %v3694, %v3736
      %v3766 = vmul.f32 %v3695, %v3736
      %v3767 = vmul.f32 %v3696, %v3736
      %v3768 = vmul.f32 %v3697, %v3736
      %v3769 = vmul.f32 %v3698, %v3736
      %v3770 = vmul.f32 %v3699, %v3736
      %v3771 = vmul.f32 %v3700, %v3736
      %v3772 = vmul.f32 %v3701, %v3736
      %v3773 = vmul.f32 %v3702, %v3736
      %v3774 = vmul.f32 %v3703, %v3736
      %v3775 = vmul.f32 %v3704, %v3736
      %v3776 = vmul.f32 %v3705, %v3736
      %v3777 = vmul.f32 %v3706, %v3736
      %v3778 = vmul.f32 %v3707, %v3736
      %v3779 = vmul.f32 %v3708, %v3736
      %v3780 = vmul.f32 %v3709, %v3736
      %v3781 = vmul.f32 %v3710, %v3736
      %v3782 = vmul.f32 %v3711, %v3736
      %v3783 = vmul.f32 %v3712, %v3736
      %v3784 = vmul.f32 %v3713, %v3736
      %v3785 = vmul.f32 %v3714, %v3736
      %v3786 = vmul.f32 %v3715, %v3736
      %v3787 = vmul.f32 %v3716, %v3736
      %v3788 = vmul.f32 %v3717, %v3736
      %v3789 = vmul.f32 %v3718, %v3736
      %v3790 = vmul.f32 %v3719, %v3736
      %v3791 = vmul.f32 %v3720, %v3736
      %v3792 = vmul.f32 %v3721, %v3736
      %v3793 = vmul.f32 %v3722, %v3736
      %v3794 = vmul.f32 %v3723, %v3736
      %v3795 = vmul.f32 %v3724, %v3736
      %v3796 = vmul.f32 %v3725, %v3736
      %v3797 = vmul.f32 %v3726, %v3736
      %v3798 = vmul.f32 %v3727, %v3736
      %v3799 = vmul.f32 %v3728, %v3736
      %v3800 = vmul.f32 %v3729, %v3736
      %v3801 = vmul.f32 %v3730, %v3736
      %vm3802 = vcmask 523264
      %3803 = vst.msk [vmem:[%s199] sm:$0xff] %vm3802, %v3738
      %3804 = vst.msk [vmem:[%s199 + $0x8] sm:$0xff] %vm3802, %v3739
      %3805 = vst.msk [vmem:[%s199 + $0x10] sm:$0xff] %vm3802, %v3740
      %3806 = vst.msk [vmem:[%s199 + $0x18] sm:$0xff] %vm3802, %v3741
      %3807 = vst.msk [vmem:[%s199 + $0x20] sm:$0xff] %vm3802, %v3742
      %3808 = vst.msk [vmem:[%s199 + $0x28] sm:$0xff] %vm3802, %v3743
      %3809 = vst.msk [vmem:[%s199 + $0x30] sm:$0xff] %vm3802, %v3744
      %3810 = vst.msk [vmem:[%s199 + $0x38] sm:$0xff] %vm3802, %v3745
      %3811 = vst.msk [vmem:[%s199 + $0x40] sm:$0xff] %vm3802, %v3746
      %3812 = vst.msk [vmem:[%s199 + $0x48] sm:$0xff] %vm3802, %v3747
      %3813 = vst.msk [vmem:[%s199 + $0x50] sm:$0xff] %vm3802, %v3748
      %3814 = vst.msk [vmem:[%s199 + $0x58] sm:$0xff] %vm3802, %v3749
      %3815 = vst.msk [vmem:[%s199 + $0x60] sm:$0xff] %vm3802, %v3750
      %3816 = vst.msk [vmem:[%s199 + $0x68] sm:$0xff] %vm3802, %v3751
      %3817 = vst.msk [vmem:[%s199 + $0x70] sm:$0xff] %vm3802, %v3752
      %3818 = vst.msk [vmem:[%s199 + $0x78] sm:$0xff] %vm3802, %v3753
      %3819 = vst.msk [vmem:[%s199 + $0x80] sm:$0xff] %vm3802, %v3754
      %3820 = vst.msk [vmem:[%s199 + $0x88] sm:$0xff] %vm3802, %v3755
      %3821 = vst.msk [vmem:[%s199 + $0x90] sm:$0xff] %vm3802, %v3756
      %3822 = vst.msk [vmem:[%s199 + $0x98] sm:$0xff] %vm3802, %v3757
      %3823 = vst.msk [vmem:[%s199 + $0xa0] sm:$0xff] %vm3802, %v3758
      %3824 = vst.msk [vmem:[%s199 + $0xa8] sm:$0xff] %vm3802, %v3759
      %3825 = vst.msk [vmem:[%s199 + $0xb0] sm:$0xff] %vm3802, %v3760
      %3826 = vst.msk [vmem:[%s199 + $0xb8] sm:$0xff] %vm3802, %v3761
      %3827 = vst.msk [vmem:[%s199 + $0xc0] sm:$0xff] %vm3802, %v3762
      %3828 = vst.msk [vmem:[%s199 + $0xc8] sm:$0xff] %vm3802, %v3763
      %3829 = vst.msk [vmem:[%s199 + $0xd0] sm:$0xff] %vm3802, %v3764
      %3830 = vst.msk [vmem:[%s199 + $0xd8] sm:$0xff] %vm3802, %v3765
      %3831 = vst.msk [vmem:[%s199 + $0xe0] sm:$0xff] %vm3802, %v3766
      %3832 = vst.msk [vmem:[%s199 + $0xe8] sm:$0xff] %vm3802, %v3767
      %3833 = vst.msk [vmem:[%s199 + $0xf0] sm:$0xff] %vm3802, %v3768
      %3834 = vst.msk [vmem:[%s199 + $0xf8] sm:$0xff] %vm3802, %v3769
      %3835 = vst.msk [vmem:[%s199 + $0x100] sm:$0xff] %vm3802, %v3770
      %3836 = vst.msk [vmem:[%s199 + $0x108] sm:$0xff] %vm3802, %v3771
      %3837 = vst.msk [vmem:[%s199 + $0x110] sm:$0xff] %vm3802, %v3772
      %3838 = vst.msk [vmem:[%s199 + $0x118] sm:$0xff] %vm3802, %v3773
      %3839 = vst.msk [vmem:[%s199 + $0x120] sm:$0xff] %vm3802, %v3774
      %3840 = vst.msk [vmem:[%s199 + $0x128] sm:$0xff] %vm3802, %v3775
      %3841 = vst.msk [vmem:[%s199 + $0x130] sm:$0xff] %vm3802, %v3776
      %3842 = vst.msk [vmem:[%s199 + $0x138] sm:$0xff] %vm3802, %v3777
      %3843 = vst.msk [vmem:[%s199 + $0x140] sm:$0xff] %vm3802, %v3778
      %3844 = vst.msk [vmem:[%s199 + $0x148] sm:$0xff] %vm3802, %v3779
      %3845 = vst.msk [vmem:[%s199 + $0x150] sm:$0xff] %vm3802, %v3780
      %3846 = vst.msk [vmem:[%s199 + $0x158] sm:$0xff] %vm3802, %v3781
      %3847 = vst.msk [vmem:[%s199 + $0x160] sm:$0xff] %vm3802, %v3782
      %3848 = vst.msk [vmem:[%s199 + $0x168] sm:$0xff] %vm3802, %v3783
      %3849 = vst.msk [vmem:[%s199 + $0x170] sm:$0xff] %vm3802, %v3784
      %3850 = vst.msk [vmem:[%s199 + $0x178] sm:$0xff] %vm3802, %v3785
      %3851 = vst.msk [vmem:[%s199 + $0x180] sm:$0xff] %vm3802, %v3786
      %3852 = vst.msk [vmem:[%s199 + $0x188] sm:$0xff] %vm3802, %v3787
      %3853 = vst.msk [vmem:[%s199 + $0x190] sm:$0xff] %vm3802, %v3788
      %3854 = vst.msk [vmem:[%s199 + $0x198] sm:$0xff] %vm3802, %v3789
      %3855 = vst.msk [vmem:[%s199 + $0x1a0] sm:$0xff] %vm3802, %v3790
      %3856 = vst.msk [vmem:[%s199 + $0x1a8] sm:$0xff] %vm3802, %v3791
      %3857 = vst.msk [vmem:[%s199 + $0x1b0] sm:$0xff] %vm3802, %v3792
      %3858 = vst.msk [vmem:[%s199 + $0x1b8] sm:$0xff] %vm3802, %v3793
      %3859 = vst.msk [vmem:[%s199 + $0x1c0] sm:$0xff] %vm3802, %v3794
      %3860 = vst.msk [vmem:[%s199 + $0x1c8] sm:$0xff] %vm3802, %v3795
      %3861 = vst.msk [vmem:[%s199 + $0x1d0] sm:$0xff] %vm3802, %v3796
      %3862 = vst.msk [vmem:[%s199 + $0x1d8] sm:$0xff] %vm3802, %v3797
      %3863 = vst.msk [vmem:[%s199 + $0x1e0] sm:$0xff] %vm3802, %v3798
      %3864 = vst.msk [vmem:[%s199 + $0x1e8] sm:$0xff] %vm3802, %v3799
      %3865 = vst.msk [vmem:[%s199 + $0x1f0] sm:$0xff] %vm3802, %v3800
      %3866 = vst.msk [vmem:[%s199 + $0x1f8] sm:$0xff] %vm3802, %v3801
      %s3867 = smul.u32 64, %s15
      %p3868 = scmp.lt.s32.totalorder %s3867, 255
      %s3869 = scalar_select %p3868, %s3867, 255
      %s3870 = smul.addr %s3869, 8
      %s3871 = scalar_lea.vmem %s4, %s3870
      // Predicated region
      $region37: #{tpu_custom_call.1} parent=35 // pred_check
        %p3872 = pneg %p122
      $region38: #{tpu_custom_call.1} parent=35 // pred_check_branch
        %3874 = sbr.rel (%p3872) target = $region40
      $region39: #{tpu_custom_call.1} parent=35 // pred_region
        %s3875 = smul.u32 64, %s15
      $region40: #{tpu_custom_call.1} parent=35 // pred_fallthru
        _
    $region36: #{tpu_custom_call.1} parent=5 // pred_fallthru
      _
    %p3876 = scmp.le.s32.totalorder 2, %s10
    // Predicated region
    $region41: #{tpu_custom_call.1} parent=5 // pred_check
      %p3877 = pneg %p3876
    $region42: #{tpu_custom_call.1} parent=5 // pred_check_branch
      %3879 = sbr.rel (%p3877) target = $region44
    $region43: #{tpu_custom_call.1} parent=5 // pred_region
      %s3880 = ssub.s32 %s10, 2
      // Predicated region
      $region45: #{tpu_custom_call.1} parent=43 // pred_check
        %p3881 = pneg %p128
      $region46: #{tpu_custom_call.1} parent=43 // pred_check_branch
        %3883 = sbr.rel (%p3881) target = $region48
      $region47: #{tpu_custom_call.1} parent=43 // pred_region
        %s3884 = smul.u32 64, %s16
        %p3885 = scmp.lt.s32.totalorder %s3884, 255
        %s3886 = scalar_select %p3885, %s3884, 255
        %s3887 = smul.addr %s3886, 8
        %s3888 = scalar_lea.vmem %s4, %s3887
      $region48: #{tpu_custom_call.1} parent=43 // pred_fallthru
        _
    $region44: #{tpu_custom_call.1} parent=5 // pred_fallthru
      _
  $region6: #{tpu_custom_call.1} parent=0 // loop_footer
    %s14 = sadd.s32 1, %s10
  $region7: #{tpu_custom_call.1} parent=0 // loop_footer_branch
    %9 = sbr.rel target = $region3
  $region8: #{tpu_custom_call.1} parent=0 // loop_exit
    _

</llo_original>
